<compile_context>
chip_gen: v7x
topology: tpu7x:2x2x1
jax: 0.10.0
libtpu: 0.0.40
codegen_flags: <defaults>
</compile_context>

<pallas_src>
import functools

import jax
import jax.numpy as jnp
from jax.experimental import pallas as pl
from jax.experimental.pallas import tpu as pltpu

# TODO(synk): the reference module defines `self.logits = nn.Linear()` (invalid call,
# and never used in forward) — it is omitted here.


def _lstm2_softmax_kernel(x_ref, wih0_ref, wrecd_ref, win1_ref, wro_ref, ones_ref,
                          b_ref, out_ref, *, notes_per_bar, hidden_size, pitch_dim):
    """One grid step == one chunk of the folded (batch*num_bars) rows.

    x_ref:     (BM, D_in)       conductor embedding, one row per (sample, bar)
    wih0_ref:  (D_in, 4H)       layer-0 input weights      (gate cols [i,f,o,g])
    wrecd_ref: (2H, 8H)         block-diag fused recurrent [whr0@whh0, 0; 0, whr1@whh1]
    win1_ref:  (H, 4H)          layer-1 input weights      (whr0@wih1, projection folded)
    wro_ref:   (T*H, T*P) bf16  block-diag deferred readout (whr1 repeated per note)
    ones_ref:  (T*P, T*P)       block-diag ones(P,P) -> per-note softmax denominators
    b_ref:     (2, 4H)          fused biases [b_ih0+b_hh0 ; b_ih1+b_hh1]
    out_ref:   (BM, T*P)        lane-dense per-note softmax outputs
    """
    H, P, T = hidden_size, pitch_dim, notes_per_bar
    B = x_ref.shape[0]

    wih0 = wih0_ref[...]                     # (D_in, 4H)
    wrecd = wrecd_ref[...]                   # (2H, 8H), consumed whole (no slicing)
    win1 = win1_ref[...]                     # (H, 4H)
    # Hoisted bias broadcasts (JAX does not CSE broadcast_in_dim inside the unroll).
    b0 = jnp.broadcast_to(b_ref[0:1, :], (B, 4 * H))
    b1 = jnp.broadcast_to(b_ref[1:2, :], (B, 4 * H))

    def cell(gates, c_prev):
        # Gate columns pre-permuted to [i, f, o, g]: one contiguous sigmoid + one tanh.
        s = jax.nn.sigmoid(gates[:, :3 * H])
        g = jnp.tanh(gates[:, 3 * H:])
        c = s[:, H:2 * H] * c_prev + s[:, :H] * g
        return s[:, 2 * H:3 * H] * jnp.tanh(c), c   # pre-projection hidden, cell state

    zero_c = jnp.zeros((B, H), jnp.float32)

    # The conductor vector is fed only at note 0; later steps get zero input.
    x_contrib = jnp.dot(x_ref[...], wih0, preferred_element_type=jnp.float32)   # (B, 4H)

    # t == 0: all recurrent state is zero.
    ht0, c0 = cell(x_contrib + b0, zero_c)
    g1 = jnp.dot(ht0, win1, preferred_element_type=jnp.float32) + b1
    ht1, c1 = cell(g1, zero_c)
    ht1_list = [ht1]

    for _ in range(1, T):                    # static unroll (15 more notes)
        # Single fused recurrent MXU push: [ht0 | ht1] @ block-diag -> [g0_rec | g1_rec].
        rec = jnp.dot(jnp.concatenate([ht0, ht1], axis=1), wrecd,
                      preferred_element_type=jnp.float32)                       # (B, 8H)
        ht0, c0 = cell(rec[:, :4 * H] + b0, c0)
        g1 = (jnp.dot(ht0, win1, preferred_element_type=jnp.float32)
              + rec[:, 4 * H:] + b1)
        ht1, c1 = cell(g1, c1)
        ht1_list.append(ht1)

    # Deferred, lane-dense readout + per-note softmax (off the recurrence critical path):
    # one block-diag matmul for all 16 notes' logits, exp without max-subtraction
    # (|logit| <= H * 1/sqrt(H) ~ 5.7, safe in f32), one block-ones matmul broadcasting
    # each note's denominator across its 16 lanes, and one full 256-lane store.
    hcat = jnp.concatenate(ht1_list, axis=1)                                    # (B, T*H)
    logits = jnp.dot(hcat.astype(wro_ref.dtype), wro_ref[...],
                     preferred_element_type=jnp.float32)                        # (B, T*P)
    e = jnp.exp(logits)
    denom = jnp.dot(e, ones_ref[...], preferred_element_type=jnp.float32)       # (B, T*P)
    out_ref[...] = e * pl.reciprocal(denom, approx=True)


def init_params(key, input_size, hidden_size, pitch_dim):
    """Deterministic LSTM(proj_size) params, PyTorch-style U(-1/sqrt(H), 1/sqrt(H))."""
    H, P, D = hidden_size, pitch_dim, input_size
    bound = 1.0 / float(jnp.sqrt(jnp.float32(H)))
    keys = jax.random.split(key, 10)

    def u(kk, shape):
        return jax.random.uniform(kk, shape, jnp.float32, -bound, bound)

    w_ih0 = u(keys[0], (4 * H, D))
    w_hh0 = u(keys[1], (4 * H, P))
    b_ih0 = u(keys[2], (4 * H,))
    b_hh0 = u(keys[3], (4 * H,))
    w_hr0 = u(keys[4], (P, H))
    w_ih1 = u(keys[5], (4 * H, P))
    w_hh1 = u(keys[6], (4 * H, P))
    b_ih1 = u(keys[7], (4 * H,))
    b_hh1 = u(keys[8], (4 * H,))
    w_hr1 = u(keys[9], (P, H))

    # Pre-transpose for x @ W style matmuls; fuse biases.
    return (w_ih0.T, w_hh0.T, w_hr0.T, (b_ih0 + b_hh0)[None, :],
            w_ih1.T, w_hh1.T, w_hr1.T, (b_ih1 + b_hh1)[None, :])


def _pack_params(params, notes_per_bar):
    """Fold LSTMP projections into gate weights, permute gates to [i,f,o,g], fuse the two
    recurrent matrices into one block-diagonal slab, and build the deferred block-diag
    readout / softmax-denominator matrices."""
    wih0, whh0, whr0, b0, wih1, whh1, whr1, b1 = params
    H, P = whr0.shape
    T = notes_per_bar
    hp = jax.lax.Precision.HIGHEST

    # Gate-column permutation: PyTorch [i, f, g, o] -> [i, f, o, g].
    perm = jnp.concatenate([jnp.arange(2 * H), jnp.arange(3 * H, 4 * H),
                            jnp.arange(2 * H, 3 * H)])

    def pg(w):
        return w[..., perm]

    w_rec0 = jnp.dot(whr0, whh0, precision=hp)   # (H, 4H) layer-0 recurrent (proj folded)
    w_in1 = jnp.dot(whr0, wih1, precision=hp)    # (H, 4H) layer-1 input     (proj folded)
    w_rec1 = jnp.dot(whr1, whh1, precision=hp)   # (H, 4H) layer-1 recurrent (proj folded)

    # Block-diagonal fused recurrent slab: [ht0 | ht1] @ wrecd = [g0_rec | g1_rec].
    wrecd = jnp.zeros((2 * H, 8 * H), jnp.float32)
    wrecd = wrecd.at[:H, :4 * H].set(pg(w_rec0))
    wrecd = wrecd.at[H:, 4 * H:].set(pg(w_rec1))

    biases = jnp.concatenate([pg(b0), pg(b1)], axis=0)                  # (2, 4H)

    # Deferred lane-dense readout: block-diag of whr1 repeated per note.  bf16 is safe
    # here (single off-critical-path matmul, checked against the 1e-3 tolerance).
    wro = jax.scipy.linalg.block_diag(*([whr1] * T)).astype(jnp.bfloat16)      # (T*H, T*P)
    # Per-note softmax denominator matrix: block-diag of ones(P, P).
    ones_g = jax.scipy.linalg.block_diag(*([jnp.ones((P, P), jnp.float32)] * T))

    return pg(wih0), wrecd, pg(w_in1), wro, ones_g, biases


@functools.partial(jax.jit,
                   static_argnames=("notes_per_bar", "hidden_size", "pitch_dim"))
def music_decoder_forward(x, params, *, notes_per_bar, hidden_size, pitch_dim):
    """x: (batch, num_bars, input_size) f32 -> (batch, num_bars*notes_per_bar, pitch_dim)."""
    batch, num_bars, d_in = x.shape
    T, P = notes_per_bar, pitch_dim

    wih0, wrecd, win1, wro, ones_g, biases = _pack_params(params, T)

    # Fold bars into the batch: every bar starts from zero state, so all (sample, bar)
    # rows are independent sequences.  Chunk at MXU height (256 rows): small workloads
    # stay a single grid step (no per-step overhead on single-TC chips), large workloads
    # get multiple "parallel" steps that shard across v7x's two TensorCores.
    bf = batch * num_bars
    rows = ((bf + 7) // 8) * 8                   # sublane-aligned folded rows
    bm = min(256, rows)                          # chunk of folded batch per grid step
    bf_pad = ((bf + bm - 1) // bm) * bm
    x_flat = jnp.zeros((bf_pad, d_in), jnp.float32)
    x_flat = x_flat.at[:bf, :].set(x.reshape(bf, d_in).astype(jnp.float32))

    kernel = functools.partial(_lstm2_softmax_kernel, notes_per_bar=T,
                               hidden_size=hidden_size, pitch_dim=P)

    def full_spec(arr):
        return pl.BlockSpec(arr.shape, lambda i: (0,) * arr.ndim)

    out = pl.pallas_call(
        kernel,
        out_shape=jax.ShapeDtypeStruct((bf_pad, T * P), jnp.float32),
        grid=(bf_pad // bm,),
        in_specs=[pl.BlockSpec((bm, d_in), lambda i: (i, 0)),
                  full_spec(wih0), full_spec(wrecd), full_spec(win1),
                  full_spec(wro), full_spec(ones_g), full_spec(biases)],
        out_specs=pl.BlockSpec((bm, T * P), lambda i: (i, 0)),
        compiler_params=pltpu.CompilerParams(dimension_semantics=("parallel",)),
    )(x_flat, wih0, wrecd, win1, wro, ones_g, biases)

    out = out[:bf].reshape(batch, num_bars, T, P)
    return out.reshape(batch, num_bars * T, P)


def reference_forward(x, params, *, notes_per_bar, hidden_size, pitch_dim):
    """Pure-JAX reference matching the PyTorch forward."""
    wih0, whh0, whr0, b0, wih1, whh1, whr1, b1 = params
    H, P = hidden_size, pitch_dim
    hp = jax.lax.Precision.HIGHEST
    batch, num_bars, _ = x.shape
    notes = jnp.zeros((batch, num_bars * notes_per_bar, P), jnp.float32)

    def cell(gates, c_prev, whr):
        i = jax.nn.sigmoid(gates[:, :H])
        f = jax.nn.sigmoid(gates[:, H:2 * H])
        g = jnp.tanh(gates[:, 2 * H:3 * H])
        o = jax.nn.sigmoid(gates[:, 3 * H:])
        c = f * c_prev + i * g
        return jnp.dot(o * jnp.tanh(c), whr, precision=hp), c

    for bar in range(num_bars):
        h0 = jnp.zeros((batch, P)); c0 = jnp.zeros((batch, H))
        h1 = jnp.zeros((batch, P)); c1 = jnp.zeros((batch, H))
        inp = x[:, bar, :]
        for t in range(notes_per_bar):
            g0 = jnp.dot(inp, wih0, precision=hp) + jnp.dot(h0, whh0, precision=hp) + b0
            h0, c0 = cell(g0, c0, whr0)
            g1 = (jnp.dot(h0, wih1, precision=hp)
                  + jnp.dot(h1, whh1, precision=hp) + b1)
            h1, c1 = cell(g1, c1, whr1)
            notes = notes.at[:, bar * notes_per_bar + t, :].set(h1)
            inp = jnp.zeros_like(inp)
    return jax.nn.softmax(notes, axis=2)


if __name__ == "__main__":
    key = jax.random.PRNGKey(0)
    kx, kp = jax.random.split(key)

    batch, num_bars = 2, 2
    input_size, hidden_size, pitch_dim, notes_per_bar = 8, 32, 16, 16

    x = jax.random.normal(kx, (batch, num_bars, input_size), jnp.float32)
    params = init_params(kp, input_size, hidden_size, pitch_dim)

    y = music_decoder_forward(x, params,
                              notes_per_bar=notes_per_bar,
                              hidden_size=hidden_size,
                              pitch_dim=pitch_dim)
    y = jax.block_until_ready(y)

    assert y.shape == (batch, num_bars * notes_per_bar, pitch_dim), y.shape

    y_ref = reference_forward(x, params,
                              notes_per_bar=notes_per_bar,
                              hidden_size=hidden_size,
                              pitch_dim=pitch_dim)
    assert bool(jnp.allclose(y, y_ref, atol=1e-3, rtol=1e-3)), "kernel/reference mismatch"

    print("KERNEL_OK")
</pallas_src>

<mosaic_0001>
module attributes {stable_mosaic.version = 11 : i64} {
  func.func @_lstm2_softmax_kernel(%arg0: i32, %arg1: memref<8x8xf32, #tpu.memory_space<vmem>>, %arg2: memref<8x128xf32, #tpu.memory_space<vmem>>, %arg3: memref<64x256xf32, #tpu.memory_space<vmem>>, %arg4: memref<32x128xf32, #tpu.memory_space<vmem>>, %arg5: memref<512x256xbf16, #tpu.memory_space<vmem>>, %arg6: memref<256x256xf32, #tpu.memory_space<vmem>>, %arg7: memref<2x128xf32, #tpu.memory_space<vmem>>, %arg8: memref<8x256xf32, #tpu.memory_space<vmem>>) attributes {dimension_semantics = [#tpu.dimension_semantics<parallel>], iteration_bounds = array<i64: 1>, scalar_prefetch = 0 : i64, scratch_operands = 0 : i64, tpu.core_type = #tpu.core_type<tc>, window_params = [{transform_indices = @transform_0, window_bounds = array<i64: 8, 8>}, {pipeline_mode = #tpu.pipeline_mode<synchronous>, transform_indices = @transform_1, window_bounds = array<i64: 8, 128>}, {pipeline_mode = #tpu.pipeline_mode<synchronous>, transform_indices = @transform_2, window_bounds = array<i64: 64, 256>}, {pipeline_mode = #tpu.pipeline_mode<synchronous>, transform_indices = @transform_3, window_bounds = array<i64: 32, 128>}, {pipeline_mode = #tpu.pipeline_mode<synchronous>, transform_indices = @transform_4, window_bounds = array<i64: 512, 256>}, {pipeline_mode = #tpu.pipeline_mode<synchronous>, transform_indices = @transform_5, window_bounds = array<i64: 256, 256>}, {pipeline_mode = #tpu.pipeline_mode<synchronous>, transform_indices = @transform_6, window_bounds = array<i64: 2, 128>}, {transform_indices = @transform_7, window_bounds = array<i64: 8, 256>}]} {
    %c0 = arith.constant 0 : index
    %c0_0 = arith.constant 0 : index
    %0 = vector.load %arg2[%c0, %c0_0] : memref<8x128xf32, #tpu.memory_space<vmem>>, vector<8x128xf32>
    %c0_1 = arith.constant 0 : index
    %c0_2 = arith.constant 0 : index
    %1 = vector.load %arg3[%c0_1, %c0_2] : memref<64x256xf32, #tpu.memory_space<vmem>>, vector<64x256xf32>
    %c0_3 = arith.constant 0 : index
    %c0_4 = arith.constant 0 : index
    %2 = vector.load %arg4[%c0_3, %c0_4] : memref<32x128xf32, #tpu.memory_space<vmem>>, vector<32x128xf32>
    %c0_5 = arith.constant 0 : index
    %c0_6 = arith.constant 0 : index
    %3 = vector.load %arg7[%c0_5, %c0_6] : memref<2x128xf32, #tpu.memory_space<vmem>>, vector<1x128xf32>
    %4 = vector.shape_cast %3 : vector<1x128xf32> to vector<1x128xf32>
    %5 = vector.broadcast %4 : vector<1x128xf32> to vector<8x128xf32>
    %c1 = arith.constant 1 : index
    %c0_7 = arith.constant 0 : index
    %6 = vector.load %arg7[%c1, %c0_7] : memref<2x128xf32, #tpu.memory_space<vmem>>, vector<1x128xf32>
    %7 = vector.shape_cast %6 : vector<1x128xf32> to vector<1x128xf32>
    %8 = vector.broadcast %7 : vector<1x128xf32> to vector<8x128xf32>
    %cst = arith.constant 0.000000e+00 : f32
    %9 = vector.broadcast %cst : f32 to vector<8x32xf32>
    %c0_8 = arith.constant 0 : index
    %c0_9 = arith.constant 0 : index
    %10 = vector.load %arg1[%c0_8, %c0_9] : memref<8x8xf32, #tpu.memory_space<vmem>>, vector<8x8xf32>
    %cst_10 = arith.constant dense<0.000000e+00> : vector<8x128xf32>
    %11 = tpu.matmul %10, %0, %cst_10 {dimension_numbers = #tpu.dot_dimension_numbers<[1], [0], [0], [1], [0, 0, 1, 1], [], []>} : vector<8x8xf32>, vector<8x128xf32>, vector<8x128xf32> -> vector<8x128xf32>
    %12 = arith.addf %11, %5 : vector<8x128xf32>
    %13 = vector.extract_strided_slice %12 {offsets = [0, 0], sizes = [8, 96], strides = [1, 1]} : vector<8x128xf32> to vector<8x96xf32>
    %14 = arith.negf %13 : vector<8x96xf32>
    %15 = math.exp %14 : vector<8x96xf32>
    %cst_11 = arith.constant 1.000000e+00 : f32
    %16 = vector.broadcast %cst_11 : f32 to vector<8x96xf32>
    %17 = arith.addf %16, %15 : vector<8x96xf32>
    %18 = arith.divf %16, %17 : vector<8x96xf32>
    %19 = vector.extract_strided_slice %12 {offsets = [0, 96], sizes = [8, 32], strides = [1, 1]} : vector<8x128xf32> to vector<8x32xf32>
    %20 = math.tanh %19 : vector<8x32xf32>
    %21 = vector.extract_strided_slice %18 {offsets = [0, 32], sizes = [8, 32], strides = [1, 1]} : vector<8x96xf32> to vector<8x32xf32>
    %22 = arith.mulf %21, %9 : vector<8x32xf32>
    %23 = vector.extract_strided_slice %18 {offsets = [0, 0], sizes = [8, 32], strides = [1, 1]} : vector<8x96xf32> to vector<8x32xf32>
    %24 = arith.mulf %23, %20 : vector<8x32xf32>
    %25 = arith.addf %22, %24 : vector<8x32xf32>
    %26 = vector.extract_strided_slice %18 {offsets = [0, 64], sizes = [8, 32], strides = [1, 1]} : vector<8x96xf32> to vector<8x32xf32>
    %27 = math.tanh %25 : vector<8x32xf32>
    %28 = arith.mulf %26, %27 : vector<8x32xf32>
    %cst_12 = arith.constant dense<0.000000e+00> : vector<8x128xf32>
    %29 = tpu.matmul %28, %2, %cst_12 {dimension_numbers = #tpu.dot_dimension_numbers<[1], [0], [0], [1], [0, 0, 1, 1], [], []>} : vector<8x32xf32>, vector<32x128xf32>, vector<8x128xf32> -> vector<8x128xf32>
    %30 = arith.addf %29, %8 : vector<8x128xf32>
    %31 = vector.extract_strided_slice %30 {offsets = [0, 0], sizes = [8, 96], strides = [1, 1]} : vector<8x128xf32> to vector<8x96xf32>
    %32 = arith.negf %31 : vector<8x96xf32>
    %33 = math.exp %32 : vector<8x96xf32>
    %cst_13 = arith.constant 1.000000e+00 : f32
    %34 = vector.broadcast %cst_13 : f32 to vector<8x96xf32>
    %35 = arith.addf %34, %33 : vector<8x96xf32>
    %36 = arith.divf %34, %35 : vector<8x96xf32>
    %37 = vector.extract_strided_slice %30 {offsets = [0, 96], sizes = [8, 32], strides = [1, 1]} : vector<8x128xf32> to vector<8x32xf32>
    %38 = math.tanh %37 : vector<8x32xf32>
    %39 = vector.extract_strided_slice %36 {offsets = [0, 32], sizes = [8, 32], strides = [1, 1]} : vector<8x96xf32> to vector<8x32xf32>
    %40 = arith.mulf %39, %9 : vector<8x32xf32>
    %41 = vector.extract_strided_slice %36 {offsets = [0, 0], sizes = [8, 32], strides = [1, 1]} : vector<8x96xf32> to vector<8x32xf32>
    %42 = arith.mulf %41, %38 : vector<8x32xf32>
    %43 = arith.addf %40, %42 : vector<8x32xf32>
    %44 = vector.extract_strided_slice %36 {offsets = [0, 64], sizes = [8, 32], strides = [1, 1]} : vector<8x96xf32> to vector<8x32xf32>
    %45 = math.tanh %43 : vector<8x32xf32>
    %46 = arith.mulf %44, %45 : vector<8x32xf32>
    %47 = tpu.concatenate %28, %46 in 1 : vector<8x32xf32>, vector<8x32xf32> -> vector<8x64xf32>
    %cst_14 = arith.constant dense<0.000000e+00> : vector<8x256xf32>
    %48 = tpu.matmul %47, %1, %cst_14 {dimension_numbers = #tpu.dot_dimension_numbers<[1], [0], [0], [1], [0, 0, 1, 1], [], []>} : vector<8x64xf32>, vector<64x256xf32>, vector<8x256xf32> -> vector<8x256xf32>
    %49 = vector.extract_strided_slice %48 {offsets = [0, 0], sizes = [8, 128], strides = [1, 1]} : vector<8x256xf32> to vector<8x128xf32>
    %50 = arith.addf %49, %5 : vector<8x128xf32>
    %51 = vector.extract_strided_slice %50 {offsets = [0, 0], sizes = [8, 96], strides = [1, 1]} : vector<8x128xf32> to vector<8x96xf32>
    %52 = arith.negf %51 : vector<8x96xf32>
    %53 = math.exp %52 : vector<8x96xf32>
    %cst_15 = arith.constant 1.000000e+00 : f32
    %54 = vector.broadcast %cst_15 : f32 to vector<8x96xf32>
    %55 = arith.addf %54, %53 : vector<8x96xf32>
    %56 = arith.divf %54, %55 : vector<8x96xf32>
    %57 = vector.extract_strided_slice %50 {offsets = [0, 96], sizes = [8, 32], strides = [1, 1]} : vector<8x128xf32> to vector<8x32xf32>
    %58 = math.tanh %57 : vector<8x32xf32>
    %59 = vector.extract_strided_slice %56 {offsets = [0, 32], sizes = [8, 32], strides = [1, 1]} : vector<8x96xf32> to vector<8x32xf32>
    %60 = arith.mulf %59, %25 : vector<8x32xf32>
    %61 = vector.extract_strided_slice %56 {offsets = [0, 0], sizes = [8, 32], strides = [1, 1]} : vector<8x96xf32> to vector<8x32xf32>
    %62 = arith.mulf %61, %58 : vector<8x32xf32>
    %63 = arith.addf %60, %62 : vector<8x32xf32>
    %64 = vector.extract_strided_slice %56 {offsets = [0, 64], sizes = [8, 32], strides = [1, 1]} : vector<8x96xf32> to vector<8x32xf32>
    %65 = math.tanh %63 : vector<8x32xf32>
    %66 = arith.mulf %64, %65 : vector<8x32xf32>
    %cst_16 = arith.constant dense<0.000000e+00> : vector<8x128xf32>
    %67 = tpu.matmul %66, %2, %cst_16 {dimension_numbers = #tpu.dot_dimension_numbers<[1], [0], [0], [1], [0, 0, 1, 1], [], []>} : vector<8x32xf32>, vector<32x128xf32>, vector<8x128xf32> -> vector<8x128xf32>
    %68 = vector.extract_strided_slice %48 {offsets = [0, 128], sizes = [8, 128], strides = [1, 1]} : vector<8x256xf32> to vector<8x128xf32>
    %69 = arith.addf %67, %68 : vector<8x128xf32>
    %70 = arith.addf %69, %8 : vector<8x128xf32>
    %71 = vector.extract_strided_slice %70 {offsets = [0, 0], sizes = [8, 96], strides = [1, 1]} : vector<8x128xf32> to vector<8x96xf32>
    %72 = arith.negf %71 : vector<8x96xf32>
    %73 = math.exp %72 : vector<8x96xf32>
    %cst_17 = arith.constant 1.000000e+00 : f32
    %74 = vector.broadcast %cst_17 : f32 to vector<8x96xf32>
    %75 = arith.addf %74, %73 : vector<8x96xf32>
    %76 = arith.divf %74, %75 : vector<8x96xf32>
    %77 = vector.extract_strided_slice %70 {offsets = [0, 96], sizes = [8, 32], strides = [1, 1]} : vector<8x128xf32> to vector<8x32xf32>
    %78 = math.tanh %77 : vector<8x32xf32>
    %79 = vector.extract_strided_slice %76 {offsets = [0, 32], sizes = [8, 32], strides = [1, 1]} : vector<8x96xf32> to vector<8x32xf32>
    %80 = arith.mulf %79, %43 : vector<8x32xf32>
    %81 = vector.extract_strided_slice %76 {offsets = [0, 0], sizes = [8, 32], strides = [1, 1]} : vector<8x96xf32> to vector<8x32xf32>
    %82 = arith.mulf %81, %78 : vector<8x32xf32>
    %83 = arith.addf %80, %82 : vector<8x32xf32>
    %84 = vector.extract_strided_slice %76 {offsets = [0, 64], sizes = [8, 32], strides = [1, 1]} : vector<8x96xf32> to vector<8x32xf32>
    %85 = math.tanh %83 : vector<8x32xf32>
    %86 = arith.mulf %84, %85 : vector<8x32xf32>
    %87 = tpu.concatenate %66, %86 in 1 : vector<8x32xf32>, vector<8x32xf32> -> vector<8x64xf32>
    %cst_18 = arith.constant dense<0.000000e+00> : vector<8x256xf32>
    %88 = tpu.matmul %87, %1, %cst_18 {dimension_numbers = #tpu.dot_dimension_numbers<[1], [0], [0], [1], [0, 0, 1, 1], [], []>} : vector<8x64xf32>, vector<64x256xf32>, vector<8x256xf32> -> vector<8x256xf32>
    %89 = vector.extract_strided_slice %88 {offsets = [0, 0], sizes = [8, 128], strides = [1, 1]} : vector<8x256xf32> to vector<8x128xf32>
    %90 = arith.addf %89, %5 : vector<8x128xf32>
    %91 = vector.extract_strided_slice %90 {offsets = [0, 0], sizes = [8, 96], strides = [1, 1]} : vector<8x128xf32> to vector<8x96xf32>
    %92 = arith.negf %91 : vector<8x96xf32>
    %93 = math.exp %92 : vector<8x96xf32>
    %cst_19 = arith.constant 1.000000e+00 : f32
    %94 = vector.broadcast %cst_19 : f32 to vector<8x96xf32>
    %95 = arith.addf %94, %93 : vector<8x96xf32>
    %96 = arith.divf %94, %95 : vector<8x96xf32>
    %97 = vector.extract_strided_slice %90 {offsets = [0, 96], sizes = [8, 32], strides = [1, 1]} : vector<8x128xf32> to vector<8x32xf32>
    %98 = math.tanh %97 : vector<8x32xf32>
    %99 = vector.extract_strided_slice %96 {offsets = [0, 32], sizes = [8, 32], strides = [1, 1]} : vector<8x96xf32> to vector<8x32xf32>
    %100 = arith.mulf %99, %63 : vector<8x32xf32>
    %101 = vector.extract_strided_slice %96 {offsets = [0, 0], sizes = [8, 32], strides = [1, 1]} : vector<8x96xf32> to vector<8x32xf32>
    %102 = arith.mulf %101, %98 : vector<8x32xf32>
    %103 = arith.addf %100, %102 : vector<8x32xf32>
    %104 = vector.extract_strided_slice %96 {offsets = [0, 64], sizes = [8, 32], strides = [1, 1]} : vector<8x96xf32> to vector<8x32xf32>
    %105 = math.tanh %103 : vector<8x32xf32>
    %106 = arith.mulf %104, %105 : vector<8x32xf32>
    %cst_20 = arith.constant dense<0.000000e+00> : vector<8x128xf32>
    %107 = tpu.matmul %106, %2, %cst_20 {dimension_numbers = #tpu.dot_dimension_numbers<[1], [0], [0], [1], [0, 0, 1, 1], [], []>} : vector<8x32xf32>, vector<32x128xf32>, vector<8x128xf32> -> vector<8x128xf32>
    %108 = vector.extract_strided_slice %88 {offsets = [0, 128], sizes = [8, 128], strides = [1, 1]} : vector<8x256xf32> to vector<8x128xf32>
    %109 = arith.addf %107, %108 : vector<8x128xf32>
    %110 = arith.addf %109, %8 : vector<8x128xf32>
    %111 = vector.extract_strided_slice %110 {offsets = [0, 0], sizes = [8, 96], strides = [1, 1]} : vector<8x128xf32> to vector<8x96xf32>
    %112 = arith.negf %111 : vector<8x96xf32>
    %113 = math.exp %112 : vector<8x96xf32>
    %cst_21 = arith.constant 1.000000e+00 : f32
    %114 = vector.broadcast %cst_21 : f32 to vector<8x96xf32>
    %115 = arith.addf %114, %113 : vector<8x96xf32>
    %116 = arith.divf %114, %115 : vector<8x96xf32>
    %117 = vector.extract_strided_slice %110 {offsets = [0, 96], sizes = [8, 32], strides = [1, 1]} : vector<8x128xf32> to vector<8x32xf32>
    %118 = math.tanh %117 : vector<8x32xf32>
    %119 = vector.extract_strided_slice %116 {offsets = [0, 32], sizes = [8, 32], strides = [1, 1]} : vector<8x96xf32> to vector<8x32xf32>
    %120 = arith.mulf %119, %83 : vector<8x32xf32>
    %121 = vector.extract_strided_slice %116 {offsets = [0, 0], sizes = [8, 32], strides = [1, 1]} : vector<8x96xf32> to vector<8x32xf32>
    %122 = arith.mulf %121, %118 : vector<8x32xf32>
    %123 = arith.addf %120, %122 : vector<8x32xf32>
    %124 = vector.extract_strided_slice %116 {offsets = [0, 64], sizes = [8, 32], strides = [1, 1]} : vector<8x96xf32> to vector<8x32xf32>
    %125 = math.tanh %123 : vector<8x32xf32>
    %126 = arith.mulf %124, %125 : vector<8x32xf32>
    %127 = tpu.concatenate %106, %126 in 1 : vector<8x32xf32>, vector<8x32xf32> -> vector<8x64xf32>
    %cst_22 = arith.constant dense<0.000000e+00> : vector<8x256xf32>
    %128 = tpu.matmul %127, %1, %cst_22 {dimension_numbers = #tpu.dot_dimension_numbers<[1], [0], [0], [1], [0, 0, 1, 1], [], []>} : vector<8x64xf32>, vector<64x256xf32>, vector<8x256xf32> -> vector<8x256xf32>
    %129 = vector.extract_strided_slice %128 {offsets = [0, 0], sizes = [8, 128], strides = [1, 1]} : vector<8x256xf32> to vector<8x128xf32>
    %130 = arith.addf %129, %5 : vector<8x128xf32>
    %131 = vector.extract_strided_slice %130 {offsets = [0, 0], sizes = [8, 96], strides = [1, 1]} : vector<8x128xf32> to vector<8x96xf32>
    %132 = arith.negf %131 : vector<8x96xf32>
    %133 = math.exp %132 : vector<8x96xf32>
    %cst_23 = arith.constant 1.000000e+00 : f32
    %134 = vector.broadcast %cst_23 : f32 to vector<8x96xf32>
    %135 = arith.addf %134, %133 : vector<8x96xf32>
    %136 = arith.divf %134, %135 : vector<8x96xf32>
    %137 = vector.extract_strided_slice %130 {offsets = [0, 96], sizes = [8, 32], strides = [1, 1]} : vector<8x128xf32> to vector<8x32xf32>
    %138 = math.tanh %137 : vector<8x32xf32>
    %139 = vector.extract_strided_slice %136 {offsets = [0, 32], sizes = [8, 32], strides = [1, 1]} : vector<8x96xf32> to vector<8x32xf32>
    %140 = arith.mulf %139, %103 : vector<8x32xf32>
    %141 = vector.extract_strided_slice %136 {offsets = [0, 0], sizes = [8, 32], strides = [1, 1]} : vector<8x96xf32> to vector<8x32xf32>
    %142 = arith.mulf %141, %138 : vector<8x32xf32>
    %143 = arith.addf %140, %142 : vector<8x32xf32>
    %144 = vector.extract_strided_slice %136 {offsets = [0, 64], sizes = [8, 32], strides = [1, 1]} : vector<8x96xf32> to vector<8x32xf32>
    %145 = math.tanh %143 : vector<8x32xf32>
    %146 = arith.mulf %144, %145 : vector<8x32xf32>
    %cst_24 = arith.constant dense<0.000000e+00> : vector<8x128xf32>
    %147 = tpu.matmul %146, %2, %cst_24 {dimension_numbers = #tpu.dot_dimension_numbers<[1], [0], [0], [1], [0, 0, 1, 1], [], []>} : vector<8x32xf32>, vector<32x128xf32>, vector<8x128xf32> -> vector<8x128xf32>
    %148 = vector.extract_strided_slice %128 {offsets = [0, 128], sizes = [8, 128], strides = [1, 1]} : vector<8x256xf32> to vector<8x128xf32>
    %149 = arith.addf %147, %148 : vector<8x128xf32>
    %150 = arith.addf %149, %8 : vector<8x128xf32>
    %151 = vector.extract_strided_slice %150 {offsets = [0, 0], sizes = [8, 96], strides = [1, 1]} : vector<8x128xf32> to vector<8x96xf32>
    %152 = arith.negf %151 : vector<8x96xf32>
    %153 = math.exp %152 : vector<8x96xf32>
    %cst_25 = arith.constant 1.000000e+00 : f32
    %154 = vector.broadcast %cst_25 : f32 to vector<8x96xf32>
    %155 = arith.addf %154, %153 : vector<8x96xf32>
    %156 = arith.divf %154, %155 : vector<8x96xf32>
    %157 = vector.extract_strided_slice %150 {offsets = [0, 96], sizes = [8, 32], strides = [1, 1]} : vector<8x128xf32> to vector<8x32xf32>
    %158 = math.tanh %157 : vector<8x32xf32>
    %159 = vector.extract_strided_slice %156 {offsets = [0, 32], sizes = [8, 32], strides = [1, 1]} : vector<8x96xf32> to vector<8x32xf32>
    %160 = arith.mulf %159, %123 : vector<8x32xf32>
    %161 = vector.extract_strided_slice %156 {offsets = [0, 0], sizes = [8, 32], strides = [1, 1]} : vector<8x96xf32> to vector<8x32xf32>
    %162 = arith.mulf %161, %158 : vector<8x32xf32>
    %163 = arith.addf %160, %162 : vector<8x32xf32>
    %164 = vector.extract_strided_slice %156 {offsets = [0, 64], sizes = [8, 32], strides = [1, 1]} : vector<8x96xf32> to vector<8x32xf32>
    %165 = math.tanh %163 : vector<8x32xf32>
    %166 = arith.mulf %164, %165 : vector<8x32xf32>
    %167 = tpu.concatenate %146, %166 in 1 : vector<8x32xf32>, vector<8x32xf32> -> vector<8x64xf32>
    %cst_26 = arith.constant dense<0.000000e+00> : vector<8x256xf32>
    %168 = tpu.matmul %167, %1, %cst_26 {dimension_numbers = #tpu.dot_dimension_numbers<[1], [0], [0], [1], [0, 0, 1, 1], [], []>} : vector<8x64xf32>, vector<64x256xf32>, vector<8x256xf32> -> vector<8x256xf32>
    %169 = vector.extract_strided_slice %168 {offsets = [0, 0], sizes = [8, 128], strides = [1, 1]} : vector<8x256xf32> to vector<8x128xf32>
    %170 = arith.addf %169, %5 : vector<8x128xf32>
    %171 = vector.extract_strided_slice %170 {offsets = [0, 0], sizes = [8, 96], strides = [1, 1]} : vector<8x128xf32> to vector<8x96xf32>
    %172 = arith.negf %171 : vector<8x96xf32>
    %173 = math.exp %172 : vector<8x96xf32>
    %cst_27 = arith.constant 1.000000e+00 : f32
    %174 = vector.broadcast %cst_27 : f32 to vector<8x96xf32>
    %175 = arith.addf %174, %173 : vector<8x96xf32>
    %176 = arith.divf %174, %175 : vector<8x96xf32>
    %177 = vector.extract_strided_slice %170 {offsets = [0, 96], sizes = [8, 32], strides = [1, 1]} : vector<8x128xf32> to vector<8x32xf32>
    %178 = math.tanh %177 : vector<8x32xf32>
    %179 = vector.extract_strided_slice %176 {offsets = [0, 32], sizes = [8, 32], strides = [1, 1]} : vector<8x96xf32> to vector<8x32xf32>
    %180 = arith.mulf %179, %143 : vector<8x32xf32>
    %181 = vector.extract_strided_slice %176 {offsets = [0, 0], sizes = [8, 32], strides = [1, 1]} : vector<8x96xf32> to vector<8x32xf32>
    %182 = arith.mulf %181, %178 : vector<8x32xf32>
    %183 = arith.addf %180, %182 : vector<8x32xf32>
    %184 = vector.extract_strided_slice %176 {offsets = [0, 64], sizes = [8, 32], strides = [1, 1]} : vector<8x96xf32> to vector<8x32xf32>
    %185 = math.tanh %183 : vector<8x32xf32>
    %186 = arith.mulf %184, %185 : vector<8x32xf32>
    %cst_28 = arith.constant dense<0.000000e+00> : vector<8x128xf32>
    %187 = tpu.matmul %186, %2, %cst_28 {dimension_numbers = #tpu.dot_dimension_numbers<[1], [0], [0], [1], [0, 0, 1, 1], [], []>} : vector<8x32xf32>, vector<32x128xf32>, vector<8x128xf32> -> vector<8x128xf32>
    %188 = vector.extract_strided_slice %168 {offsets = [0, 128], sizes = [8, 128], strides = [1, 1]} : vector<8x256xf32> to vector<8x128xf32>
    %189 = arith.addf %187, %188 : vector<8x128xf32>
    %190 = arith.addf %189, %8 : vector<8x128xf32>
    %191 = vector.extract_strided_slice %190 {offsets = [0, 0], sizes = [8, 96], strides = [1, 1]} : vector<8x128xf32> to vector<8x96xf32>
    %192 = arith.negf %191 : vector<8x96xf32>
    %193 = math.exp %192 : vector<8x96xf32>
    %cst_29 = arith.constant 1.000000e+00 : f32
    %194 = vector.broadcast %cst_29 : f32 to vector<8x96xf32>
    %195 = arith.addf %194, %193 : vector<8x96xf32>
    %196 = arith.divf %194, %195 : vector<8x96xf32>
    %197 = vector.extract_strided_slice %190 {offsets = [0, 96], sizes = [8, 32], strides = [1, 1]} : vector<8x128xf32> to vector<8x32xf32>
    %198 = math.tanh %197 : vector<8x32xf32>
    %199 = vector.extract_strided_slice %196 {offsets = [0, 32], sizes = [8, 32], strides = [1, 1]} : vector<8x96xf32> to vector<8x32xf32>
    %200 = arith.mulf %199, %163 : vector<8x32xf32>
    %201 = vector.extract_strided_slice %196 {offsets = [0, 0], sizes = [8, 32], strides = [1, 1]} : vector<8x96xf32> to vector<8x32xf32>
    %202 = arith.mulf %201, %198 : vector<8x32xf32>
    %203 = arith.addf %200, %202 : vector<8x32xf32>
    %204 = vector.extract_strided_slice %196 {offsets = [0, 64], sizes = [8, 32], strides = [1, 1]} : vector<8x96xf32> to vector<8x32xf32>
    %205 = math.tanh %203 : vector<8x32xf32>
    %206 = arith.mulf %204, %205 : vector<8x32xf32>
    %207 = tpu.concatenate %186, %206 in 1 : vector<8x32xf32>, vector<8x32xf32> -> vector<8x64xf32>
    %cst_30 = arith.constant dense<0.000000e+00> : vector<8x256xf32>
    %208 = tpu.matmul %207, %1, %cst_30 {dimension_numbers = #tpu.dot_dimension_numbers<[1], [0], [0], [1], [0, 0, 1, 1], [], []>} : vector<8x64xf32>, vector<64x256xf32>, vector<8x256xf32> -> vector<8x256xf32>
    %209 = vector.extract_strided_slice %208 {offsets = [0, 0], sizes = [8, 128], strides = [1, 1]} : vector<8x256xf32> to vector<8x128xf32>
    %210 = arith.addf %209, %5 : vector<8x128xf32>
    %211 = vector.extract_strided_slice %210 {offsets = [0, 0], sizes = [8, 96], strides = [1, 1]} : vector<8x128xf32> to vector<8x96xf32>
    %212 = arith.negf %211 : vector<8x96xf32>
    %213 = math.exp %212 : vector<8x96xf32>
    %cst_31 = arith.constant 1.000000e+00 : f32
    %214 = vector.broadcast %cst_31 : f32 to vector<8x96xf32>
    %215 = arith.addf %214, %213 : vector<8x96xf32>
    %216 = arith.divf %214, %215 : vector<8x96xf32>
    %217 = vector.extract_strided_slice %210 {offsets = [0, 96], sizes = [8, 32], strides = [1, 1]} : vector<8x128xf32> to vector<8x32xf32>
    %218 = math.tanh %217 : vector<8x32xf32>
    %219 = vector.extract_strided_slice %216 {offsets = [0, 32], sizes = [8, 32], strides = [1, 1]} : vector<8x96xf32> to vector<8x32xf32>
    %220 = arith.mulf %219, %183 : vector<8x32xf32>
    %221 = vector.extract_strided_slice %216 {offsets = [0, 0], sizes = [8, 32], strides = [1, 1]} : vector<8x96xf32> to vector<8x32xf32>
    %222 = arith.mulf %221, %218 : vector<8x32xf32>
    %223 = arith.addf %220, %222 : vector<8x32xf32>
    %224 = vector.extract_strided_slice %216 {offsets = [0, 64], sizes = [8, 32], strides = [1, 1]} : vector<8x96xf32> to vector<8x32xf32>
    %225 = math.tanh %223 : vector<8x32xf32>
    %226 = arith.mulf %224, %225 : vector<8x32xf32>
    %cst_32 = arith.constant dense<0.000000e+00> : vector<8x128xf32>
    %227 = tpu.matmul %226, %2, %cst_32 {dimension_numbers = #tpu.dot_dimension_numbers<[1], [0], [0], [1], [0, 0, 1, 1], [], []>} : vector<8x32xf32>, vector<32x128xf32>, vector<8x128xf32> -> vector<8x128xf32>
    %228 = vector.extract_strided_slice %208 {offsets = [0, 128], sizes = [8, 128], strides = [1, 1]} : vector<8x256xf32> to vector<8x128xf32>
    %229 = arith.addf %227, %228 : vector<8x128xf32>
    %230 = arith.addf %229, %8 : vector<8x128xf32>
    %231 = vector.extract_strided_slice %230 {offsets = [0, 0], sizes = [8, 96], strides = [1, 1]} : vector<8x128xf32> to vector<8x96xf32>
    %232 = arith.negf %231 : vector<8x96xf32>
    %233 = math.exp %232 : vector<8x96xf32>
    %cst_33 = arith.constant 1.000000e+00 : f32
    %234 = vector.broadcast %cst_33 : f32 to vector<8x96xf32>
    %235 = arith.addf %234, %233 : vector<8x96xf32>
    %236 = arith.divf %234, %235 : vector<8x96xf32>
    %237 = vector.extract_strided_slice %230 {offsets = [0, 96], sizes = [8, 32], strides = [1, 1]} : vector<8x128xf32> to vector<8x32xf32>
    %238 = math.tanh %237 : vector<8x32xf32>
    %239 = vector.extract_strided_slice %236 {offsets = [0, 32], sizes = [8, 32], strides = [1, 1]} : vector<8x96xf32> to vector<8x32xf32>
    %240 = arith.mulf %239, %203 : vector<8x32xf32>
    %241 = vector.extract_strided_slice %236 {offsets = [0, 0], sizes = [8, 32], strides = [1, 1]} : vector<8x96xf32> to vector<8x32xf32>
    %242 = arith.mulf %241, %238 : vector<8x32xf32>
    %243 = arith.addf %240, %242 : vector<8x32xf32>
    %244 = vector.extract_strided_slice %236 {offsets = [0, 64], sizes = [8, 32], strides = [1, 1]} : vector<8x96xf32> to vector<8x32xf32>
    %245 = math.tanh %243 : vector<8x32xf32>
    %246 = arith.mulf %244, %245 : vector<8x32xf32>
    %247 = tpu.concatenate %226, %246 in 1 : vector<8x32xf32>, vector<8x32xf32> -> vector<8x64xf32>
    %cst_34 = arith.constant dense<0.000000e+00> : vector<8x256xf32>
    %248 = tpu.matmul %247, %1, %cst_34 {dimension_numbers = #tpu.dot_dimension_numbers<[1], [0], [0], [1], [0, 0, 1, 1], [], []>} : vector<8x64xf32>, vector<64x256xf32>, vector<8x256xf32> -> vector<8x256xf32>
    %249 = vector.extract_strided_slice %248 {offsets = [0, 0], sizes = [8, 128], strides = [1, 1]} : vector<8x256xf32> to vector<8x128xf32>
    %250 = arith.addf %249, %5 : vector<8x128xf32>
    %251 = vector.extract_strided_slice %250 {offsets = [0, 0], sizes = [8, 96], strides = [1, 1]} : vector<8x128xf32> to vector<8x96xf32>
    %252 = arith.negf %251 : vector<8x96xf32>
    %253 = math.exp %252 : vector<8x96xf32>
    %cst_35 = arith.constant 1.000000e+00 : f32
    %254 = vector.broadcast %cst_35 : f32 to vector<8x96xf32>
    %255 = arith.addf %254, %253 : vector<8x96xf32>
    %256 = arith.divf %254, %255 : vector<8x96xf32>
    %257 = vector.extract_strided_slice %250 {offsets = [0, 96], sizes = [8, 32], strides = [1, 1]} : vector<8x128xf32> to vector<8x32xf32>
    %258 = math.tanh %257 : vector<8x32xf32>
    %259 = vector.extract_strided_slice %256 {offsets = [0, 32], sizes = [8, 32], strides = [1, 1]} : vector<8x96xf32> to vector<8x32xf32>
    %260 = arith.mulf %259, %223 : vector<8x32xf32>
    %261 = vector.extract_strided_slice %256 {offsets = [0, 0], sizes = [8, 32], strides = [1, 1]} : vector<8x96xf32> to vector<8x32xf32>
    %262 = arith.mulf %261, %258 : vector<8x32xf32>
    %263 = arith.addf %260, %262 : vector<8x32xf32>
    %264 = vector.extract_strided_slice %256 {offsets = [0, 64], sizes = [8, 32], strides = [1, 1]} : vector<8x96xf32> to vector<8x32xf32>
    %265 = math.tanh %263 : vector<8x32xf32>
    %266 = arith.mulf %264, %265 : vector<8x32xf32>
    %cst_36 = arith.constant dense<0.000000e+00> : vector<8x128xf32>
    %267 = tpu.matmul %266, %2, %cst_36 {dimension_numbers = #tpu.dot_dimension_numbers<[1], [0], [0], [1], [0, 0, 1, 1], [], []>} : vector<8x32xf32>, vector<32x128xf32>, vector<8x128xf32> -> vector<8x128xf32>
    %268 = vector.extract_strided_slice %248 {offsets = [0, 128], sizes = [8, 128], strides = [1, 1]} : vector<8x256xf32> to vector<8x128xf32>
    %269 = arith.addf %267, %268 : vector<8x128xf32>
    %270 = arith.addf %269, %8 : vector<8x128xf32>
    %271 = vector.extract_strided_slice %270 {offsets = [0, 0], sizes = [8, 96], strides = [1, 1]} : vector<8x128xf32> to vector<8x96xf32>
    %272 = arith.negf %271 : vector<8x96xf32>
    %273 = math.exp %272 : vector<8x96xf32>
    %cst_37 = arith.constant 1.000000e+00 : f32
    %274 = vector.broadcast %cst_37 : f32 to vector<8x96xf32>
    %275 = arith.addf %274, %273 : vector<8x96xf32>
    %276 = arith.divf %274, %275 : vector<8x96xf32>
    %277 = vector.extract_strided_slice %270 {offsets = [0, 96], sizes = [8, 32], strides = [1, 1]} : vector<8x128xf32> to vector<8x32xf32>
    %278 = math.tanh %277 : vector<8x32xf32>
    %279 = vector.extract_strided_slice %276 {offsets = [0, 32], sizes = [8, 32], strides = [1, 1]} : vector<8x96xf32> to vector<8x32xf32>
    %280 = arith.mulf %279, %243 : vector<8x32xf32>
    %281 = vector.extract_strided_slice %276 {offsets = [0, 0], sizes = [8, 32], strides = [1, 1]} : vector<8x96xf32> to vector<8x32xf32>
    %282 = arith.mulf %281, %278 : vector<8x32xf32>
    %283 = arith.addf %280, %282 : vector<8x32xf32>
    %284 = vector.extract_strided_slice %276 {offsets = [0, 64], sizes = [8, 32], strides = [1, 1]} : vector<8x96xf32> to vector<8x32xf32>
    %285 = math.tanh %283 : vector<8x32xf32>
    %286 = arith.mulf %284, %285 : vector<8x32xf32>
    %287 = tpu.concatenate %266, %286 in 1 : vector<8x32xf32>, vector<8x32xf32> -> vector<8x64xf32>
    %cst_38 = arith.constant dense<0.000000e+00> : vector<8x256xf32>
    %288 = tpu.matmul %287, %1, %cst_38 {dimension_numbers = #tpu.dot_dimension_numbers<[1], [0], [0], [1], [0, 0, 1, 1], [], []>} : vector<8x64xf32>, vector<64x256xf32>, vector<8x256xf32> -> vector<8x256xf32>
    %289 = vector.extract_strided_slice %288 {offsets = [0, 0], sizes = [8, 128], strides = [1, 1]} : vector<8x256xf32> to vector<8x128xf32>
    %290 = arith.addf %289, %5 : vector<8x128xf32>
    %291 = vector.extract_strided_slice %290 {offsets = [0, 0], sizes = [8, 96], strides = [1, 1]} : vector<8x128xf32> to vector<8x96xf32>
    %292 = arith.negf %291 : vector<8x96xf32>
    %293 = math.exp %292 : vector<8x96xf32>
    %cst_39 = arith.constant 1.000000e+00 : f32
    %294 = vector.broadcast %cst_39 : f32 to vector<8x96xf32>
    %295 = arith.addf %294, %293 : vector<8x96xf32>
    %296 = arith.divf %294, %295 : vector<8x96xf32>
    %297 = vector.extract_strided_slice %290 {offsets = [0, 96], sizes = [8, 32], strides = [1, 1]} : vector<8x128xf32> to vector<8x32xf32>
    %298 = math.tanh %297 : vector<8x32xf32>
    %299 = vector.extract_strided_slice %296 {offsets = [0, 32], sizes = [8, 32], strides = [1, 1]} : vector<8x96xf32> to vector<8x32xf32>
    %300 = arith.mulf %299, %263 : vector<8x32xf32>
    %301 = vector.extract_strided_slice %296 {offsets = [0, 0], sizes = [8, 32], strides = [1, 1]} : vector<8x96xf32> to vector<8x32xf32>
    %302 = arith.mulf %301, %298 : vector<8x32xf32>
    %303 = arith.addf %300, %302 : vector<8x32xf32>
    %304 = vector.extract_strided_slice %296 {offsets = [0, 64], sizes = [8, 32], strides = [1, 1]} : vector<8x96xf32> to vector<8x32xf32>
    %305 = math.tanh %303 : vector<8x32xf32>
    %306 = arith.mulf %304, %305 : vector<8x32xf32>
    %cst_40 = arith.constant dense<0.000000e+00> : vector<8x128xf32>
    %307 = tpu.matmul %306, %2, %cst_40 {dimension_numbers = #tpu.dot_dimension_numbers<[1], [0], [0], [1], [0, 0, 1, 1], [], []>} : vector<8x32xf32>, vector<32x128xf32>, vector<8x128xf32> -> vector<8x128xf32>
    %308 = vector.extract_strided_slice %288 {offsets = [0, 128], sizes = [8, 128], strides = [1, 1]} : vector<8x256xf32> to vector<8x128xf32>
    %309 = arith.addf %307, %308 : vector<8x128xf32>
    %310 = arith.addf %309, %8 : vector<8x128xf32>
    %311 = vector.extract_strided_slice %310 {offsets = [0, 0], sizes = [8, 96], strides = [1, 1]} : vector<8x128xf32> to vector<8x96xf32>
    %312 = arith.negf %311 : vector<8x96xf32>
    %313 = math.exp %312 : vector<8x96xf32>
    %cst_41 = arith.constant 1.000000e+00 : f32
    %314 = vector.broadcast %cst_41 : f32 to vector<8x96xf32>
    %315 = arith.addf %314, %313 : vector<8x96xf32>
    %316 = arith.divf %314, %315 : vector<8x96xf32>
    %317 = vector.extract_strided_slice %310 {offsets = [0, 96], sizes = [8, 32], strides = [1, 1]} : vector<8x128xf32> to vector<8x32xf32>
    %318 = math.tanh %317 : vector<8x32xf32>
    %319 = vector.extract_strided_slice %316 {offsets = [0, 32], sizes = [8, 32], strides = [1, 1]} : vector<8x96xf32> to vector<8x32xf32>
    %320 = arith.mulf %319, %283 : vector<8x32xf32>
    %321 = vector.extract_strided_slice %316 {offsets = [0, 0], sizes = [8, 32], strides = [1, 1]} : vector<8x96xf32> to vector<8x32xf32>
    %322 = arith.mulf %321, %318 : vector<8x32xf32>
    %323 = arith.addf %320, %322 : vector<8x32xf32>
    %324 = vector.extract_strided_slice %316 {offsets = [0, 64], sizes = [8, 32], strides = [1, 1]} : vector<8x96xf32> to vector<8x32xf32>
    %325 = math.tanh %323 : vector<8x32xf32>
    %326 = arith.mulf %324, %325 : vector<8x32xf32>
    %327 = tpu.concatenate %306, %326 in 1 : vector<8x32xf32>, vector<8x32xf32> -> vector<8x64xf32>
    %cst_42 = arith.constant dense<0.000000e+00> : vector<8x256xf32>
    %328 = tpu.matmul %327, %1, %cst_42 {dimension_numbers = #tpu.dot_dimension_numbers<[1], [0], [0], [1], [0, 0, 1, 1], [], []>} : vector<8x64xf32>, vector<64x256xf32>, vector<8x256xf32> -> vector<8x256xf32>
    %329 = vector.extract_strided_slice %328 {offsets = [0, 0], sizes = [8, 128], strides = [1, 1]} : vector<8x256xf32> to vector<8x128xf32>
    %330 = arith.addf %329, %5 : vector<8x128xf32>
    %331 = vector.extract_strided_slice %330 {offsets = [0, 0], sizes = [8, 96], strides = [1, 1]} : vector<8x128xf32> to vector<8x96xf32>
    %332 = arith.negf %331 : vector<8x96xf32>
    %333 = math.exp %332 : vector<8x96xf32>
    %cst_43 = arith.constant 1.000000e+00 : f32
    %334 = vector.broadcast %cst_43 : f32 to vector<8x96xf32>
    %335 = arith.addf %334, %333 : vector<8x96xf32>
    %336 = arith.divf %334, %335 : vector<8x96xf32>
    %337 = vector.extract_strided_slice %330 {offsets = [0, 96], sizes = [8, 32], strides = [1, 1]} : vector<8x128xf32> to vector<8x32xf32>
    %338 = math.tanh %337 : vector<8x32xf32>
    %339 = vector.extract_strided_slice %336 {offsets = [0, 32], sizes = [8, 32], strides = [1, 1]} : vector<8x96xf32> to vector<8x32xf32>
    %340 = arith.mulf %339, %303 : vector<8x32xf32>
    %341 = vector.extract_strided_slice %336 {offsets = [0, 0], sizes = [8, 32], strides = [1, 1]} : vector<8x96xf32> to vector<8x32xf32>
    %342 = arith.mulf %341, %338 : vector<8x32xf32>
    %343 = arith.addf %340, %342 : vector<8x32xf32>
    %344 = vector.extract_strided_slice %336 {offsets = [0, 64], sizes = [8, 32], strides = [1, 1]} : vector<8x96xf32> to vector<8x32xf32>
    %345 = math.tanh %343 : vector<8x32xf32>
    %346 = arith.mulf %344, %345 : vector<8x32xf32>
    %cst_44 = arith.constant dense<0.000000e+00> : vector<8x128xf32>
    %347 = tpu.matmul %346, %2, %cst_44 {dimension_numbers = #tpu.dot_dimension_numbers<[1], [0], [0], [1], [0, 0, 1, 1], [], []>} : vector<8x32xf32>, vector<32x128xf32>, vector<8x128xf32> -> vector<8x128xf32>
    %348 = vector.extract_strided_slice %328 {offsets = [0, 128], sizes = [8, 128], strides = [1, 1]} : vector<8x256xf32> to vector<8x128xf32>
    %349 = arith.addf %347, %348 : vector<8x128xf32>
    %350 = arith.addf %349, %8 : vector<8x128xf32>
    %351 = vector.extract_strided_slice %350 {offsets = [0, 0], sizes = [8, 96], strides = [1, 1]} : vector<8x128xf32> to vector<8x96xf32>
    %352 = arith.negf %351 : vector<8x96xf32>
    %353 = math.exp %352 : vector<8x96xf32>
    %cst_45 = arith.constant 1.000000e+00 : f32
    %354 = vector.broadcast %cst_45 : f32 to vector<8x96xf32>
    %355 = arith.addf %354, %353 : vector<8x96xf32>
    %356 = arith.divf %354, %355 : vector<8x96xf32>
    %357 = vector.extract_strided_slice %350 {offsets = [0, 96], sizes = [8, 32], strides = [1, 1]} : vector<8x128xf32> to vector<8x32xf32>
    %358 = math.tanh %357 : vector<8x32xf32>
    %359 = vector.extract_strided_slice %356 {offsets = [0, 32], sizes = [8, 32], strides = [1, 1]} : vector<8x96xf32> to vector<8x32xf32>
    %360 = arith.mulf %359, %323 : vector<8x32xf32>
    %361 = vector.extract_strided_slice %356 {offsets = [0, 0], sizes = [8, 32], strides = [1, 1]} : vector<8x96xf32> to vector<8x32xf32>
    %362 = arith.mulf %361, %358 : vector<8x32xf32>
    %363 = arith.addf %360, %362 : vector<8x32xf32>
    %364 = vector.extract_strided_slice %356 {offsets = [0, 64], sizes = [8, 32], strides = [1, 1]} : vector<8x96xf32> to vector<8x32xf32>
    %365 = math.tanh %363 : vector<8x32xf32>
    %366 = arith.mulf %364, %365 : vector<8x32xf32>
    %367 = tpu.concatenate %346, %366 in 1 : vector<8x32xf32>, vector<8x32xf32> -> vector<8x64xf32>
    %cst_46 = arith.constant dense<0.000000e+00> : vector<8x256xf32>
    %368 = tpu.matmul %367, %1, %cst_46 {dimension_numbers = #tpu.dot_dimension_numbers<[1], [0], [0], [1], [0, 0, 1, 1], [], []>} : vector<8x64xf32>, vector<64x256xf32>, vector<8x256xf32> -> vector<8x256xf32>
    %369 = vector.extract_strided_slice %368 {offsets = [0, 0], sizes = [8, 128], strides = [1, 1]} : vector<8x256xf32> to vector<8x128xf32>
    %370 = arith.addf %369, %5 : vector<8x128xf32>
    %371 = vector.extract_strided_slice %370 {offsets = [0, 0], sizes = [8, 96], strides = [1, 1]} : vector<8x128xf32> to vector<8x96xf32>
    %372 = arith.negf %371 : vector<8x96xf32>
    %373 = math.exp %372 : vector<8x96xf32>
    %cst_47 = arith.constant 1.000000e+00 : f32
    %374 = vector.broadcast %cst_47 : f32 to vector<8x96xf32>
    %375 = arith.addf %374, %373 : vector<8x96xf32>
    %376 = arith.divf %374, %375 : vector<8x96xf32>
    %377 = vector.extract_strided_slice %370 {offsets = [0, 96], sizes = [8, 32], strides = [1, 1]} : vector<8x128xf32> to vector<8x32xf32>
    %378 = math.tanh %377 : vector<8x32xf32>
    %379 = vector.extract_strided_slice %376 {offsets = [0, 32], sizes = [8, 32], strides = [1, 1]} : vector<8x96xf32> to vector<8x32xf32>
    %380 = arith.mulf %379, %343 : vector<8x32xf32>
    %381 = vector.extract_strided_slice %376 {offsets = [0, 0], sizes = [8, 32], strides = [1, 1]} : vector<8x96xf32> to vector<8x32xf32>
    %382 = arith.mulf %381, %378 : vector<8x32xf32>
    %383 = arith.addf %380, %382 : vector<8x32xf32>
    %384 = vector.extract_strided_slice %376 {offsets = [0, 64], sizes = [8, 32], strides = [1, 1]} : vector<8x96xf32> to vector<8x32xf32>
    %385 = math.tanh %383 : vector<8x32xf32>
    %386 = arith.mulf %384, %385 : vector<8x32xf32>
    %cst_48 = arith.constant dense<0.000000e+00> : vector<8x128xf32>
    %387 = tpu.matmul %386, %2, %cst_48 {dimension_numbers = #tpu.dot_dimension_numbers<[1], [0], [0], [1], [0, 0, 1, 1], [], []>} : vector<8x32xf32>, vector<32x128xf32>, vector<8x128xf32> -> vector<8x128xf32>
    %388 = vector.extract_strided_slice %368 {offsets = [0, 128], sizes = [8, 128], strides = [1, 1]} : vector<8x256xf32> to vector<8x128xf32>
    %389 = arith.addf %387, %388 : vector<8x128xf32>
    %390 = arith.addf %389, %8 : vector<8x128xf32>
    %391 = vector.extract_strided_slice %390 {offsets = [0, 0], sizes = [8, 96], strides = [1, 1]} : vector<8x128xf32> to vector<8x96xf32>
    %392 = arith.negf %391 : vector<8x96xf32>
    %393 = math.exp %392 : vector<8x96xf32>
    %cst_49 = arith.constant 1.000000e+00 : f32
    %394 = vector.broadcast %cst_49 : f32 to vector<8x96xf32>
    %395 = arith.addf %394, %393 : vector<8x96xf32>
    %396 = arith.divf %394, %395 : vector<8x96xf32>
    %397 = vector.extract_strided_slice %390 {offsets = [0, 96], sizes = [8, 32], strides = [1, 1]} : vector<8x128xf32> to vector<8x32xf32>
    %398 = math.tanh %397 : vector<8x32xf32>
    %399 = vector.extract_strided_slice %396 {offsets = [0, 32], sizes = [8, 32], strides = [1, 1]} : vector<8x96xf32> to vector<8x32xf32>
    %400 = arith.mulf %399, %363 : vector<8x32xf32>
    %401 = vector.extract_strided_slice %396 {offsets = [0, 0], sizes = [8, 32], strides = [1, 1]} : vector<8x96xf32> to vector<8x32xf32>
    %402 = arith.mulf %401, %398 : vector<8x32xf32>
    %403 = arith.addf %400, %402 : vector<8x32xf32>
    %404 = vector.extract_strided_slice %396 {offsets = [0, 64], sizes = [8, 32], strides = [1, 1]} : vector<8x96xf32> to vector<8x32xf32>
    %405 = math.tanh %403 : vector<8x32xf32>
    %406 = arith.mulf %404, %405 : vector<8x32xf32>
    %407 = tpu.concatenate %386, %406 in 1 : vector<8x32xf32>, vector<8x32xf32> -> vector<8x64xf32>
    %cst_50 = arith.constant dense<0.000000e+00> : vector<8x256xf32>
    %408 = tpu.matmul %407, %1, %cst_50 {dimension_numbers = #tpu.dot_dimension_numbers<[1], [0], [0], [1], [0, 0, 1, 1], [], []>} : vector<8x64xf32>, vector<64x256xf32>, vector<8x256xf32> -> vector<8x256xf32>
    %409 = vector.extract_strided_slice %408 {offsets = [0, 0], sizes = [8, 128], strides = [1, 1]} : vector<8x256xf32> to vector<8x128xf32>
    %410 = arith.addf %409, %5 : vector<8x128xf32>
    %411 = vector.extract_strided_slice %410 {offsets = [0, 0], sizes = [8, 96], strides = [1, 1]} : vector<8x128xf32> to vector<8x96xf32>
    %412 = arith.negf %411 : vector<8x96xf32>
    %413 = math.exp %412 : vector<8x96xf32>
    %cst_51 = arith.constant 1.000000e+00 : f32
    %414 = vector.broadcast %cst_51 : f32 to vector<8x96xf32>
    %415 = arith.addf %414, %413 : vector<8x96xf32>
    %416 = arith.divf %414, %415 : vector<8x96xf32>
    %417 = vector.extract_strided_slice %410 {offsets = [0, 96], sizes = [8, 32], strides = [1, 1]} : vector<8x128xf32> to vector<8x32xf32>
    %418 = math.tanh %417 : vector<8x32xf32>
    %419 = vector.extract_strided_slice %416 {offsets = [0, 32], sizes = [8, 32], strides = [1, 1]} : vector<8x96xf32> to vector<8x32xf32>
    %420 = arith.mulf %419, %383 : vector<8x32xf32>
    %421 = vector.extract_strided_slice %416 {offsets = [0, 0], sizes = [8, 32], strides = [1, 1]} : vector<8x96xf32> to vector<8x32xf32>
    %422 = arith.mulf %421, %418 : vector<8x32xf32>
    %423 = arith.addf %420, %422 : vector<8x32xf32>
    %424 = vector.extract_strided_slice %416 {offsets = [0, 64], sizes = [8, 32], strides = [1, 1]} : vector<8x96xf32> to vector<8x32xf32>
    %425 = math.tanh %423 : vector<8x32xf32>
    %426 = arith.mulf %424, %425 : vector<8x32xf32>
    %cst_52 = arith.constant dense<0.000000e+00> : vector<8x128xf32>
    %427 = tpu.matmul %426, %2, %cst_52 {dimension_numbers = #tpu.dot_dimension_numbers<[1], [0], [0], [1], [0, 0, 1, 1], [], []>} : vector<8x32xf32>, vector<32x128xf32>, vector<8x128xf32> -> vector<8x128xf32>
    %428 = vector.extract_strided_slice %408 {offsets = [0, 128], sizes = [8, 128], strides = [1, 1]} : vector<8x256xf32> to vector<8x128xf32>
    %429 = arith.addf %427, %428 : vector<8x128xf32>
    %430 = arith.addf %429, %8 : vector<8x128xf32>
    %431 = vector.extract_strided_slice %430 {offsets = [0, 0], sizes = [8, 96], strides = [1, 1]} : vector<8x128xf32> to vector<8x96xf32>
    %432 = arith.negf %431 : vector<8x96xf32>
    %433 = math.exp %432 : vector<8x96xf32>
    %cst_53 = arith.constant 1.000000e+00 : f32
    %434 = vector.broadcast %cst_53 : f32 to vector<8x96xf32>
    %435 = arith.addf %434, %433 : vector<8x96xf32>
    %436 = arith.divf %434, %435 : vector<8x96xf32>
    %437 = vector.extract_strided_slice %430 {offsets = [0, 96], sizes = [8, 32], strides = [1, 1]} : vector<8x128xf32> to vector<8x32xf32>
    %438 = math.tanh %437 : vector<8x32xf32>
    %439 = vector.extract_strided_slice %436 {offsets = [0, 32], sizes = [8, 32], strides = [1, 1]} : vector<8x96xf32> to vector<8x32xf32>
    %440 = arith.mulf %439, %403 : vector<8x32xf32>
    %441 = vector.extract_strided_slice %436 {offsets = [0, 0], sizes = [8, 32], strides = [1, 1]} : vector<8x96xf32> to vector<8x32xf32>
    %442 = arith.mulf %441, %438 : vector<8x32xf32>
    %443 = arith.addf %440, %442 : vector<8x32xf32>
    %444 = vector.extract_strided_slice %436 {offsets = [0, 64], sizes = [8, 32], strides = [1, 1]} : vector<8x96xf32> to vector<8x32xf32>
    %445 = math.tanh %443 : vector<8x32xf32>
    %446 = arith.mulf %444, %445 : vector<8x32xf32>
    %447 = tpu.concatenate %426, %446 in 1 : vector<8x32xf32>, vector<8x32xf32> -> vector<8x64xf32>
    %cst_54 = arith.constant dense<0.000000e+00> : vector<8x256xf32>
    %448 = tpu.matmul %447, %1, %cst_54 {dimension_numbers = #tpu.dot_dimension_numbers<[1], [0], [0], [1], [0, 0, 1, 1], [], []>} : vector<8x64xf32>, vector<64x256xf32>, vector<8x256xf32> -> vector<8x256xf32>
    %449 = vector.extract_strided_slice %448 {offsets = [0, 0], sizes = [8, 128], strides = [1, 1]} : vector<8x256xf32> to vector<8x128xf32>
    %450 = arith.addf %449, %5 : vector<8x128xf32>
    %451 = vector.extract_strided_slice %450 {offsets = [0, 0], sizes = [8, 96], strides = [1, 1]} : vector<8x128xf32> to vector<8x96xf32>
    %452 = arith.negf %451 : vector<8x96xf32>
    %453 = math.exp %452 : vector<8x96xf32>
    %cst_55 = arith.constant 1.000000e+00 : f32
    %454 = vector.broadcast %cst_55 : f32 to vector<8x96xf32>
    %455 = arith.addf %454, %453 : vector<8x96xf32>
    %456 = arith.divf %454, %455 : vector<8x96xf32>
    %457 = vector.extract_strided_slice %450 {offsets = [0, 96], sizes = [8, 32], strides = [1, 1]} : vector<8x128xf32> to vector<8x32xf32>
    %458 = math.tanh %457 : vector<8x32xf32>
    %459 = vector.extract_strided_slice %456 {offsets = [0, 32], sizes = [8, 32], strides = [1, 1]} : vector<8x96xf32> to vector<8x32xf32>
    %460 = arith.mulf %459, %423 : vector<8x32xf32>
    %461 = vector.extract_strided_slice %456 {offsets = [0, 0], sizes = [8, 32], strides = [1, 1]} : vector<8x96xf32> to vector<8x32xf32>
    %462 = arith.mulf %461, %458 : vector<8x32xf32>
    %463 = arith.addf %460, %462 : vector<8x32xf32>
    %464 = vector.extract_strided_slice %456 {offsets = [0, 64], sizes = [8, 32], strides = [1, 1]} : vector<8x96xf32> to vector<8x32xf32>
    %465 = math.tanh %463 : vector<8x32xf32>
    %466 = arith.mulf %464, %465 : vector<8x32xf32>
    %cst_56 = arith.constant dense<0.000000e+00> : vector<8x128xf32>
    %467 = tpu.matmul %466, %2, %cst_56 {dimension_numbers = #tpu.dot_dimension_numbers<[1], [0], [0], [1], [0, 0, 1, 1], [], []>} : vector<8x32xf32>, vector<32x128xf32>, vector<8x128xf32> -> vector<8x128xf32>
    %468 = vector.extract_strided_slice %448 {offsets = [0, 128], sizes = [8, 128], strides = [1, 1]} : vector<8x256xf32> to vector<8x128xf32>
    %469 = arith.addf %467, %468 : vector<8x128xf32>
    %470 = arith.addf %469, %8 : vector<8x128xf32>
    %471 = vector.extract_strided_slice %470 {offsets = [0, 0], sizes = [8, 96], strides = [1, 1]} : vector<8x128xf32> to vector<8x96xf32>
    %472 = arith.negf %471 : vector<8x96xf32>
    %473 = math.exp %472 : vector<8x96xf32>
    %cst_57 = arith.constant 1.000000e+00 : f32
    %474 = vector.broadcast %cst_57 : f32 to vector<8x96xf32>
    %475 = arith.addf %474, %473 : vector<8x96xf32>
    %476 = arith.divf %474, %475 : vector<8x96xf32>
    %477 = vector.extract_strided_slice %470 {offsets = [0, 96], sizes = [8, 32], strides = [1, 1]} : vector<8x128xf32> to vector<8x32xf32>
    %478 = math.tanh %477 : vector<8x32xf32>
    %479 = vector.extract_strided_slice %476 {offsets = [0, 32], sizes = [8, 32], strides = [1, 1]} : vector<8x96xf32> to vector<8x32xf32>
    %480 = arith.mulf %479, %443 : vector<8x32xf32>
    %481 = vector.extract_strided_slice %476 {offsets = [0, 0], sizes = [8, 32], strides = [1, 1]} : vector<8x96xf32> to vector<8x32xf32>
    %482 = arith.mulf %481, %478 : vector<8x32xf32>
    %483 = arith.addf %480, %482 : vector<8x32xf32>
    %484 = vector.extract_strided_slice %476 {offsets = [0, 64], sizes = [8, 32], strides = [1, 1]} : vector<8x96xf32> to vector<8x32xf32>
    %485 = math.tanh %483 : vector<8x32xf32>
    %486 = arith.mulf %484, %485 : vector<8x32xf32>
    %487 = tpu.concatenate %466, %486 in 1 : vector<8x32xf32>, vector<8x32xf32> -> vector<8x64xf32>
    %cst_58 = arith.constant dense<0.000000e+00> : vector<8x256xf32>
    %488 = tpu.matmul %487, %1, %cst_58 {dimension_numbers = #tpu.dot_dimension_numbers<[1], [0], [0], [1], [0, 0, 1, 1], [], []>} : vector<8x64xf32>, vector<64x256xf32>, vector<8x256xf32> -> vector<8x256xf32>
    %489 = vector.extract_strided_slice %488 {offsets = [0, 0], sizes = [8, 128], strides = [1, 1]} : vector<8x256xf32> to vector<8x128xf32>
    %490 = arith.addf %489, %5 : vector<8x128xf32>
    %491 = vector.extract_strided_slice %490 {offsets = [0, 0], sizes = [8, 96], strides = [1, 1]} : vector<8x128xf32> to vector<8x96xf32>
    %492 = arith.negf %491 : vector<8x96xf32>
    %493 = math.exp %492 : vector<8x96xf32>
    %cst_59 = arith.constant 1.000000e+00 : f32
    %494 = vector.broadcast %cst_59 : f32 to vector<8x96xf32>
    %495 = arith.addf %494, %493 : vector<8x96xf32>
    %496 = arith.divf %494, %495 : vector<8x96xf32>
    %497 = vector.extract_strided_slice %490 {offsets = [0, 96], sizes = [8, 32], strides = [1, 1]} : vector<8x128xf32> to vector<8x32xf32>
    %498 = math.tanh %497 : vector<8x32xf32>
    %499 = vector.extract_strided_slice %496 {offsets = [0, 32], sizes = [8, 32], strides = [1, 1]} : vector<8x96xf32> to vector<8x32xf32>
    %500 = arith.mulf %499, %463 : vector<8x32xf32>
    %501 = vector.extract_strided_slice %496 {offsets = [0, 0], sizes = [8, 32], strides = [1, 1]} : vector<8x96xf32> to vector<8x32xf32>
    %502 = arith.mulf %501, %498 : vector<8x32xf32>
    %503 = arith.addf %500, %502 : vector<8x32xf32>
    %504 = vector.extract_strided_slice %496 {offsets = [0, 64], sizes = [8, 32], strides = [1, 1]} : vector<8x96xf32> to vector<8x32xf32>
    %505 = math.tanh %503 : vector<8x32xf32>
    %506 = arith.mulf %504, %505 : vector<8x32xf32>
    %cst_60 = arith.constant dense<0.000000e+00> : vector<8x128xf32>
    %507 = tpu.matmul %506, %2, %cst_60 {dimension_numbers = #tpu.dot_dimension_numbers<[1], [0], [0], [1], [0, 0, 1, 1], [], []>} : vector<8x32xf32>, vector<32x128xf32>, vector<8x128xf32> -> vector<8x128xf32>
    %508 = vector.extract_strided_slice %488 {offsets = [0, 128], sizes = [8, 128], strides = [1, 1]} : vector<8x256xf32> to vector<8x128xf32>
    %509 = arith.addf %507, %508 : vector<8x128xf32>
    %510 = arith.addf %509, %8 : vector<8x128xf32>
    %511 = vector.extract_strided_slice %510 {offsets = [0, 0], sizes = [8, 96], strides = [1, 1]} : vector<8x128xf32> to vector<8x96xf32>
    %512 = arith.negf %511 : vector<8x96xf32>
    %513 = math.exp %512 : vector<8x96xf32>
    %cst_61 = arith.constant 1.000000e+00 : f32
    %514 = vector.broadcast %cst_61 : f32 to vector<8x96xf32>
    %515 = arith.addf %514, %513 : vector<8x96xf32>
    %516 = arith.divf %514, %515 : vector<8x96xf32>
    %517 = vector.extract_strided_slice %510 {offsets = [0, 96], sizes = [8, 32], strides = [1, 1]} : vector<8x128xf32> to vector<8x32xf32>
    %518 = math.tanh %517 : vector<8x32xf32>
    %519 = vector.extract_strided_slice %516 {offsets = [0, 32], sizes = [8, 32], strides = [1, 1]} : vector<8x96xf32> to vector<8x32xf32>
    %520 = arith.mulf %519, %483 : vector<8x32xf32>
    %521 = vector.extract_strided_slice %516 {offsets = [0, 0], sizes = [8, 32], strides = [1, 1]} : vector<8x96xf32> to vector<8x32xf32>
    %522 = arith.mulf %521, %518 : vector<8x32xf32>
    %523 = arith.addf %520, %522 : vector<8x32xf32>
    %524 = vector.extract_strided_slice %516 {offsets = [0, 64], sizes = [8, 32], strides = [1, 1]} : vector<8x96xf32> to vector<8x32xf32>
    %525 = math.tanh %523 : vector<8x32xf32>
    %526 = arith.mulf %524, %525 : vector<8x32xf32>
    %527 = tpu.concatenate %506, %526 in 1 : vector<8x32xf32>, vector<8x32xf32> -> vector<8x64xf32>
    %cst_62 = arith.constant dense<0.000000e+00> : vector<8x256xf32>
    %528 = tpu.matmul %527, %1, %cst_62 {dimension_numbers = #tpu.dot_dimension_numbers<[1], [0], [0], [1], [0, 0, 1, 1], [], []>} : vector<8x64xf32>, vector<64x256xf32>, vector<8x256xf32> -> vector<8x256xf32>
    %529 = vector.extract_strided_slice %528 {offsets = [0, 0], sizes = [8, 128], strides = [1, 1]} : vector<8x256xf32> to vector<8x128xf32>
    %530 = arith.addf %529, %5 : vector<8x128xf32>
    %531 = vector.extract_strided_slice %530 {offsets = [0, 0], sizes = [8, 96], strides = [1, 1]} : vector<8x128xf32> to vector<8x96xf32>
    %532 = arith.negf %531 : vector<8x96xf32>
    %533 = math.exp %532 : vector<8x96xf32>
    %cst_63 = arith.constant 1.000000e+00 : f32
    %534 = vector.broadcast %cst_63 : f32 to vector<8x96xf32>
    %535 = arith.addf %534, %533 : vector<8x96xf32>
    %536 = arith.divf %534, %535 : vector<8x96xf32>
    %537 = vector.extract_strided_slice %530 {offsets = [0, 96], sizes = [8, 32], strides = [1, 1]} : vector<8x128xf32> to vector<8x32xf32>
    %538 = math.tanh %537 : vector<8x32xf32>
    %539 = vector.extract_strided_slice %536 {offsets = [0, 32], sizes = [8, 32], strides = [1, 1]} : vector<8x96xf32> to vector<8x32xf32>
    %540 = arith.mulf %539, %503 : vector<8x32xf32>
    %541 = vector.extract_strided_slice %536 {offsets = [0, 0], sizes = [8, 32], strides = [1, 1]} : vector<8x96xf32> to vector<8x32xf32>
    %542 = arith.mulf %541, %538 : vector<8x32xf32>
    %543 = arith.addf %540, %542 : vector<8x32xf32>
    %544 = vector.extract_strided_slice %536 {offsets = [0, 64], sizes = [8, 32], strides = [1, 1]} : vector<8x96xf32> to vector<8x32xf32>
    %545 = math.tanh %543 : vector<8x32xf32>
    %546 = arith.mulf %544, %545 : vector<8x32xf32>
    %cst_64 = arith.constant dense<0.000000e+00> : vector<8x128xf32>
    %547 = tpu.matmul %546, %2, %cst_64 {dimension_numbers = #tpu.dot_dimension_numbers<[1], [0], [0], [1], [0, 0, 1, 1], [], []>} : vector<8x32xf32>, vector<32x128xf32>, vector<8x128xf32> -> vector<8x128xf32>
    %548 = vector.extract_strided_slice %528 {offsets = [0, 128], sizes = [8, 128], strides = [1, 1]} : vector<8x256xf32> to vector<8x128xf32>
    %549 = arith.addf %547, %548 : vector<8x128xf32>
    %550 = arith.addf %549, %8 : vector<8x128xf32>
    %551 = vector.extract_strided_slice %550 {offsets = [0, 0], sizes = [8, 96], strides = [1, 1]} : vector<8x128xf32> to vector<8x96xf32>
    %552 = arith.negf %551 : vector<8x96xf32>
    %553 = math.exp %552 : vector<8x96xf32>
    %cst_65 = arith.constant 1.000000e+00 : f32
    %554 = vector.broadcast %cst_65 : f32 to vector<8x96xf32>
    %555 = arith.addf %554, %553 : vector<8x96xf32>
    %556 = arith.divf %554, %555 : vector<8x96xf32>
    %557 = vector.extract_strided_slice %550 {offsets = [0, 96], sizes = [8, 32], strides = [1, 1]} : vector<8x128xf32> to vector<8x32xf32>
    %558 = math.tanh %557 : vector<8x32xf32>
    %559 = vector.extract_strided_slice %556 {offsets = [0, 32], sizes = [8, 32], strides = [1, 1]} : vector<8x96xf32> to vector<8x32xf32>
    %560 = arith.mulf %559, %523 : vector<8x32xf32>
    %561 = vector.extract_strided_slice %556 {offsets = [0, 0], sizes = [8, 32], strides = [1, 1]} : vector<8x96xf32> to vector<8x32xf32>
    %562 = arith.mulf %561, %558 : vector<8x32xf32>
    %563 = arith.addf %560, %562 : vector<8x32xf32>
    %564 = vector.extract_strided_slice %556 {offsets = [0, 64], sizes = [8, 32], strides = [1, 1]} : vector<8x96xf32> to vector<8x32xf32>
    %565 = math.tanh %563 : vector<8x32xf32>
    %566 = arith.mulf %564, %565 : vector<8x32xf32>
    %567 = tpu.concatenate %546, %566 in 1 : vector<8x32xf32>, vector<8x32xf32> -> vector<8x64xf32>
    %cst_66 = arith.constant dense<0.000000e+00> : vector<8x256xf32>
    %568 = tpu.matmul %567, %1, %cst_66 {dimension_numbers = #tpu.dot_dimension_numbers<[1], [0], [0], [1], [0, 0, 1, 1], [], []>} : vector<8x64xf32>, vector<64x256xf32>, vector<8x256xf32> -> vector<8x256xf32>
    %569 = vector.extract_strided_slice %568 {offsets = [0, 0], sizes = [8, 128], strides = [1, 1]} : vector<8x256xf32> to vector<8x128xf32>
    %570 = arith.addf %569, %5 : vector<8x128xf32>
    %571 = vector.extract_strided_slice %570 {offsets = [0, 0], sizes = [8, 96], strides = [1, 1]} : vector<8x128xf32> to vector<8x96xf32>
    %572 = arith.negf %571 : vector<8x96xf32>
    %573 = math.exp %572 : vector<8x96xf32>
    %cst_67 = arith.constant 1.000000e+00 : f32
    %574 = vector.broadcast %cst_67 : f32 to vector<8x96xf32>
    %575 = arith.addf %574, %573 : vector<8x96xf32>
    %576 = arith.divf %574, %575 : vector<8x96xf32>
    %577 = vector.extract_strided_slice %570 {offsets = [0, 96], sizes = [8, 32], strides = [1, 1]} : vector<8x128xf32> to vector<8x32xf32>
    %578 = math.tanh %577 : vector<8x32xf32>
    %579 = vector.extract_strided_slice %576 {offsets = [0, 32], sizes = [8, 32], strides = [1, 1]} : vector<8x96xf32> to vector<8x32xf32>
    %580 = arith.mulf %579, %543 : vector<8x32xf32>
    %581 = vector.extract_strided_slice %576 {offsets = [0, 0], sizes = [8, 32], strides = [1, 1]} : vector<8x96xf32> to vector<8x32xf32>
    %582 = arith.mulf %581, %578 : vector<8x32xf32>
    %583 = arith.addf %580, %582 : vector<8x32xf32>
    %584 = vector.extract_strided_slice %576 {offsets = [0, 64], sizes = [8, 32], strides = [1, 1]} : vector<8x96xf32> to vector<8x32xf32>
    %585 = math.tanh %583 : vector<8x32xf32>
    %586 = arith.mulf %584, %585 : vector<8x32xf32>
    %cst_68 = arith.constant dense<0.000000e+00> : vector<8x128xf32>
    %587 = tpu.matmul %586, %2, %cst_68 {dimension_numbers = #tpu.dot_dimension_numbers<[1], [0], [0], [1], [0, 0, 1, 1], [], []>} : vector<8x32xf32>, vector<32x128xf32>, vector<8x128xf32> -> vector<8x128xf32>
    %588 = vector.extract_strided_slice %568 {offsets = [0, 128], sizes = [8, 128], strides = [1, 1]} : vector<8x256xf32> to vector<8x128xf32>
    %589 = arith.addf %587, %588 : vector<8x128xf32>
    %590 = arith.addf %589, %8 : vector<8x128xf32>
    %591 = vector.extract_strided_slice %590 {offsets = [0, 0], sizes = [8, 96], strides = [1, 1]} : vector<8x128xf32> to vector<8x96xf32>
    %592 = arith.negf %591 : vector<8x96xf32>
    %593 = math.exp %592 : vector<8x96xf32>
    %cst_69 = arith.constant 1.000000e+00 : f32
    %594 = vector.broadcast %cst_69 : f32 to vector<8x96xf32>
    %595 = arith.addf %594, %593 : vector<8x96xf32>
    %596 = arith.divf %594, %595 : vector<8x96xf32>
    %597 = vector.extract_strided_slice %590 {offsets = [0, 96], sizes = [8, 32], strides = [1, 1]} : vector<8x128xf32> to vector<8x32xf32>
    %598 = math.tanh %597 : vector<8x32xf32>
    %599 = vector.extract_strided_slice %596 {offsets = [0, 32], sizes = [8, 32], strides = [1, 1]} : vector<8x96xf32> to vector<8x32xf32>
    %600 = arith.mulf %599, %563 : vector<8x32xf32>
    %601 = vector.extract_strided_slice %596 {offsets = [0, 0], sizes = [8, 32], strides = [1, 1]} : vector<8x96xf32> to vector<8x32xf32>
    %602 = arith.mulf %601, %598 : vector<8x32xf32>
    %603 = arith.addf %600, %602 : vector<8x32xf32>
    %604 = vector.extract_strided_slice %596 {offsets = [0, 64], sizes = [8, 32], strides = [1, 1]} : vector<8x96xf32> to vector<8x32xf32>
    %605 = math.tanh %603 : vector<8x32xf32>
    %606 = arith.mulf %604, %605 : vector<8x32xf32>
    %607 = tpu.concatenate %586, %606 in 1 : vector<8x32xf32>, vector<8x32xf32> -> vector<8x64xf32>
    %cst_70 = arith.constant dense<0.000000e+00> : vector<8x256xf32>
    %608 = tpu.matmul %607, %1, %cst_70 {dimension_numbers = #tpu.dot_dimension_numbers<[1], [0], [0], [1], [0, 0, 1, 1], [], []>} : vector<8x64xf32>, vector<64x256xf32>, vector<8x256xf32> -> vector<8x256xf32>
    %609 = vector.extract_strided_slice %608 {offsets = [0, 0], sizes = [8, 128], strides = [1, 1]} : vector<8x256xf32> to vector<8x128xf32>
    %610 = arith.addf %609, %5 : vector<8x128xf32>
    %611 = vector.extract_strided_slice %610 {offsets = [0, 0], sizes = [8, 96], strides = [1, 1]} : vector<8x128xf32> to vector<8x96xf32>
    %612 = arith.negf %611 : vector<8x96xf32>
    %613 = math.exp %612 : vector<8x96xf32>
    %cst_71 = arith.constant 1.000000e+00 : f32
    %614 = vector.broadcast %cst_71 : f32 to vector<8x96xf32>
    %615 = arith.addf %614, %613 : vector<8x96xf32>
    %616 = arith.divf %614, %615 : vector<8x96xf32>
    %617 = vector.extract_strided_slice %610 {offsets = [0, 96], sizes = [8, 32], strides = [1, 1]} : vector<8x128xf32> to vector<8x32xf32>
    %618 = math.tanh %617 : vector<8x32xf32>
    %619 = vector.extract_strided_slice %616 {offsets = [0, 32], sizes = [8, 32], strides = [1, 1]} : vector<8x96xf32> to vector<8x32xf32>
    %620 = arith.mulf %619, %583 : vector<8x32xf32>
    %621 = vector.extract_strided_slice %616 {offsets = [0, 0], sizes = [8, 32], strides = [1, 1]} : vector<8x96xf32> to vector<8x32xf32>
    %622 = arith.mulf %621, %618 : vector<8x32xf32>
    %623 = arith.addf %620, %622 : vector<8x32xf32>
    %624 = vector.extract_strided_slice %616 {offsets = [0, 64], sizes = [8, 32], strides = [1, 1]} : vector<8x96xf32> to vector<8x32xf32>
    %625 = math.tanh %623 : vector<8x32xf32>
    %626 = arith.mulf %624, %625 : vector<8x32xf32>
    %cst_72 = arith.constant dense<0.000000e+00> : vector<8x128xf32>
    %627 = tpu.matmul %626, %2, %cst_72 {dimension_numbers = #tpu.dot_dimension_numbers<[1], [0], [0], [1], [0, 0, 1, 1], [], []>} : vector<8x32xf32>, vector<32x128xf32>, vector<8x128xf32> -> vector<8x128xf32>
    %628 = vector.extract_strided_slice %608 {offsets = [0, 128], sizes = [8, 128], strides = [1, 1]} : vector<8x256xf32> to vector<8x128xf32>
    %629 = arith.addf %627, %628 : vector<8x128xf32>
    %630 = arith.addf %629, %8 : vector<8x128xf32>
    %631 = vector.extract_strided_slice %630 {offsets = [0, 0], sizes = [8, 96], strides = [1, 1]} : vector<8x128xf32> to vector<8x96xf32>
    %632 = arith.negf %631 : vector<8x96xf32>
    %633 = math.exp %632 : vector<8x96xf32>
    %cst_73 = arith.constant 1.000000e+00 : f32
    %634 = vector.broadcast %cst_73 : f32 to vector<8x96xf32>
    %635 = arith.addf %634, %633 : vector<8x96xf32>
    %636 = arith.divf %634, %635 : vector<8x96xf32>
    %637 = vector.extract_strided_slice %630 {offsets = [0, 96], sizes = [8, 32], strides = [1, 1]} : vector<8x128xf32> to vector<8x32xf32>
    %638 = math.tanh %637 : vector<8x32xf32>
    %639 = vector.extract_strided_slice %636 {offsets = [0, 32], sizes = [8, 32], strides = [1, 1]} : vector<8x96xf32> to vector<8x32xf32>
    %640 = arith.mulf %639, %603 : vector<8x32xf32>
    %641 = vector.extract_strided_slice %636 {offsets = [0, 0], sizes = [8, 32], strides = [1, 1]} : vector<8x96xf32> to vector<8x32xf32>
    %642 = arith.mulf %641, %638 : vector<8x32xf32>
    %643 = arith.addf %640, %642 : vector<8x32xf32>
    %644 = vector.extract_strided_slice %636 {offsets = [0, 64], sizes = [8, 32], strides = [1, 1]} : vector<8x96xf32> to vector<8x32xf32>
    %645 = math.tanh %643 : vector<8x32xf32>
    %646 = arith.mulf %644, %645 : vector<8x32xf32>
    %647 = tpu.concatenate %46, %86, %126, %166, %206, %246, %286, %326, %366, %406, %446, %486, %526, %566, %606, %646 in 1 : vector<8x32xf32>, vector<8x32xf32>, vector<8x32xf32>, vector<8x32xf32>, vector<8x32xf32>, vector<8x32xf32>, vector<8x32xf32>, vector<8x32xf32>, vector<8x32xf32>, vector<8x32xf32>, vector<8x32xf32>, vector<8x32xf32>, vector<8x32xf32>, vector<8x32xf32>, vector<8x32xf32>, vector<8x32xf32> -> vector<8x512xf32>
    %648 = arith.truncf %647 : vector<8x512xf32> to vector<8x512xbf16>
    %c0_74 = arith.constant 0 : index
    %c0_75 = arith.constant 0 : index
    %649 = vector.load %arg5[%c0_74, %c0_75] : memref<512x256xbf16, #tpu.memory_space<vmem>>, vector<512x256xbf16>
    %cst_76 = arith.constant dense<0.000000e+00> : vector<8x256xf32>
    %650 = tpu.matmul %648, %649, %cst_76 {dimension_numbers = #tpu.dot_dimension_numbers<[1], [0], [0], [1], [0, 0, 1, 1], [], []>} : vector<8x512xbf16>, vector<512x256xbf16>, vector<8x256xf32> -> vector<8x256xf32>
    %651 = math.exp %650 : vector<8x256xf32>
    %c0_77 = arith.constant 0 : index
    %c0_78 = arith.constant 0 : index
    %652 = vector.load %arg6[%c0_77, %c0_78] : memref<256x256xf32, #tpu.memory_space<vmem>>, vector<256x256xf32>
    %cst_79 = arith.constant dense<0.000000e+00> : vector<8x256xf32>
    %653 = tpu.matmul %651, %652, %cst_79 {dimension_numbers = #tpu.dot_dimension_numbers<[1], [0], [0], [1], [0, 0, 1, 1], [], []>} : vector<8x256xf32>, vector<256x256xf32>, vector<8x256xf32> -> vector<8x256xf32>
    %654 = tpu.reciprocal %653 {approx = true} : vector<8x256xf32> -> vector<8x256xf32>
    %655 = arith.mulf %651, %654 : vector<8x256xf32>
    %c0_80 = arith.constant 0 : index
    %c0_81 = arith.constant 0 : index
    %656 = vector.load %arg8[%c0_80, %c0_81] : memref<8x256xf32, #tpu.memory_space<vmem>>, vector<8x256xf32>
    tpu.vector_store %arg8[%c0_80, %c0_81], %655 {strides = array<i32>} : memref<8x256xf32, #tpu.memory_space<vmem>>, vector<8x256xf32>,
    return
  }
  func.func @transform_0(%arg0: i32) -> (i32, i32) {
    %c0_i32 = arith.constant 0 : i32
    %c0_i32_0 = arith.constant 0 : i32
    return %arg0, %c0_i32 : i32, i32
  }
  func.func @transform_1(%arg0: i32) -> (i32, i32) {
    %c0_i32 = arith.constant 0 : i32
    %c0_i32_0 = arith.constant 0 : i32
    %c0_i32_1 = arith.constant 0 : i32
    return %c0_i32, %c0_i32_0 : i32, i32
  }
  func.func @transform_2(%arg0: i32) -> (i32, i32) {
    %c0_i32 = arith.constant 0 : i32
    %c0_i32_0 = arith.constant 0 : i32
    %c0_i32_1 = arith.constant 0 : i32
    return %c0_i32, %c0_i32_0 : i32, i32
  }
  func.func @transform_3(%arg0: i32) -> (i32, i32) {
    %c0_i32 = arith.constant 0 : i32
    %c0_i32_0 = arith.constant 0 : i32
    %c0_i32_1 = arith.constant 0 : i32
    return %c0_i32, %c0_i32_0 : i32, i32
  }
  func.func @transform_4(%arg0: i32) -> (i32, i32) {
    %c0_i32 = arith.constant 0 : i32
    %c0_i32_0 = arith.constant 0 : i32
    %c0_i32_1 = arith.constant 0 : i32
    return %c0_i32, %c0_i32_0 : i32, i32
  }
  func.func @transform_5(%arg0: i32) -> (i32, i32) {
    %c0_i32 = arith.constant 0 : i32
    %c0_i32_0 = arith.constant 0 : i32
    %c0_i32_1 = arith.constant 0 : i32
    return %c0_i32, %c0_i32_0 : i32, i32
  }
  func.func @transform_6(%arg0: i32) -> (i32, i32) {
    %c0_i32 = arith.constant 0 : i32
    %c0_i32_0 = arith.constant 0 : i32
    %c0_i32_1 = arith.constant 0 : i32
    return %c0_i32, %c0_i32_0 : i32, i32
  }
  func.func @transform_7(%arg0: i32) -> (i32, i32) {
    %c0_i32 = arith.constant 0 : i32
    %c0_i32_0 = arith.constant 0 : i32
    return %arg0, %c0_i32 : i32, i32
  }
}

</mosaic_0001>

<llo_original>
// kernel: music_decoder_forward.1
$region0: #{music_decoder_forward.1}
  #allocation0 [shape = 'u32[]', space=smem, size = 0x4, offset = 0x4, fixed_abs, tag = 'smem constant byte address 0x4 - core index']
  #allocation1 [shape = 'u32[144,128]{1,0:T(1,128)}', space=vmem, size = 0x12000, scoped, tag = 'internal scratch']
  %s0 = inlined_call_operand.vmem [shape: f32[8,8], index: 0, kind: input, shape index: {}]
  %s1 = inlined_call_operand.vmem [shape: f32[8,128], index: 1, kind: input, shape index: {}]
  %s2 = inlined_call_operand.vmem [shape: f32[64,256], index: 2, kind: input, shape index: {}]
  %s3 = inlined_call_operand.vmem [shape: f32[32,128], index: 3, kind: input, shape index: {}]
  %s4 = inlined_call_operand.vmem [shape: bf16[512,256], index: 4, kind: input, shape index: {}]
  %s5 = inlined_call_operand.vmem [shape: f32[256,256], index: 5, kind: input, shape index: {}]
  %s6 = inlined_call_operand.vmem [shape: f32[2,128], index: 6, kind: input, shape index: {}]
  %s7 = inlined_call_operand.vmem [shape: f32[8,256], index: 7, kind: output, shape index: {}]
  %s8 = sld [smem:[#allocation0]]
  $region38: #{music_decoder_forward.1} parent=0
    _
  %s10 = ssub.s32 1, %s8
  %s11 = scalar_select 0, %s10, %s8
  // Predicated region
  $region2: #{music_decoder_forward.1} parent=0 // pred_check
    _
  $region3: #{music_decoder_forward.1} parent=0 // pred_check_branch
    %13 = sbr.rel (0) target = $region5
  $region4: #{music_decoder_forward.1} parent=0 // pred_region
    _
  $region5: #{music_decoder_forward.1} parent=0 // pred_fallthru
    _
  // Predicated region
  $region6: #{music_decoder_forward.1} parent=0 // pred_check
    _
  $region7: #{music_decoder_forward.1} parent=0 // pred_check_branch
    %15 = sbr.rel (0) target = $region9
  $region8: #{music_decoder_forward.1} parent=0 // pred_region
    _
  $region9: #{music_decoder_forward.1} parent=0 // pred_fallthru
    _
  // Predicated region
  $region10: #{music_decoder_forward.1} parent=0 // pred_check
    _
  $region11: #{music_decoder_forward.1} parent=0 // pred_check_branch
    %17 = sbr.rel (0) target = $region13
  $region12: #{music_decoder_forward.1} parent=0 // pred_region
    _
  $region13: #{music_decoder_forward.1} parent=0 // pred_fallthru
    _
  // Predicated region
  $region14: #{music_decoder_forward.1} parent=0 // pred_check
    _
  $region15: #{music_decoder_forward.1} parent=0 // pred_check_branch
    %19 = sbr.rel (0) target = $region17
  $region16: #{music_decoder_forward.1} parent=0 // pred_region
    _
  $region17: #{music_decoder_forward.1} parent=0 // pred_fallthru
    _
  // Predicated region
  $region18: #{music_decoder_forward.1} parent=0 // pred_check
    _
  $region19: #{music_decoder_forward.1} parent=0 // pred_check_branch
    %21 = sbr.rel (0) target = $region21
  $region20: #{music_decoder_forward.1} parent=0 // pred_region
    _
  $region21: #{music_decoder_forward.1} parent=0 // pred_fallthru
    _
  // Predicated region
  $region22: #{music_decoder_forward.1} parent=0 // pred_check
    _
  $region23: #{music_decoder_forward.1} parent=0 // pred_check_branch
    %23 = sbr.rel (0) target = $region25
  $region24: #{music_decoder_forward.1} parent=0 // pred_region
    _
  $region25: #{music_decoder_forward.1} parent=0 // pred_fallthru
    _
  // Predicated region
  $region26: #{music_decoder_forward.1} parent=0 // pred_check
    _
  $region27: #{music_decoder_forward.1} parent=0 // pred_check_branch
    %25 = sbr.rel (0) target = $region29
  $region28: #{music_decoder_forward.1} parent=0 // pred_region
    _
  $region29: #{music_decoder_forward.1} parent=0 // pred_fallthru
    _
  %v26 = vld [vmem:[%s1] sm:$0xff]
  %v27 = vld [vmem:[%s2] sm:$0xff]
  %v28 = vld [vmem:[%s2 + $0x8] sm:$0xff]
  %v29 = vld [vmem:[%s2 + $0x10] sm:$0xff]
  %v30 = vld [vmem:[%s2 + $0x18] sm:$0xff]
  %v31 = vld [vmem:[%s2 + $0x20] sm:$0xff]
  %v32 = vld [vmem:[%s2 + $0x28] sm:$0xff]
  %v33 = vld [vmem:[%s2 + $0x30] sm:$0xff]
  %v34 = vld [vmem:[%s2 + $0x38] sm:$0xff]
  %v35 = vld [vmem:[%s2 + $0x40] sm:$0xff]
  %v36 = vld [vmem:[%s2 + $0x48] sm:$0xff]
  %v37 = vld [vmem:[%s2 + $0x50] sm:$0xff]
  %v38 = vld [vmem:[%s2 + $0x58] sm:$0xff]
  %v39 = vld [vmem:[%s2 + $0x60] sm:$0xff]
  %v40 = vld [vmem:[%s2 + $0x68] sm:$0xff]
  %v41 = vld [vmem:[%s2 + $0x70] sm:$0xff]
  %v42 = vld [vmem:[%s2 + $0x78] sm:$0xff]
  %v43 = vld [vmem:[%s3] sm:$0xff]
  %v44 = vld [vmem:[%s3 + $0x8] sm:$0xff]
  %v45 = vld [vmem:[%s3 + $0x10] sm:$0xff]
  %v46 = vld [vmem:[%s3 + $0x18] sm:$0xff]
  %v47 = vld [vmem:[%s6] sm:$0x1]
  %v48 = vlaneseq
  %v49 = vshrl.u32 %v48, 7
  %v50 = vsub.s32 0, %v49
  %v51 = vrot.slane %v47, %v50
  %v52 = vld [vmem:[%s6 + $0x1] sm:$0x1]
  %v53 = vlaneseq
  %v54 = vshrl.u32 %v53, 7
  %v55 = vsub.s32 0, %v54
  %v56 = vrot.slane %v52, %v55
  %v57 = vld [vmem:[%s0] sm:$0xff]
  %vm58 = vcmask 64512
  %v60 = vsel %vm58, %v57, 0
  %62 = vmatprep.subr.mxu0 0.0
  %63 = vmatpush1.msra.mxu0 %v26
  %64 = vmatprep.subr.mxu0 0.0
  %65 = vmatpush1.msra.mxu0 0.0
  %66 = vmatprep.subr.mxu0 0.0
  %67 = vmatpush1.msra.mxu0 0.0
  %68 = vmatprep.subr.mxu0 0.0
  %69 = vmatpush1.msra.mxu0 0.0
  %70 = vmatprep.subr.mxu0 0.0
  %71 = vmatpush1.msra.mxu0 0.0
  %72 = vmatprep.subr.mxu0 0.0
  %73 = vmatpush1.msra.mxu0 0.0
  %74 = vmatprep.subr.mxu0 0.0
  %75 = vmatpush1.msra.mxu0 0.0
  %76 = vmatprep.subr.mxu0 0.0
  %77 = vmatpush1.msra.mxu0 0.0
  %78 = vmatprep.subr.mxu0 0.0
  %79 = vmatpush1.msra.mxu0 0.0
  %80 = vmatprep.subr.mxu0 0.0
  %81 = vmatpush1.msra.mxu0 0.0
  %82 = vmatprep.subr.mxu0 0.0
  %83 = vmatpush1.msra.mxu0 0.0
  %84 = vmatprep.subr.mxu0 0.0
  %85 = vmatpush1.msra.mxu0 0.0
  %86 = vmatprep.subr.mxu0 0.0
  %87 = vmatpush1.msra.mxu0 0.0
  %88 = vmatprep.subr.mxu0 0.0
  %89 = vmatpush1.msra.mxu0 0.0
  %90 = vmatprep.subr.mxu0 0.0
  %91 = vmatpush1.msra.mxu0 0.0
  %92 = vmatprep.subr.mxu0 0.0
  %93 = vmatpush1.msra.mxu0 0.0
  %94 = vmatprep.subr.mxu0 0.0
  %95 = vmatpush1.msra.mxu0 0.0
  %96 = vmatprep.subr.mxu0 0.0
  %97 = vmatpush1.msra.mxu0 0.0
  %98 = vmatprep.subr.mxu0 0.0
  %99 = vmatpush1.msra.mxu0 0.0
  %100 = vmatprep.subr.mxu0 0.0
  %101 = vmatpush1.msra.mxu0 0.0
  %102 = vmatprep.subr.mxu0 0.0
  %103 = vmatpush1.msra.mxu0 0.0
  %104 = vmatprep.subr.mxu0 0.0
  %105 = vmatpush1.msra.mxu0 0.0
  %106 = vmatprep.subr.mxu0 0.0
  %107 = vmatpush1.msra.mxu0 0.0
  %108 = vmatprep.subr.mxu0 0.0
  %109 = vmatpush1.msra.mxu0 0.0
  %110 = vmatprep.subr.mxu0 0.0
  %111 = vmatpush1.msra.mxu0 0.0
  %112 = vmatprep.subr.mxu0 0.0
  %113 = vmatpush1.msra.mxu0 0.0
  %114 = vmatprep.subr.mxu0 0.0
  %115 = vmatpush1.msra.mxu0 0.0
  %116 = vmatprep.subr.mxu0 0.0
  %117 = vmatpush1.msra.mxu0 0.0
  %118 = vmatprep.subr.mxu0 0.0
  %119 = vmatpush1.msra.mxu0 0.0
  %120 = vmatprep.subr.mxu0 0.0
  %121 = vmatpush1.msra.mxu0 0.0
  %122 = vmatprep.subr.mxu0 0.0
  %123 = vmatpush1.msra.mxu0 0.0
  %124 = vmatprep.subr.mxu0 0.0
  %125 = vmatpush1.msra.mxu0 0.0
  %126 = vmatprep.mubr.f32.mxu0 0.0
  %127 = vmatmul.mubr.f32.gmra.mrb[0].mxu0 %v60
  %v128 = vpop.f32.mrb[0].mxu0
  %v129 = vadd.f32 %v51, %v128
  %v130 = vpop.f32.mrb[0].mxu0
  %131 = vdwg.mxu0
  %v132 = vxor.u32 %v129, 2147483648
  %v133 = vmul.f32 %v132, 1.442695
  %v134 = vpow.pop %v133
  %v135 = vadd.f32 %v134, 1.0
  %v136 = vrcp.pop %v135
  %v137 = vmul.f32 1.0, %v136
  %v138 = vtanh.pop %v129
  %v139 = vmul.f32 %v137, 0.0
  %141 = vrot.lane.b32.xlu0 %v138, 32
  %v142 = vpop.permute.xlu0 %141
  %v144 = vmul.f32 %v137, %v142
  %146 = vrot.lane.b32.xlu0 %v144, 32
  %v147 = vpop.permute.xlu0 %146
  %v149 = vadd.f32 %v139, %v147
  %v150 = vtanh.pop %v149
  %152 = vrot.lane.b32.xlu0 %v150, 32
  %v153 = vpop.permute.xlu0 %152
  %v155 = vmul.f32 %v137, %v153
  %157 = vrot.lane.b32.xlu0 %v155, 64
  %v158 = vpop.permute.xlu0 %157
  %vm159 = vcmask 261120
  %v160 = vsel %vm159, %v158, 0
  %162 = vmatprep.subr.mxu0 0.0
  %163 = vmatpush1.msra.mxu0 %v43
  %164 = vmatprep.subr.mxu0 0.0
  %165 = vmatpush1.msra.mxu0 %v44
  %166 = vmatprep.subr.mxu0 0.0
  %167 = vmatpush1.msra.mxu0 %v45
  %168 = vmatprep.subr.mxu0 0.0
  %169 = vmatpush1.msra.mxu0 %v46
  %170 = vmatprep.subr.mxu0 0.0
  %171 = vmatpush1.msra.mxu0 0.0
  %172 = vmatprep.subr.mxu0 0.0
  %173 = vmatpush1.msra.mxu0 0.0
  %174 = vmatprep.subr.mxu0 0.0
  %175 = vmatpush1.msra.mxu0 0.0
  %176 = vmatprep.subr.mxu0 0.0
  %177 = vmatpush1.msra.mxu0 0.0
  %178 = vmatprep.subr.mxu0 0.0
  %179 = vmatpush1.msra.mxu0 0.0
  %180 = vmatprep.subr.mxu0 0.0
  %181 = vmatpush1.msra.mxu0 0.0
  %182 = vmatprep.subr.mxu0 0.0
  %183 = vmatpush1.msra.mxu0 0.0
  %184 = vmatprep.subr.mxu0 0.0
  %185 = vmatpush1.msra.mxu0 0.0
  %186 = vmatprep.subr.mxu0 0.0
  %187 = vmatpush1.msra.mxu0 0.0
  %188 = vmatprep.subr.mxu0 0.0
  %189 = vmatpush1.msra.mxu0 0.0
  %190 = vmatprep.subr.mxu0 0.0
  %191 = vmatpush1.msra.mxu0 0.0
  %192 = vmatprep.subr.mxu0 0.0
  %193 = vmatpush1.msra.mxu0 0.0
  %194 = vmatprep.subr.mxu0 0.0
  %195 = vmatpush1.msra.mxu0 0.0
  %196 = vmatprep.subr.mxu0 0.0
  %197 = vmatpush1.msra.mxu0 0.0
  %198 = vmatprep.subr.mxu0 0.0
  %199 = vmatpush1.msra.mxu0 0.0
  %200 = vmatprep.subr.mxu0 0.0
  %201 = vmatpush1.msra.mxu0 0.0
  %202 = vmatprep.subr.mxu0 0.0
  %203 = vmatpush1.msra.mxu0 0.0
  %204 = vmatprep.subr.mxu0 0.0
  %205 = vmatpush1.msra.mxu0 0.0
  %206 = vmatprep.subr.mxu0 0.0
  %207 = vmatpush1.msra.mxu0 0.0
  %208 = vmatprep.subr.mxu0 0.0
  %209 = vmatpush1.msra.mxu0 0.0
  %210 = vmatprep.subr.mxu0 0.0
  %211 = vmatpush1.msra.mxu0 0.0
  %212 = vmatprep.subr.mxu0 0.0
  %213 = vmatpush1.msra.mxu0 0.0
  %214 = vmatprep.subr.mxu0 0.0
  %215 = vmatpush1.msra.mxu0 0.0
  %216 = vmatprep.subr.mxu0 0.0
  %217 = vmatpush1.msra.mxu0 0.0
  %218 = vmatprep.subr.mxu0 0.0
  %219 = vmatpush1.msra.mxu0 0.0
  %220 = vmatprep.subr.mxu0 0.0
  %221 = vmatpush1.msra.mxu0 0.0
  %222 = vmatprep.subr.mxu0 0.0
  %223 = vmatpush1.msra.mxu0 0.0
  %224 = vmatprep.subr.mxu0 0.0
  %225 = vmatpush1.msra.mxu0 0.0
  %226 = vmatprep.mubr.f32.mxu0 0.0
  %227 = vmatmul.mubr.f32.gmra.mrb[0].mxu0 %v160
  %v228 = vpop.f32.mrb[0].mxu0
  %v229 = vadd.f32 %v56, %v228
  %v230 = vpop.f32.mrb[0].mxu0
  %231 = vdwg.mxu0
  %v232 = vxor.u32 %v229, 2147483648
  %v233 = vmul.f32 %v232, 1.442695
  %v234 = vpow.pop %v233
  %v235 = vadd.f32 %v234, 1.0
  %v236 = vrcp.pop %v235
  %v237 = vmul.f32 1.0, %v236
  %v238 = vtanh.pop %v229
  %v239 = vmul.f32 %v237, 0.0
  %241 = vrot.lane.b32.xlu0 %v238, 32
  %v242 = vpop.permute.xlu0 %241
  %v244 = vmul.f32 %v237, %v242
  %246 = vrot.lane.b32.xlu0 %v244, 32
  %v247 = vpop.permute.xlu0 %246
  %v249 = vadd.f32 %v239, %v247
  %v250 = vtanh.pop %v249
  %252 = vrot.lane.b32.xlu0 %v250, 32
  %v253 = vpop.permute.xlu0 %252
  %v255 = vmul.f32 %v237, %v253
  %258 = vrot.lane.b32.xlu0 %v255, 96
  %v259 = vpop.permute.xlu0 %258
  %v261 = vsel %vm159, %v158, %v259
  %vm262 = vcmask 523264
  %v264 = vsel %vm262, %v261, 0
  %266 = vmatprep.subr.mxu0 %v28
  %267 = vmatpush1.msra.mxu0 %v27
  %268 = vmatprep.subr.mxu0 %v30
  %269 = vmatpush1.msra.mxu0 %v29
  %270 = vmatprep.subr.mxu0 %v32
  %271 = vmatpush1.msra.mxu0 %v31
  %272 = vmatprep.subr.mxu0 %v34
  %273 = vmatpush1.msra.mxu0 %v33
  %274 = vmatprep.subr.mxu0 %v36
  %275 = vmatpush1.msra.mxu0 %v35
  %276 = vmatprep.subr.mxu0 %v38
  %277 = vmatpush1.msra.mxu0 %v37
  %278 = vmatprep.subr.mxu0 %v40
  %279 = vmatpush1.msra.mxu0 %v39
  %280 = vmatprep.subr.mxu0 %v42
  %281 = vmatpush1.msra.mxu0 %v41
  %282 = vmatprep.subr.mxu0 0.0
  %283 = vmatpush1.msra.mxu0 0.0
  %284 = vmatprep.subr.mxu0 0.0
  %285 = vmatpush1.msra.mxu0 0.0
  %286 = vmatprep.subr.mxu0 0.0
  %287 = vmatpush1.msra.mxu0 0.0
  %288 = vmatprep.subr.mxu0 0.0
  %289 = vmatpush1.msra.mxu0 0.0
  %290 = vmatprep.subr.mxu0 0.0
  %291 = vmatpush1.msra.mxu0 0.0
  %292 = vmatprep.subr.mxu0 0.0
  %293 = vmatpush1.msra.mxu0 0.0
  %294 = vmatprep.subr.mxu0 0.0
  %295 = vmatpush1.msra.mxu0 0.0
  %296 = vmatprep.subr.mxu0 0.0
  %297 = vmatpush1.msra.mxu0 0.0
  %298 = vmatprep.subr.mxu0 0.0
  %299 = vmatpush1.msra.mxu0 0.0
  %300 = vmatprep.subr.mxu0 0.0
  %301 = vmatpush1.msra.mxu0 0.0
  %302 = vmatprep.subr.mxu0 0.0
  %303 = vmatpush1.msra.mxu0 0.0
  %304 = vmatprep.subr.mxu0 0.0
  %305 = vmatpush1.msra.mxu0 0.0
  %306 = vmatprep.subr.mxu0 0.0
  %307 = vmatpush1.msra.mxu0 0.0
  %308 = vmatprep.subr.mxu0 0.0
  %309 = vmatpush1.msra.mxu0 0.0
  %310 = vmatprep.subr.mxu0 0.0
  %311 = vmatpush1.msra.mxu0 0.0
  %312 = vmatprep.subr.mxu0 0.0
  %313 = vmatpush1.msra.mxu0 0.0
  %314 = vmatprep.subr.mxu0 0.0
  %315 = vmatpush1.msra.mxu0 0.0
  %316 = vmatprep.subr.mxu0 0.0
  %317 = vmatpush1.msra.mxu0 0.0
  %318 = vmatprep.subr.mxu0 0.0
  %319 = vmatpush1.msra.mxu0 0.0
  %320 = vmatprep.subr.mxu0 0.0
  %321 = vmatpush1.msra.mxu0 0.0
  %322 = vmatprep.subr.mxu0 0.0
  %323 = vmatpush1.msra.mxu0 0.0
  %324 = vmatprep.subr.mxu0 0.0
  %325 = vmatpush1.msra.mxu0 0.0
  %326 = vmatprep.subr.mxu0 0.0
  %327 = vmatpush1.msra.mxu0 0.0
  %328 = vmatprep.subr.mxu0 0.0
  %329 = vmatpush1.msra.mxu0 0.0
  %330 = vmatprep.mubr.f32.mxu0 0.0
  %331 = vmatmul.mubr.f32.gmra.mrb[0].mxu0 %v264
  %v332 = vpop.f32.mrb[0].mxu0
  %v333 = vadd.f32 0.0, %v332
  %v334 = vpop.f32.mrb[0].mxu0
  %v335 = vadd.f32 0.0, %v334
  %336 = vdwg.mxu0
  %v337 = vadd.f32 %v333, %v51
  %v338 = vxor.u32 %v337, 2147483648
  %v339 = vmul.f32 %v338, 1.442695
  %v340 = vpow.pop %v339
  %v341 = vadd.f32 %v340, 1.0
  %v342 = vrcp.pop %v341
  %v343 = vmul.f32 1.0, %v342
  %v344 = vtanh.pop %v337
  %v345 = vmul.f32 %v343, %v149
  %347 = vrot.lane.b32.xlu0 %v344, 32
  %v348 = vpop.permute.xlu0 %347
  %v350 = vmul.f32 %v343, %v348
  %352 = vrot.lane.b32.xlu0 %v350, 32
  %v353 = vpop.permute.xlu0 %352
  %v355 = vadd.f32 %v345, %v353
  %v356 = vtanh.pop %v355
  %358 = vrot.lane.b32.xlu0 %v356, 32
  %v359 = vpop.permute.xlu0 %358
  %v361 = vmul.f32 %v343, %v359
  %363 = vrot.lane.b32.xlu0 %v361, 64
  %v364 = vpop.permute.xlu0 %363
  %v365 = vsel %vm159, %v364, 0
  %367 = vmatprep.subr.mxu0 0.0
  %368 = vmatpush1.msra.mxu0 %v43
  %369 = vmatprep.subr.mxu0 0.0
  %370 = vmatpush1.msra.mxu0 %v44
  %371 = vmatprep.subr.mxu0 0.0
  %372 = vmatpush1.msra.mxu0 %v45
  %373 = vmatprep.subr.mxu0 0.0
  %374 = vmatpush1.msra.mxu0 %v46
  %375 = vmatprep.subr.mxu0 0.0
  %376 = vmatpush1.msra.mxu0 0.0
  %377 = vmatprep.subr.mxu0 0.0
  %378 = vmatpush1.msra.mxu0 0.0
  %379 = vmatprep.subr.mxu0 0.0
  %380 = vmatpush1.msra.mxu0 0.0
  %381 = vmatprep.subr.mxu0 0.0
  %382 = vmatpush1.msra.mxu0 0.0
  %383 = vmatprep.subr.mxu0 0.0
  %384 = vmatpush1.msra.mxu0 0.0
  %385 = vmatprep.subr.mxu0 0.0
  %386 = vmatpush1.msra.mxu0 0.0
  %387 = vmatprep.subr.mxu0 0.0
  %388 = vmatpush1.msra.mxu0 0.0
  %389 = vmatprep.subr.mxu0 0.0
  %390 = vmatpush1.msra.mxu0 0.0
  %391 = vmatprep.subr.mxu0 0.0
  %392 = vmatpush1.msra.mxu0 0.0
  %393 = vmatprep.subr.mxu0 0.0
  %394 = vmatpush1.msra.mxu0 0.0
  %395 = vmatprep.subr.mxu0 0.0
  %396 = vmatpush1.msra.mxu0 0.0
  %397 = vmatprep.subr.mxu0 0.0
  %398 = vmatpush1.msra.mxu0 0.0
  %399 = vmatprep.subr.mxu0 0.0
  %400 = vmatpush1.msra.mxu0 0.0
  %401 = vmatprep.subr.mxu0 0.0
  %402 = vmatpush1.msra.mxu0 0.0
  %403 = vmatprep.subr.mxu0 0.0
  %404 = vmatpush1.msra.mxu0 0.0
  %405 = vmatprep.subr.mxu0 0.0
  %406 = vmatpush1.msra.mxu0 0.0
  %407 = vmatprep.subr.mxu0 0.0
  %408 = vmatpush1.msra.mxu0 0.0
  %409 = vmatprep.subr.mxu0 0.0
  %410 = vmatpush1.msra.mxu0 0.0
  %411 = vmatprep.subr.mxu0 0.0
  %412 = vmatpush1.msra.mxu0 0.0
  %413 = vmatprep.subr.mxu0 0.0
  %414 = vmatpush1.msra.mxu0 0.0
  %415 = vmatprep.subr.mxu0 0.0
  %416 = vmatpush1.msra.mxu0 0.0
  %417 = vmatprep.subr.mxu0 0.0
  %418 = vmatpush1.msra.mxu0 0.0
  %419 = vmatprep.subr.mxu0 0.0
  %420 = vmatpush1.msra.mxu0 0.0
  %421 = vmatprep.subr.mxu0 0.0
  %422 = vmatpush1.msra.mxu0 0.0
  %423 = vmatprep.subr.mxu0 0.0
  %424 = vmatpush1.msra.mxu0 0.0
  %425 = vmatprep.subr.mxu0 0.0
  %426 = vmatpush1.msra.mxu0 0.0
  %427 = vmatprep.subr.mxu0 0.0
  %428 = vmatpush1.msra.mxu0 0.0
  %429 = vmatprep.subr.mxu0 0.0
  %430 = vmatpush1.msra.mxu0 0.0
  %431 = vmatprep.mubr.f32.mxu0 0.0
  %432 = vmatmul.mubr.f32.gmra.mrb[0].mxu0 %v365
  %v433 = vpop.f32.mrb[0].mxu0
  %v434 = vadd.f32 %v335, %v433
  %v435 = vpop.f32.mrb[0].mxu0
  %436 = vdwg.mxu0
  %v437 = vadd.f32 %v434, %v56
  %v438 = vxor.u32 %v437, 2147483648
  %v439 = vmul.f32 %v438, 1.442695
  %v440 = vpow.pop %v439
  %v441 = vadd.f32 %v440, 1.0
  %v442 = vrcp.pop %v441
  %v443 = vmul.f32 1.0, %v442
  %v444 = vtanh.pop %v437
  %v445 = vmul.f32 %v443, %v249
  %447 = vrot.lane.b32.xlu0 %v444, 32
  %v448 = vpop.permute.xlu0 %447
  %v450 = vmul.f32 %v443, %v448
  %452 = vrot.lane.b32.xlu0 %v450, 32
  %v453 = vpop.permute.xlu0 %452
  %v455 = vadd.f32 %v445, %v453
  %v456 = vtanh.pop %v455
  %458 = vrot.lane.b32.xlu0 %v456, 32
  %v459 = vpop.permute.xlu0 %458
  %v461 = vmul.f32 %v443, %v459
  %464 = vrot.lane.b32.xlu0 %v461, 96
  %v465 = vpop.permute.xlu0 %464
  %v467 = vsel %vm159, %v364, %v465
  %v469 = vsel %vm262, %v467, 0
  %471 = vmatprep.subr.mxu0 %v28
  %472 = vmatpush1.msra.mxu0 %v27
  %473 = vmatprep.subr.mxu0 %v30
  %474 = vmatpush1.msra.mxu0 %v29
  %475 = vmatprep.subr.mxu0 %v32
  %476 = vmatpush1.msra.mxu0 %v31
  %477 = vmatprep.subr.mxu0 %v34
  %478 = vmatpush1.msra.mxu0 %v33
  %479 = vmatprep.subr.mxu0 %v36
  %480 = vmatpush1.msra.mxu0 %v35
  %481 = vmatprep.subr.mxu0 %v38
  %482 = vmatpush1.msra.mxu0 %v37
  %483 = vmatprep.subr.mxu0 %v40
  %484 = vmatpush1.msra.mxu0 %v39
  %485 = vmatprep.subr.mxu0 %v42
  %486 = vmatpush1.msra.mxu0 %v41
  %487 = vmatprep.subr.mxu0 0.0
  %488 = vmatpush1.msra.mxu0 0.0
  %489 = vmatprep.subr.mxu0 0.0
  %490 = vmatpush1.msra.mxu0 0.0
  %491 = vmatprep.subr.mxu0 0.0
  %492 = vmatpush1.msra.mxu0 0.0
  %493 = vmatprep.subr.mxu0 0.0
  %494 = vmatpush1.msra.mxu0 0.0
  %495 = vmatprep.subr.mxu0 0.0
  %496 = vmatpush1.msra.mxu0 0.0
  %497 = vmatprep.subr.mxu0 0.0
  %498 = vmatpush1.msra.mxu0 0.0
  %499 = vmatprep.subr.mxu0 0.0
  %500 = vmatpush1.msra.mxu0 0.0
  %501 = vmatprep.subr.mxu0 0.0
  %502 = vmatpush1.msra.mxu0 0.0
  %503 = vmatprep.subr.mxu0 0.0
  %504 = vmatpush1.msra.mxu0 0.0
  %505 = vmatprep.subr.mxu0 0.0
  %506 = vmatpush1.msra.mxu0 0.0
  %507 = vmatprep.subr.mxu0 0.0
  %508 = vmatpush1.msra.mxu0 0.0
  %509 = vmatprep.subr.mxu0 0.0
  %510 = vmatpush1.msra.mxu0 0.0
  %511 = vmatprep.subr.mxu0 0.0
  %512 = vmatpush1.msra.mxu0 0.0
  %513 = vmatprep.subr.mxu0 0.0
  %514 = vmatpush1.msra.mxu0 0.0
  %515 = vmatprep.subr.mxu0 0.0
  %516 = vmatpush1.msra.mxu0 0.0
  %517 = vmatprep.subr.mxu0 0.0
  %518 = vmatpush1.msra.mxu0 0.0
  %519 = vmatprep.subr.mxu0 0.0
  %520 = vmatpush1.msra.mxu0 0.0
  %521 = vmatprep.subr.mxu0 0.0
  %522 = vmatpush1.msra.mxu0 0.0
  %523 = vmatprep.subr.mxu0 0.0
  %524 = vmatpush1.msra.mxu0 0.0
  %525 = vmatprep.subr.mxu0 0.0
  %526 = vmatpush1.msra.mxu0 0.0
  %527 = vmatprep.subr.mxu0 0.0
  %528 = vmatpush1.msra.mxu0 0.0
  %529 = vmatprep.subr.mxu0 0.0
  %530 = vmatpush1.msra.mxu0 0.0
  %531 = vmatprep.subr.mxu0 0.0
  %532 = vmatpush1.msra.mxu0 0.0
  %533 = vmatprep.subr.mxu0 0.0
  %534 = vmatpush1.msra.mxu0 0.0
  %535 = vmatprep.mubr.f32.mxu0 0.0
  %536 = vmatmul.mubr.f32.gmra.mrb[0].mxu0 %v469
  %v537 = vpop.f32.mrb[0].mxu0
  %v538 = vadd.f32 0.0, %v537
  %v539 = vpop.f32.mrb[0].mxu0
  %v540 = vadd.f32 0.0, %v539
  %541 = vdwg.mxu0
  %v542 = vadd.f32 %v538, %v51
  %v543 = vxor.u32 %v542, 2147483648
  %v544 = vmul.f32 %v543, 1.442695
  %v545 = vpow.pop %v544
  %v546 = vadd.f32 %v545, 1.0
  %v547 = vrcp.pop %v546
  %v548 = vmul.f32 1.0, %v547
  %v549 = vtanh.pop %v542
  %v550 = vmul.f32 %v548, %v355
  %552 = vrot.lane.b32.xlu0 %v549, 32
  %v553 = vpop.permute.xlu0 %552
  %v555 = vmul.f32 %v548, %v553
  %557 = vrot.lane.b32.xlu0 %v555, 32
  %v558 = vpop.permute.xlu0 %557
  %v560 = vadd.f32 %v550, %v558
  %v561 = vtanh.pop %v560
  %563 = vrot.lane.b32.xlu0 %v561, 32
  %v564 = vpop.permute.xlu0 %563
  %v566 = vmul.f32 %v548, %v564
  %568 = vrot.lane.b32.xlu0 %v566, 64
  %v569 = vpop.permute.xlu0 %568
  %v570 = vsel %vm159, %v569, 0
  %572 = vmatprep.subr.mxu0 0.0
  %573 = vmatpush1.msra.mxu0 %v43
  %574 = vmatprep.subr.mxu0 0.0
  %575 = vmatpush1.msra.mxu0 %v44
  %576 = vmatprep.subr.mxu0 0.0
  %577 = vmatpush1.msra.mxu0 %v45
  %578 = vmatprep.subr.mxu0 0.0
  %579 = vmatpush1.msra.mxu0 %v46
  %580 = vmatprep.subr.mxu0 0.0
  %581 = vmatpush1.msra.mxu0 0.0
  %582 = vmatprep.subr.mxu0 0.0
  %583 = vmatpush1.msra.mxu0 0.0
  %584 = vmatprep.subr.mxu0 0.0
  %585 = vmatpush1.msra.mxu0 0.0
  %586 = vmatprep.subr.mxu0 0.0
  %587 = vmatpush1.msra.mxu0 0.0
  %588 = vmatprep.subr.mxu0 0.0
  %589 = vmatpush1.msra.mxu0 0.0
  %590 = vmatprep.subr.mxu0 0.0
  %591 = vmatpush1.msra.mxu0 0.0
  %592 = vmatprep.subr.mxu0 0.0
  %593 = vmatpush1.msra.mxu0 0.0
  %594 = vmatprep.subr.mxu0 0.0
  %595 = vmatpush1.msra.mxu0 0.0
  %596 = vmatprep.subr.mxu0 0.0
  %597 = vmatpush1.msra.mxu0 0.0
  %598 = vmatprep.subr.mxu0 0.0
  %599 = vmatpush1.msra.mxu0 0.0
  %600 = vmatprep.subr.mxu0 0.0
  %601 = vmatpush1.msra.mxu0 0.0
  %602 = vmatprep.subr.mxu0 0.0
  %603 = vmatpush1.msra.mxu0 0.0
  %604 = vmatprep.subr.mxu0 0.0
  %605 = vmatpush1.msra.mxu0 0.0
  %606 = vmatprep.subr.mxu0 0.0
  %607 = vmatpush1.msra.mxu0 0.0
  %608 = vmatprep.subr.mxu0 0.0
  %609 = vmatpush1.msra.mxu0 0.0
  %610 = vmatprep.subr.mxu0 0.0
  %611 = vmatpush1.msra.mxu0 0.0
  %612 = vmatprep.subr.mxu0 0.0
  %613 = vmatpush1.msra.mxu0 0.0
  %614 = vmatprep.subr.mxu0 0.0
  %615 = vmatpush1.msra.mxu0 0.0
  %616 = vmatprep.subr.mxu0 0.0
  %617 = vmatpush1.msra.mxu0 0.0
  %618 = vmatprep.subr.mxu0 0.0
  %619 = vmatpush1.msra.mxu0 0.0
  %620 = vmatprep.subr.mxu0 0.0
  %621 = vmatpush1.msra.mxu0 0.0
  %622 = vmatprep.subr.mxu0 0.0
  %623 = vmatpush1.msra.mxu0 0.0
  %624 = vmatprep.subr.mxu0 0.0
  %625 = vmatpush1.msra.mxu0 0.0
  %626 = vmatprep.subr.mxu0 0.0
  %627 = vmatpush1.msra.mxu0 0.0
  %628 = vmatprep.subr.mxu0 0.0
  %629 = vmatpush1.msra.mxu0 0.0
  %630 = vmatprep.subr.mxu0 0.0
  %631 = vmatpush1.msra.mxu0 0.0
  %632 = vmatprep.subr.mxu0 0.0
  %633 = vmatpush1.msra.mxu0 0.0
  %634 = vmatprep.subr.mxu0 0.0
  %635 = vmatpush1.msra.mxu0 0.0
  %636 = vmatprep.mubr.f32.mxu0 0.0
  %637 = vmatmul.mubr.f32.gmra.mrb[0].mxu0 %v570
  %v638 = vpop.f32.mrb[0].mxu0
  %v639 = vadd.f32 %v540, %v638
  %v640 = vpop.f32.mrb[0].mxu0
  %641 = vdwg.mxu0
  %v642 = vadd.f32 %v639, %v56
  %v643 = vxor.u32 %v642, 2147483648
  %v644 = vmul.f32 %v643, 1.442695
  %v645 = vpow.pop %v644
  %v646 = vadd.f32 %v645, 1.0
  %v647 = vrcp.pop %v646
  %v648 = vmul.f32 1.0, %v647
  %v649 = vtanh.pop %v642
  %v650 = vmul.f32 %v648, %v455
  %652 = vrot.lane.b32.xlu0 %v649, 32
  %v653 = vpop.permute.xlu0 %652
  %v655 = vmul.f32 %v648, %v653
  %657 = vrot.lane.b32.xlu0 %v655, 32
  %v658 = vpop.permute.xlu0 %657
  %v660 = vadd.f32 %v650, %v658
  %v661 = vtanh.pop %v660
  %663 = vrot.lane.b32.xlu0 %v661, 32
  %v664 = vpop.permute.xlu0 %663
  %v666 = vmul.f32 %v648, %v664
  %669 = vrot.lane.b32.xlu0 %v666, 96
  %v670 = vpop.permute.xlu0 %669
  %v672 = vsel %vm159, %v569, %v670
  %v674 = vsel %vm262, %v672, 0
  %676 = vmatprep.subr.mxu0 %v28
  %677 = vmatpush1.msra.mxu0 %v27
  %678 = vmatprep.subr.mxu0 %v30
  %679 = vmatpush1.msra.mxu0 %v29
  %680 = vmatprep.subr.mxu0 %v32
  %681 = vmatpush1.msra.mxu0 %v31
  %682 = vmatprep.subr.mxu0 %v34
  %683 = vmatpush1.msra.mxu0 %v33
  %684 = vmatprep.subr.mxu0 %v36
  %685 = vmatpush1.msra.mxu0 %v35
  %686 = vmatprep.subr.mxu0 %v38
  %687 = vmatpush1.msra.mxu0 %v37
  %688 = vmatprep.subr.mxu0 %v40
  %689 = vmatpush1.msra.mxu0 %v39
  %690 = vmatprep.subr.mxu0 %v42
  %691 = vmatpush1.msra.mxu0 %v41
  %692 = vmatprep.subr.mxu0 0.0
  %693 = vmatpush1.msra.mxu0 0.0
  %694 = vmatprep.subr.mxu0 0.0
  %695 = vmatpush1.msra.mxu0 0.0
  %696 = vmatprep.subr.mxu0 0.0
  %697 = vmatpush1.msra.mxu0 0.0
  %698 = vmatprep.subr.mxu0 0.0
  %699 = vmatpush1.msra.mxu0 0.0
  %700 = vmatprep.subr.mxu0 0.0
  %701 = vmatpush1.msra.mxu0 0.0
  %702 = vmatprep.subr.mxu0 0.0
  %703 = vmatpush1.msra.mxu0 0.0
  %704 = vmatprep.subr.mxu0 0.0
  %705 = vmatpush1.msra.mxu0 0.0
  %706 = vmatprep.subr.mxu0 0.0
  %707 = vmatpush1.msra.mxu0 0.0
  %708 = vmatprep.subr.mxu0 0.0
  %709 = vmatpush1.msra.mxu0 0.0
  %710 = vmatprep.subr.mxu0 0.0
  %711 = vmatpush1.msra.mxu0 0.0
  %712 = vmatprep.subr.mxu0 0.0
  %713 = vmatpush1.msra.mxu0 0.0
  %714 = vmatprep.subr.mxu0 0.0
  %715 = vmatpush1.msra.mxu0 0.0
  %716 = vmatprep.subr.mxu0 0.0
  %717 = vmatpush1.msra.mxu0 0.0
  %718 = vmatprep.subr.mxu0 0.0
  %719 = vmatpush1.msra.mxu0 0.0
  %720 = vmatprep.subr.mxu0 0.0
  %721 = vmatpush1.msra.mxu0 0.0
  %722 = vmatprep.subr.mxu0 0.0
  %723 = vmatpush1.msra.mxu0 0.0
  %724 = vmatprep.subr.mxu0 0.0
  %725 = vmatpush1.msra.mxu0 0.0
  %726 = vmatprep.subr.mxu0 0.0
  %727 = vmatpush1.msra.mxu0 0.0
  %728 = vmatprep.subr.mxu0 0.0
  %729 = vmatpush1.msra.mxu0 0.0
  %730 = vmatprep.subr.mxu0 0.0
  %731 = vmatpush1.msra.mxu0 0.0
  %732 = vmatprep.subr.mxu0 0.0
  %733 = vmatpush1.msra.mxu0 0.0
  %734 = vmatprep.subr.mxu0 0.0
  %735 = vmatpush1.msra.mxu0 0.0
  %736 = vmatprep.subr.mxu0 0.0
  %737 = vmatpush1.msra.mxu0 0.0
  %738 = vmatprep.subr.mxu0 0.0
  %739 = vmatpush1.msra.mxu0 0.0
  %740 = vmatprep.mubr.f32.mxu0 0.0
  %741 = vmatmul.mubr.f32.gmra.mrb[0].mxu0 %v674
  %v742 = vpop.f32.mrb[0].mxu0
  %v743 = vadd.f32 0.0, %v742
  %v744 = vpop.f32.mrb[0].mxu0
  %v745 = vadd.f32 0.0, %v744
  %746 = vdwg.mxu0
  %v747 = vadd.f32 %v743, %v51
  %v748 = vxor.u32 %v747, 2147483648
  %v749 = vmul.f32 %v748, 1.442695
  %v750 = vpow.pop %v749
  %v751 = vadd.f32 %v750, 1.0
  %v752 = vrcp.pop %v751
  %v753 = vmul.f32 1.0, %v752
  %v754 = vtanh.pop %v747
  %v755 = vmul.f32 %v753, %v560
  %757 = vrot.lane.b32.xlu0 %v754, 32
  %v758 = vpop.permute.xlu0 %757
  %v760 = vmul.f32 %v753, %v758
  %762 = vrot.lane.b32.xlu0 %v760, 32
  %v763 = vpop.permute.xlu0 %762
  %v765 = vadd.f32 %v755, %v763
  %v766 = vtanh.pop %v765
  %768 = vrot.lane.b32.xlu0 %v766, 32
  %v769 = vpop.permute.xlu0 %768
  %v771 = vmul.f32 %v753, %v769
  %773 = vrot.lane.b32.xlu0 %v771, 64
  %v774 = vpop.permute.xlu0 %773
  %v775 = vsel %vm159, %v774, 0
  %777 = vmatprep.subr.mxu0 0.0
  %778 = vmatpush1.msra.mxu0 %v43
  %779 = vmatprep.subr.mxu0 0.0
  %780 = vmatpush1.msra.mxu0 %v44
  %781 = vmatprep.subr.mxu0 0.0
  %782 = vmatpush1.msra.mxu0 %v45
  %783 = vmatprep.subr.mxu0 0.0
  %784 = vmatpush1.msra.mxu0 %v46
  %785 = vmatprep.subr.mxu0 0.0
  %786 = vmatpush1.msra.mxu0 0.0
  %787 = vmatprep.subr.mxu0 0.0
  %788 = vmatpush1.msra.mxu0 0.0
  %789 = vmatprep.subr.mxu0 0.0
  %790 = vmatpush1.msra.mxu0 0.0
  %791 = vmatprep.subr.mxu0 0.0
  %792 = vmatpush1.msra.mxu0 0.0
  %793 = vmatprep.subr.mxu0 0.0
  %794 = vmatpush1.msra.mxu0 0.0
  %795 = vmatprep.subr.mxu0 0.0
  %796 = vmatpush1.msra.mxu0 0.0
  %797 = vmatprep.subr.mxu0 0.0
  %798 = vmatpush1.msra.mxu0 0.0
  %799 = vmatprep.subr.mxu0 0.0
  %800 = vmatpush1.msra.mxu0 0.0
  %801 = vmatprep.subr.mxu0 0.0
  %802 = vmatpush1.msra.mxu0 0.0
  %803 = vmatprep.subr.mxu0 0.0
  %804 = vmatpush1.msra.mxu0 0.0
  %805 = vmatprep.subr.mxu0 0.0
  %806 = vmatpush1.msra.mxu0 0.0
  %807 = vmatprep.subr.mxu0 0.0
  %808 = vmatpush1.msra.mxu0 0.0
  %809 = vmatprep.subr.mxu0 0.0
  %810 = vmatpush1.msra.mxu0 0.0
  %811 = vmatprep.subr.mxu0 0.0
  %812 = vmatpush1.msra.mxu0 0.0
  %813 = vmatprep.subr.mxu0 0.0
  %814 = vmatpush1.msra.mxu0 0.0
  %815 = vmatprep.subr.mxu0 0.0
  %816 = vmatpush1.msra.mxu0 0.0
  %817 = vmatprep.subr.mxu0 0.0
  %818 = vmatpush1.msra.mxu0 0.0
  %819 = vmatprep.subr.mxu0 0.0
  %820 = vmatpush1.msra.mxu0 0.0
  %821 = vmatprep.subr.mxu0 0.0
  %822 = vmatpush1.msra.mxu0 0.0
  %823 = vmatprep.subr.mxu0 0.0
  %824 = vmatpush1.msra.mxu0 0.0
  %825 = vmatprep.subr.mxu0 0.0
  %826 = vmatpush1.msra.mxu0 0.0
  %827 = vmatprep.subr.mxu0 0.0
  %828 = vmatpush1.msra.mxu0 0.0
  %829 = vmatprep.subr.mxu0 0.0
  %830 = vmatpush1.msra.mxu0 0.0
  %831 = vmatprep.subr.mxu0 0.0
  %832 = vmatpush1.msra.mxu0 0.0
  %833 = vmatprep.subr.mxu0 0.0
  %834 = vmatpush1.msra.mxu0 0.0
  %835 = vmatprep.subr.mxu0 0.0
  %836 = vmatpush1.msra.mxu0 0.0
  %837 = vmatprep.subr.mxu0 0.0
  %838 = vmatpush1.msra.mxu0 0.0
  %839 = vmatprep.subr.mxu0 0.0
  %840 = vmatpush1.msra.mxu0 0.0
  %841 = vmatprep.mubr.f32.mxu0 0.0
  %842 = vmatmul.mubr.f32.gmra.mrb[0].mxu0 %v775
  %v843 = vpop.f32.mrb[0].mxu0
  %v844 = vadd.f32 %v745, %v843
  %v845 = vpop.f32.mrb[0].mxu0
  %846 = vdwg.mxu0
  %v847 = vadd.f32 %v844, %v56
  %v848 = vxor.u32 %v847, 2147483648
  %v849 = vmul.f32 %v848, 1.442695
  %v850 = vpow.pop %v849
  %v851 = vadd.f32 %v850, 1.0
  %v852 = vrcp.pop %v851
  %v853 = vmul.f32 1.0, %v852
  %v854 = vtanh.pop %v847
  %v855 = vmul.f32 %v853, %v660
  %857 = vrot.lane.b32.xlu0 %v854, 32
  %v858 = vpop.permute.xlu0 %857
  %v860 = vmul.f32 %v853, %v858
  %862 = vrot.lane.b32.xlu0 %v860, 32
  %v863 = vpop.permute.xlu0 %862
  %v865 = vadd.f32 %v855, %v863
  %v866 = vtanh.pop %v865
  %868 = vrot.lane.b32.xlu0 %v866, 32
  %v869 = vpop.permute.xlu0 %868
  %v871 = vmul.f32 %v853, %v869
  %874 = vrot.lane.b32.xlu0 %v871, 96
  %v875 = vpop.permute.xlu0 %874
  %v877 = vsel %vm159, %v774, %v875
  %v879 = vsel %vm262, %v877, 0
  %881 = vmatprep.subr.mxu0 %v28
  %882 = vmatpush1.msra.mxu0 %v27
  %883 = vmatprep.subr.mxu0 %v30
  %884 = vmatpush1.msra.mxu0 %v29
  %885 = vmatprep.subr.mxu0 %v32
  %886 = vmatpush1.msra.mxu0 %v31
  %887 = vmatprep.subr.mxu0 %v34
  %888 = vmatpush1.msra.mxu0 %v33
  %889 = vmatprep.subr.mxu0 %v36
  %890 = vmatpush1.msra.mxu0 %v35
  %891 = vmatprep.subr.mxu0 %v38
  %892 = vmatpush1.msra.mxu0 %v37
  %893 = vmatprep.subr.mxu0 %v40
  %894 = vmatpush1.msra.mxu0 %v39
  %895 = vmatprep.subr.mxu0 %v42
  %896 = vmatpush1.msra.mxu0 %v41
  %897 = vmatprep.subr.mxu0 0.0
  %898 = vmatpush1.msra.mxu0 0.0
  %899 = vmatprep.subr.mxu0 0.0
  %900 = vmatpush1.msra.mxu0 0.0
  %901 = vmatprep.subr.mxu0 0.0
  %902 = vmatpush1.msra.mxu0 0.0
  %903 = vmatprep.subr.mxu0 0.0
  %904 = vmatpush1.msra.mxu0 0.0
  %905 = vmatprep.subr.mxu0 0.0
  %906 = vmatpush1.msra.mxu0 0.0
  %907 = vmatprep.subr.mxu0 0.0
  %908 = vmatpush1.msra.mxu0 0.0
  %909 = vmatprep.subr.mxu0 0.0
  %910 = vmatpush1.msra.mxu0 0.0
  %911 = vmatprep.subr.mxu0 0.0
  %912 = vmatpush1.msra.mxu0 0.0
  %913 = vmatprep.subr.mxu0 0.0
  %914 = vmatpush1.msra.mxu0 0.0
  %915 = vmatprep.subr.mxu0 0.0
  %916 = vmatpush1.msra.mxu0 0.0
  %917 = vmatprep.subr.mxu0 0.0
  %918 = vmatpush1.msra.mxu0 0.0
  %919 = vmatprep.subr.mxu0 0.0
  %920 = vmatpush1.msra.mxu0 0.0
  %921 = vmatprep.subr.mxu0 0.0
  %922 = vmatpush1.msra.mxu0 0.0
  %923 = vmatprep.subr.mxu0 0.0
  %924 = vmatpush1.msra.mxu0 0.0
  %925 = vmatprep.subr.mxu0 0.0
  %926 = vmatpush1.msra.mxu0 0.0
  %927 = vmatprep.subr.mxu0 0.0
  %928 = vmatpush1.msra.mxu0 0.0
  %929 = vmatprep.subr.mxu0 0.0
  %930 = vmatpush1.msra.mxu0 0.0
  %931 = vmatprep.subr.mxu0 0.0
  %932 = vmatpush1.msra.mxu0 0.0
  %933 = vmatprep.subr.mxu0 0.0
  %934 = vmatpush1.msra.mxu0 0.0
  %935 = vmatprep.subr.mxu0 0.0
  %936 = vmatpush1.msra.mxu0 0.0
  %937 = vmatprep.subr.mxu0 0.0
  %938 = vmatpush1.msra.mxu0 0.0
  %939 = vmatprep.subr.mxu0 0.0
  %940 = vmatpush1.msra.mxu0 0.0
  %941 = vmatprep.subr.mxu0 0.0
  %942 = vmatpush1.msra.mxu0 0.0
  %943 = vmatprep.subr.mxu0 0.0
  %944 = vmatpush1.msra.mxu0 0.0
  %945 = vmatprep.mubr.f32.mxu0 0.0
  %946 = vmatmul.mubr.f32.gmra.mrb[0].mxu0 %v879
  %v947 = vpop.f32.mrb[0].mxu0
  %v948 = vadd.f32 0.0, %v947
  %v949 = vpop.f32.mrb[0].mxu0
  %v950 = vadd.f32 0.0, %v949
  %951 = vdwg.mxu0
  %v952 = vadd.f32 %v948, %v51
  %v953 = vxor.u32 %v952, 2147483648
  %v954 = vmul.f32 %v953, 1.442695
  %v955 = vpow.pop %v954
  %v956 = vadd.f32 %v955, 1.0
  %v957 = vrcp.pop %v956
  %v958 = vmul.f32 1.0, %v957
  %v959 = vtanh.pop %v952
  %v960 = vmul.f32 %v958, %v765
  %962 = vrot.lane.b32.xlu0 %v959, 32
  %v963 = vpop.permute.xlu0 %962
  %v965 = vmul.f32 %v958, %v963
  %967 = vrot.lane.b32.xlu0 %v965, 32
  %v968 = vpop.permute.xlu0 %967
  %v970 = vadd.f32 %v960, %v968
  %v971 = vtanh.pop %v970
  %973 = vrot.lane.b32.xlu0 %v971, 32
  %v974 = vpop.permute.xlu0 %973
  %v976 = vmul.f32 %v958, %v974
  %978 = vrot.lane.b32.xlu0 %v976, 64
  %v979 = vpop.permute.xlu0 %978
  %v980 = vsel %vm159, %v979, 0
  %982 = vmatprep.subr.mxu0 0.0
  %983 = vmatpush1.msra.mxu0 %v43
  %984 = vmatprep.subr.mxu0 0.0
  %985 = vmatpush1.msra.mxu0 %v44
  %986 = vmatprep.subr.mxu0 0.0
  %987 = vmatpush1.msra.mxu0 %v45
  %988 = vmatprep.subr.mxu0 0.0
  %989 = vmatpush1.msra.mxu0 %v46
  %990 = vmatprep.subr.mxu0 0.0
  %991 = vmatpush1.msra.mxu0 0.0
  %992 = vmatprep.subr.mxu0 0.0
  %993 = vmatpush1.msra.mxu0 0.0
  %994 = vmatprep.subr.mxu0 0.0
  %995 = vmatpush1.msra.mxu0 0.0
  %996 = vmatprep.subr.mxu0 0.0
  %997 = vmatpush1.msra.mxu0 0.0
  %998 = vmatprep.subr.mxu0 0.0
  %999 = vmatpush1.msra.mxu0 0.0
  %1000 = vmatprep.subr.mxu0 0.0
  %1001 = vmatpush1.msra.mxu0 0.0
  %1002 = vmatprep.subr.mxu0 0.0
  %1003 = vmatpush1.msra.mxu0 0.0
  %1004 = vmatprep.subr.mxu0 0.0
  %1005 = vmatpush1.msra.mxu0 0.0
  %1006 = vmatprep.subr.mxu0 0.0
  %1007 = vmatpush1.msra.mxu0 0.0
  %1008 = vmatprep.subr.mxu0 0.0
  %1009 = vmatpush1.msra.mxu0 0.0
  %1010 = vmatprep.subr.mxu0 0.0
  %1011 = vmatpush1.msra.mxu0 0.0
  %1012 = vmatprep.subr.mxu0 0.0
  %1013 = vmatpush1.msra.mxu0 0.0
  %1014 = vmatprep.subr.mxu0 0.0
  %1015 = vmatpush1.msra.mxu0 0.0
  %1016 = vmatprep.subr.mxu0 0.0
  %1017 = vmatpush1.msra.mxu0 0.0
  %1018 = vmatprep.subr.mxu0 0.0
  %1019 = vmatpush1.msra.mxu0 0.0
  %1020 = vmatprep.subr.mxu0 0.0
  %1021 = vmatpush1.msra.mxu0 0.0
  %1022 = vmatprep.subr.mxu0 0.0
  %1023 = vmatpush1.msra.mxu0 0.0
  %1024 = vmatprep.subr.mxu0 0.0
  %1025 = vmatpush1.msra.mxu0 0.0
  %1026 = vmatprep.subr.mxu0 0.0
  %1027 = vmatpush1.msra.mxu0 0.0
  %1028 = vmatprep.subr.mxu0 0.0
  %1029 = vmatpush1.msra.mxu0 0.0
  %1030 = vmatprep.subr.mxu0 0.0
  %1031 = vmatpush1.msra.mxu0 0.0
  %1032 = vmatprep.subr.mxu0 0.0
  %1033 = vmatpush1.msra.mxu0 0.0
  %1034 = vmatprep.subr.mxu0 0.0
  %1035 = vmatpush1.msra.mxu0 0.0
  %1036 = vmatprep.subr.mxu0 0.0
  %1037 = vmatpush1.msra.mxu0 0.0
  %1038 = vmatprep.subr.mxu0 0.0
  %1039 = vmatpush1.msra.mxu0 0.0
  %1040 = vmatprep.subr.mxu0 0.0
  %1041 = vmatpush1.msra.mxu0 0.0
  %1042 = vmatprep.subr.mxu0 0.0
  %1043 = vmatpush1.msra.mxu0 0.0
  %1044 = vmatprep.subr.mxu0 0.0
  %1045 = vmatpush1.msra.mxu0 0.0
  %1046 = vmatprep.mubr.f32.mxu0 0.0
  %1047 = vmatmul.mubr.f32.gmra.mrb[0].mxu0 %v980
  %v1048 = vpop.f32.mrb[0].mxu0
  %v1049 = vadd.f32 %v950, %v1048
  %v1050 = vpop.f32.mrb[0].mxu0
  %1051 = vdwg.mxu0
  %v1052 = vadd.f32 %v1049, %v56
  %v1053 = vxor.u32 %v1052, 2147483648
  %v1054 = vmul.f32 %v1053, 1.442695
  %v1055 = vpow.pop %v1054
  %v1056 = vadd.f32 %v1055, 1.0
  %v1057 = vrcp.pop %v1056
  %v1058 = vmul.f32 1.0, %v1057
  %v1059 = vtanh.pop %v1052
  %v1060 = vmul.f32 %v1058, %v865
  %1062 = vrot.lane.b32.xlu0 %v1059, 32
  %v1063 = vpop.permute.xlu0 %1062
  %v1065 = vmul.f32 %v1058, %v1063
  %1067 = vrot.lane.b32.xlu0 %v1065, 32
  %v1068 = vpop.permute.xlu0 %1067
  %v1070 = vadd.f32 %v1060, %v1068
  %v1071 = vtanh.pop %v1070
  %1073 = vrot.lane.b32.xlu0 %v1071, 32
  %v1074 = vpop.permute.xlu0 %1073
  %v1076 = vmul.f32 %v1058, %v1074
  %1079 = vrot.lane.b32.xlu0 %v1076, 96
  %v1080 = vpop.permute.xlu0 %1079
  %v1082 = vsel %vm159, %v979, %v1080
  %v1084 = vsel %vm262, %v1082, 0
  %1086 = vmatprep.subr.mxu0 %v28
  %1087 = vmatpush1.msra.mxu0 %v27
  %1088 = vmatprep.subr.mxu0 %v30
  %1089 = vmatpush1.msra.mxu0 %v29
  %1090 = vmatprep.subr.mxu0 %v32
  %1091 = vmatpush1.msra.mxu0 %v31
  %1092 = vmatprep.subr.mxu0 %v34
  %1093 = vmatpush1.msra.mxu0 %v33
  %1094 = vmatprep.subr.mxu0 %v36
  %1095 = vmatpush1.msra.mxu0 %v35
  %1096 = vmatprep.subr.mxu0 %v38
  %1097 = vmatpush1.msra.mxu0 %v37
  %1098 = vmatprep.subr.mxu0 %v40
  %1099 = vmatpush1.msra.mxu0 %v39
  %1100 = vmatprep.subr.mxu0 %v42
  %1101 = vmatpush1.msra.mxu0 %v41
  %1102 = vmatprep.subr.mxu0 0.0
  %1103 = vmatpush1.msra.mxu0 0.0
  %1104 = vmatprep.subr.mxu0 0.0
  %1105 = vmatpush1.msra.mxu0 0.0
  %1106 = vmatprep.subr.mxu0 0.0
  %1107 = vmatpush1.msra.mxu0 0.0
  %1108 = vmatprep.subr.mxu0 0.0
  %1109 = vmatpush1.msra.mxu0 0.0
  %1110 = vmatprep.subr.mxu0 0.0
  %1111 = vmatpush1.msra.mxu0 0.0
  %1112 = vmatprep.subr.mxu0 0.0
  %1113 = vmatpush1.msra.mxu0 0.0
  %1114 = vmatprep.subr.mxu0 0.0
  %1115 = vmatpush1.msra.mxu0 0.0
  %1116 = vmatprep.subr.mxu0 0.0
  %1117 = vmatpush1.msra.mxu0 0.0
  %1118 = vmatprep.subr.mxu0 0.0
  %1119 = vmatpush1.msra.mxu0 0.0
  %1120 = vmatprep.subr.mxu0 0.0
  %1121 = vmatpush1.msra.mxu0 0.0
  %1122 = vmatprep.subr.mxu0 0.0
  %1123 = vmatpush1.msra.mxu0 0.0
  %1124 = vmatprep.subr.mxu0 0.0
  %1125 = vmatpush1.msra.mxu0 0.0
  %1126 = vmatprep.subr.mxu0 0.0
  %1127 = vmatpush1.msra.mxu0 0.0
  %1128 = vmatprep.subr.mxu0 0.0
  %1129 = vmatpush1.msra.mxu0 0.0
  %1130 = vmatprep.subr.mxu0 0.0
  %1131 = vmatpush1.msra.mxu0 0.0
  %1132 = vmatprep.subr.mxu0 0.0
  %1133 = vmatpush1.msra.mxu0 0.0
  %1134 = vmatprep.subr.mxu0 0.0
  %1135 = vmatpush1.msra.mxu0 0.0
  %1136 = vmatprep.subr.mxu0 0.0
  %1137 = vmatpush1.msra.mxu0 0.0
  %1138 = vmatprep.subr.mxu0 0.0
  %1139 = vmatpush1.msra.mxu0 0.0
  %1140 = vmatprep.subr.mxu0 0.0
  %1141 = vmatpush1.msra.mxu0 0.0
  %1142 = vmatprep.subr.mxu0 0.0
  %1143 = vmatpush1.msra.mxu0 0.0
  %1144 = vmatprep.subr.mxu0 0.0
  %1145 = vmatpush1.msra.mxu0 0.0
  %1146 = vmatprep.subr.mxu0 0.0
  %1147 = vmatpush1.msra.mxu0 0.0
  %1148 = vmatprep.subr.mxu0 0.0
  %1149 = vmatpush1.msra.mxu0 0.0
  %1150 = vmatprep.mubr.f32.mxu0 0.0
  %1151 = vmatmul.mubr.f32.gmra.mrb[0].mxu0 %v1084
  %v1152 = vpop.f32.mrb[0].mxu0
  %v1153 = vadd.f32 0.0, %v1152
  %v1154 = vpop.f32.mrb[0].mxu0
  %v1155 = vadd.f32 0.0, %v1154
  %1156 = vdwg.mxu0
  %v1157 = vadd.f32 %v1153, %v51
  %v1158 = vxor.u32 %v1157, 2147483648
  %v1159 = vmul.f32 %v1158, 1.442695
  %v1160 = vpow.pop %v1159
  %v1161 = vadd.f32 %v1160, 1.0
  %v1162 = vrcp.pop %v1161
  %v1163 = vmul.f32 1.0, %v1162
  %v1164 = vtanh.pop %v1157
  %v1165 = vmul.f32 %v1163, %v970
  %1167 = vrot.lane.b32.xlu0 %v1164, 32
  %v1168 = vpop.permute.xlu0 %1167
  %v1170 = vmul.f32 %v1163, %v1168
  %1172 = vrot.lane.b32.xlu0 %v1170, 32
  %v1173 = vpop.permute.xlu0 %1172
  %v1175 = vadd.f32 %v1165, %v1173
  %v1176 = vtanh.pop %v1175
  %1178 = vrot.lane.b32.xlu0 %v1176, 32
  %v1179 = vpop.permute.xlu0 %1178
  %v1181 = vmul.f32 %v1163, %v1179
  %1183 = vrot.lane.b32.xlu0 %v1181, 64
  %v1184 = vpop.permute.xlu0 %1183
  %v1185 = vsel %vm159, %v1184, 0
  %1187 = vmatprep.subr.mxu0 0.0
  %1188 = vmatpush1.msra.mxu0 %v43
  %1189 = vmatprep.subr.mxu0 0.0
  %1190 = vmatpush1.msra.mxu0 %v44
  %1191 = vmatprep.subr.mxu0 0.0
  %1192 = vmatpush1.msra.mxu0 %v45
  %1193 = vmatprep.subr.mxu0 0.0
  %1194 = vmatpush1.msra.mxu0 %v46
  %1195 = vmatprep.subr.mxu0 0.0
  %1196 = vmatpush1.msra.mxu0 0.0
  %1197 = vmatprep.subr.mxu0 0.0
  %1198 = vmatpush1.msra.mxu0 0.0
  %1199 = vmatprep.subr.mxu0 0.0
  %1200 = vmatpush1.msra.mxu0 0.0
  %1201 = vmatprep.subr.mxu0 0.0
  %1202 = vmatpush1.msra.mxu0 0.0
  %1203 = vmatprep.subr.mxu0 0.0
  %1204 = vmatpush1.msra.mxu0 0.0
  %1205 = vmatprep.subr.mxu0 0.0
  %1206 = vmatpush1.msra.mxu0 0.0
  %1207 = vmatprep.subr.mxu0 0.0
  %1208 = vmatpush1.msra.mxu0 0.0
  %1209 = vmatprep.subr.mxu0 0.0
  %1210 = vmatpush1.msra.mxu0 0.0
  %1211 = vmatprep.subr.mxu0 0.0
  %1212 = vmatpush1.msra.mxu0 0.0
  %1213 = vmatprep.subr.mxu0 0.0
  %1214 = vmatpush1.msra.mxu0 0.0
  %1215 = vmatprep.subr.mxu0 0.0
  %1216 = vmatpush1.msra.mxu0 0.0
  %1217 = vmatprep.subr.mxu0 0.0
  %1218 = vmatpush1.msra.mxu0 0.0
  %1219 = vmatprep.subr.mxu0 0.0
  %1220 = vmatpush1.msra.mxu0 0.0
  %1221 = vmatprep.subr.mxu0 0.0
  %1222 = vmatpush1.msra.mxu0 0.0
  %1223 = vmatprep.subr.mxu0 0.0
  %1224 = vmatpush1.msra.mxu0 0.0
  %1225 = vmatprep.subr.mxu0 0.0
  %1226 = vmatpush1.msra.mxu0 0.0
  %1227 = vmatprep.subr.mxu0 0.0
  %1228 = vmatpush1.msra.mxu0 0.0
  %1229 = vmatprep.subr.mxu0 0.0
  %1230 = vmatpush1.msra.mxu0 0.0
  %1231 = vmatprep.subr.mxu0 0.0
  %1232 = vmatpush1.msra.mxu0 0.0
  %1233 = vmatprep.subr.mxu0 0.0
  %1234 = vmatpush1.msra.mxu0 0.0
  %1235 = vmatprep.subr.mxu0 0.0
  %1236 = vmatpush1.msra.mxu0 0.0
  %1237 = vmatprep.subr.mxu0 0.0
  %1238 = vmatpush1.msra.mxu0 0.0
  %1239 = vmatprep.subr.mxu0 0.0
  %1240 = vmatpush1.msra.mxu0 0.0
  %1241 = vmatprep.subr.mxu0 0.0
  %1242 = vmatpush1.msra.mxu0 0.0
  %1243 = vmatprep.subr.mxu0 0.0
  %1244 = vmatpush1.msra.mxu0 0.0
  %1245 = vmatprep.subr.mxu0 0.0
  %1246 = vmatpush1.msra.mxu0 0.0
  %1247 = vmatprep.subr.mxu0 0.0
  %1248 = vmatpush1.msra.mxu0 0.0
  %1249 = vmatprep.subr.mxu0 0.0
  %1250 = vmatpush1.msra.mxu0 0.0
  %1251 = vmatprep.mubr.f32.mxu0 0.0
  %1252 = vmatmul.mubr.f32.gmra.mrb[0].mxu0 %v1185
  %v1253 = vpop.f32.mrb[0].mxu0
  %v1254 = vadd.f32 %v1155, %v1253
  %v1255 = vpop.f32.mrb[0].mxu0
  %1256 = vdwg.mxu0
  %v1257 = vadd.f32 %v1254, %v56
  %v1258 = vxor.u32 %v1257, 2147483648
  %v1259 = vmul.f32 %v1258, 1.442695
  %v1260 = vpow.pop %v1259
  %v1261 = vadd.f32 %v1260, 1.0
  %v1262 = vrcp.pop %v1261
  %v1263 = vmul.f32 1.0, %v1262
  %v1264 = vtanh.pop %v1257
  %v1265 = vmul.f32 %v1263, %v1070
  %1267 = vrot.lane.b32.xlu0 %v1264, 32
  %v1268 = vpop.permute.xlu0 %1267
  %v1270 = vmul.f32 %v1263, %v1268
  %1272 = vrot.lane.b32.xlu0 %v1270, 32
  %v1273 = vpop.permute.xlu0 %1272
  %v1275 = vadd.f32 %v1265, %v1273
  %v1276 = vtanh.pop %v1275
  %1278 = vrot.lane.b32.xlu0 %v1276, 32
  %v1279 = vpop.permute.xlu0 %1278
  %v1281 = vmul.f32 %v1263, %v1279
  %1284 = vrot.lane.b32.xlu0 %v1281, 96
  %v1285 = vpop.permute.xlu0 %1284
  %v1287 = vsel %vm159, %v1184, %v1285
  %v1289 = vsel %vm262, %v1287, 0
  %1291 = vmatprep.subr.mxu0 %v28
  %1292 = vmatpush1.msra.mxu0 %v27
  %1293 = vmatprep.subr.mxu0 %v30
  %1294 = vmatpush1.msra.mxu0 %v29
  %1295 = vmatprep.subr.mxu0 %v32
  %1296 = vmatpush1.msra.mxu0 %v31
  %1297 = vmatprep.subr.mxu0 %v34
  %1298 = vmatpush1.msra.mxu0 %v33
  %1299 = vmatprep.subr.mxu0 %v36
  %1300 = vmatpush1.msra.mxu0 %v35
  %1301 = vmatprep.subr.mxu0 %v38
  %1302 = vmatpush1.msra.mxu0 %v37
  %1303 = vmatprep.subr.mxu0 %v40
  %1304 = vmatpush1.msra.mxu0 %v39
  %1305 = vmatprep.subr.mxu0 %v42
  %1306 = vmatpush1.msra.mxu0 %v41
  %1307 = vmatprep.subr.mxu0 0.0
  %1308 = vmatpush1.msra.mxu0 0.0
  %1309 = vmatprep.subr.mxu0 0.0
  %1310 = vmatpush1.msra.mxu0 0.0
  %1311 = vmatprep.subr.mxu0 0.0
  %1312 = vmatpush1.msra.mxu0 0.0
  %1313 = vmatprep.subr.mxu0 0.0
  %1314 = vmatpush1.msra.mxu0 0.0
  %1315 = vmatprep.subr.mxu0 0.0
  %1316 = vmatpush1.msra.mxu0 0.0
  %1317 = vmatprep.subr.mxu0 0.0
  %1318 = vmatpush1.msra.mxu0 0.0
  %1319 = vmatprep.subr.mxu0 0.0
  %1320 = vmatpush1.msra.mxu0 0.0
  %1321 = vmatprep.subr.mxu0 0.0
  %1322 = vmatpush1.msra.mxu0 0.0
  %1323 = vmatprep.subr.mxu0 0.0
  %1324 = vmatpush1.msra.mxu0 0.0
  %1325 = vmatprep.subr.mxu0 0.0
  %1326 = vmatpush1.msra.mxu0 0.0
  %1327 = vmatprep.subr.mxu0 0.0
  %1328 = vmatpush1.msra.mxu0 0.0
  %1329 = vmatprep.subr.mxu0 0.0
  %1330 = vmatpush1.msra.mxu0 0.0
  %1331 = vmatprep.subr.mxu0 0.0
  %1332 = vmatpush1.msra.mxu0 0.0
  %1333 = vmatprep.subr.mxu0 0.0
  %1334 = vmatpush1.msra.mxu0 0.0
  %1335 = vmatprep.subr.mxu0 0.0
  %1336 = vmatpush1.msra.mxu0 0.0
  %1337 = vmatprep.subr.mxu0 0.0
  %1338 = vmatpush1.msra.mxu0 0.0
  %1339 = vmatprep.subr.mxu0 0.0
  %1340 = vmatpush1.msra.mxu0 0.0
  %1341 = vmatprep.subr.mxu0 0.0
  %1342 = vmatpush1.msra.mxu0 0.0
  %1343 = vmatprep.subr.mxu0 0.0
  %1344 = vmatpush1.msra.mxu0 0.0
  %1345 = vmatprep.subr.mxu0 0.0
  %1346 = vmatpush1.msra.mxu0 0.0
  %1347 = vmatprep.subr.mxu0 0.0
  %1348 = vmatpush1.msra.mxu0 0.0
  %1349 = vmatprep.subr.mxu0 0.0
  %1350 = vmatpush1.msra.mxu0 0.0
  %1351 = vmatprep.subr.mxu0 0.0
  %1352 = vmatpush1.msra.mxu0 0.0
  %1353 = vmatprep.subr.mxu0 0.0
  %1354 = vmatpush1.msra.mxu0 0.0
  %1355 = vmatprep.mubr.f32.mxu0 0.0
  %1356 = vmatmul.mubr.f32.gmra.mrb[0].mxu0 %v1289
  %v1357 = vpop.f32.mrb[0].mxu0
  %v1358 = vadd.f32 0.0, %v1357
  %v1359 = vpop.f32.mrb[0].mxu0
  %v1360 = vadd.f32 0.0, %v1359
  %1361 = vdwg.mxu0
  %v1362 = vadd.f32 %v1358, %v51
  %v1363 = vxor.u32 %v1362, 2147483648
  %v1364 = vmul.f32 %v1363, 1.442695
  %v1365 = vpow.pop %v1364
  %v1366 = vadd.f32 %v1365, 1.0
  %v1367 = vrcp.pop %v1366
  %v1368 = vmul.f32 1.0, %v1367
  %v1369 = vtanh.pop %v1362
  %v1370 = vmul.f32 %v1368, %v1175
  %1372 = vrot.lane.b32.xlu0 %v1369, 32
  %v1373 = vpop.permute.xlu0 %1372
  %v1375 = vmul.f32 %v1368, %v1373
  %1377 = vrot.lane.b32.xlu0 %v1375, 32
  %v1378 = vpop.permute.xlu0 %1377
  %v1380 = vadd.f32 %v1370, %v1378
  %v1381 = vtanh.pop %v1380
  %1383 = vrot.lane.b32.xlu0 %v1381, 32
  %v1384 = vpop.permute.xlu0 %1383
  %v1386 = vmul.f32 %v1368, %v1384
  %1388 = vrot.lane.b32.xlu0 %v1386, 64
  %v1389 = vpop.permute.xlu0 %1388
  %v1390 = vsel %vm159, %v1389, 0
  %1392 = vmatprep.subr.mxu0 0.0
  %1393 = vmatpush1.msra.mxu0 %v43
  %1394 = vmatprep.subr.mxu0 0.0
  %1395 = vmatpush1.msra.mxu0 %v44
  %1396 = vmatprep.subr.mxu0 0.0
  %1397 = vmatpush1.msra.mxu0 %v45
  %1398 = vmatprep.subr.mxu0 0.0
  %1399 = vmatpush1.msra.mxu0 %v46
  %1400 = vmatprep.subr.mxu0 0.0
  %1401 = vmatpush1.msra.mxu0 0.0
  %1402 = vmatprep.subr.mxu0 0.0
  %1403 = vmatpush1.msra.mxu0 0.0
  %1404 = vmatprep.subr.mxu0 0.0
  %1405 = vmatpush1.msra.mxu0 0.0
  %1406 = vmatprep.subr.mxu0 0.0
  %1407 = vmatpush1.msra.mxu0 0.0
  %1408 = vmatprep.subr.mxu0 0.0
  %1409 = vmatpush1.msra.mxu0 0.0
  %1410 = vmatprep.subr.mxu0 0.0
  %1411 = vmatpush1.msra.mxu0 0.0
  %1412 = vmatprep.subr.mxu0 0.0
  %1413 = vmatpush1.msra.mxu0 0.0
  %1414 = vmatprep.subr.mxu0 0.0
  %1415 = vmatpush1.msra.mxu0 0.0
  %1416 = vmatprep.subr.mxu0 0.0
  %1417 = vmatpush1.msra.mxu0 0.0
  %1418 = vmatprep.subr.mxu0 0.0
  %1419 = vmatpush1.msra.mxu0 0.0
  %1420 = vmatprep.subr.mxu0 0.0
  %1421 = vmatpush1.msra.mxu0 0.0
  %1422 = vmatprep.subr.mxu0 0.0
  %1423 = vmatpush1.msra.mxu0 0.0
  %1424 = vmatprep.subr.mxu0 0.0
  %1425 = vmatpush1.msra.mxu0 0.0
  %1426 = vmatprep.subr.mxu0 0.0
  %1427 = vmatpush1.msra.mxu0 0.0
  %1428 = vmatprep.subr.mxu0 0.0
  %1429 = vmatpush1.msra.mxu0 0.0
  %1430 = vmatprep.subr.mxu0 0.0
  %1431 = vmatpush1.msra.mxu0 0.0
  %1432 = vmatprep.subr.mxu0 0.0
  %1433 = vmatpush1.msra.mxu0 0.0
  %1434 = vmatprep.subr.mxu0 0.0
  %1435 = vmatpush1.msra.mxu0 0.0
  %1436 = vmatprep.subr.mxu0 0.0
  %1437 = vmatpush1.msra.mxu0 0.0
  %1438 = vmatprep.subr.mxu0 0.0
  %1439 = vmatpush1.msra.mxu0 0.0
  %1440 = vmatprep.subr.mxu0 0.0
  %1441 = vmatpush1.msra.mxu0 0.0
  %1442 = vmatprep.subr.mxu0 0.0
  %1443 = vmatpush1.msra.mxu0 0.0
  %1444 = vmatprep.subr.mxu0 0.0
  %1445 = vmatpush1.msra.mxu0 0.0
  %1446 = vmatprep.subr.mxu0 0.0
  %1447 = vmatpush1.msra.mxu0 0.0
  %1448 = vmatprep.subr.mxu0 0.0
  %1449 = vmatpush1.msra.mxu0 0.0
  %1450 = vmatprep.subr.mxu0 0.0
  %1451 = vmatpush1.msra.mxu0 0.0
  %1452 = vmatprep.subr.mxu0 0.0
  %1453 = vmatpush1.msra.mxu0 0.0
  %1454 = vmatprep.subr.mxu0 0.0
  %1455 = vmatpush1.msra.mxu0 0.0
  %1456 = vmatprep.mubr.f32.mxu0 0.0
  %1457 = vmatmul.mubr.f32.gmra.mrb[0].mxu0 %v1390
  %v1458 = vpop.f32.mrb[0].mxu0
  %v1459 = vadd.f32 %v1360, %v1458
  %v1460 = vpop.f32.mrb[0].mxu0
  %1461 = vdwg.mxu0
  %v1462 = vadd.f32 %v1459, %v56
  %v1463 = vxor.u32 %v1462, 2147483648
  %v1464 = vmul.f32 %v1463, 1.442695
  %v1465 = vpow.pop %v1464
  %v1466 = vadd.f32 %v1465, 1.0
  %v1467 = vrcp.pop %v1466
  %v1468 = vmul.f32 1.0, %v1467
  %v1469 = vtanh.pop %v1462
  %v1470 = vmul.f32 %v1468, %v1275
  %1472 = vrot.lane.b32.xlu0 %v1469, 32
  %v1473 = vpop.permute.xlu0 %1472
  %v1475 = vmul.f32 %v1468, %v1473
  %1477 = vrot.lane.b32.xlu0 %v1475, 32
  %v1478 = vpop.permute.xlu0 %1477
  %v1480 = vadd.f32 %v1470, %v1478
  %v1481 = vtanh.pop %v1480
  %1483 = vrot.lane.b32.xlu0 %v1481, 32
  %v1484 = vpop.permute.xlu0 %1483
  %v1486 = vmul.f32 %v1468, %v1484
  %1489 = vrot.lane.b32.xlu0 %v1486, 96
  %v1490 = vpop.permute.xlu0 %1489
  %v1492 = vsel %vm159, %v1389, %v1490
  %v1494 = vsel %vm262, %v1492, 0
  %1496 = vmatprep.subr.mxu0 %v28
  %1497 = vmatpush1.msra.mxu0 %v27
  %1498 = vmatprep.subr.mxu0 %v30
  %1499 = vmatpush1.msra.mxu0 %v29
  %1500 = vmatprep.subr.mxu0 %v32
  %1501 = vmatpush1.msra.mxu0 %v31
  %1502 = vmatprep.subr.mxu0 %v34
  %1503 = vmatpush1.msra.mxu0 %v33
  %1504 = vmatprep.subr.mxu0 %v36
  %1505 = vmatpush1.msra.mxu0 %v35
  %1506 = vmatprep.subr.mxu0 %v38
  %1507 = vmatpush1.msra.mxu0 %v37
  %1508 = vmatprep.subr.mxu0 %v40
  %1509 = vmatpush1.msra.mxu0 %v39
  %1510 = vmatprep.subr.mxu0 %v42
  %1511 = vmatpush1.msra.mxu0 %v41
  %1512 = vmatprep.subr.mxu0 0.0
  %1513 = vmatpush1.msra.mxu0 0.0
  %1514 = vmatprep.subr.mxu0 0.0
  %1515 = vmatpush1.msra.mxu0 0.0
  %1516 = vmatprep.subr.mxu0 0.0
  %1517 = vmatpush1.msra.mxu0 0.0
  %1518 = vmatprep.subr.mxu0 0.0
  %1519 = vmatpush1.msra.mxu0 0.0
  %1520 = vmatprep.subr.mxu0 0.0
  %1521 = vmatpush1.msra.mxu0 0.0
  %1522 = vmatprep.subr.mxu0 0.0
  %1523 = vmatpush1.msra.mxu0 0.0
  %1524 = vmatprep.subr.mxu0 0.0
  %1525 = vmatpush1.msra.mxu0 0.0
  %1526 = vmatprep.subr.mxu0 0.0
  %1527 = vmatpush1.msra.mxu0 0.0
  %1528 = vmatprep.subr.mxu0 0.0
  %1529 = vmatpush1.msra.mxu0 0.0
  %1530 = vmatprep.subr.mxu0 0.0
  %1531 = vmatpush1.msra.mxu0 0.0
  %1532 = vmatprep.subr.mxu0 0.0
  %1533 = vmatpush1.msra.mxu0 0.0
  %1534 = vmatprep.subr.mxu0 0.0
  %1535 = vmatpush1.msra.mxu0 0.0
  %1536 = vmatprep.subr.mxu0 0.0
  %1537 = vmatpush1.msra.mxu0 0.0
  %1538 = vmatprep.subr.mxu0 0.0
  %1539 = vmatpush1.msra.mxu0 0.0
  %1540 = vmatprep.subr.mxu0 0.0
  %1541 = vmatpush1.msra.mxu0 0.0
  %1542 = vmatprep.subr.mxu0 0.0
  %1543 = vmatpush1.msra.mxu0 0.0
  %1544 = vmatprep.subr.mxu0 0.0
  %1545 = vmatpush1.msra.mxu0 0.0
  %1546 = vmatprep.subr.mxu0 0.0
  %1547 = vmatpush1.msra.mxu0 0.0
  %1548 = vmatprep.subr.mxu0 0.0
  %1549 = vmatpush1.msra.mxu0 0.0
  %1550 = vmatprep.subr.mxu0 0.0
  %1551 = vmatpush1.msra.mxu0 0.0
  %1552 = vmatprep.subr.mxu0 0.0
  %1553 = vmatpush1.msra.mxu0 0.0
  %1554 = vmatprep.subr.mxu0 0.0
  %1555 = vmatpush1.msra.mxu0 0.0
  %1556 = vmatprep.subr.mxu0 0.0
  %1557 = vmatpush1.msra.mxu0 0.0
  %1558 = vmatprep.subr.mxu0 0.0
  %1559 = vmatpush1.msra.mxu0 0.0
  %1560 = vmatprep.mubr.f32.mxu0 0.0
  %1561 = vmatmul.mubr.f32.gmra.mrb[0].mxu0 %v1494
  %v1562 = vpop.f32.mrb[0].mxu0
  %v1563 = vadd.f32 0.0, %v1562
  %v1564 = vpop.f32.mrb[0].mxu0
  %v1565 = vadd.f32 0.0, %v1564
  %1566 = vdwg.mxu0
  %v1567 = vadd.f32 %v1563, %v51
  %v1568 = vxor.u32 %v1567, 2147483648
  %v1569 = vmul.f32 %v1568, 1.442695
  %v1570 = vpow.pop %v1569
  %v1571 = vadd.f32 %v1570, 1.0
  %v1572 = vrcp.pop %v1571
  %v1573 = vmul.f32 1.0, %v1572
  %v1574 = vtanh.pop %v1567
  %v1575 = vmul.f32 %v1573, %v1380
  %1577 = vrot.lane.b32.xlu0 %v1574, 32
  %v1578 = vpop.permute.xlu0 %1577
  %v1580 = vmul.f32 %v1573, %v1578
  %1582 = vrot.lane.b32.xlu0 %v1580, 32
  %v1583 = vpop.permute.xlu0 %1582
  %v1585 = vadd.f32 %v1575, %v1583
  %v1586 = vtanh.pop %v1585
  %1588 = vrot.lane.b32.xlu0 %v1586, 32
  %v1589 = vpop.permute.xlu0 %1588
  %v1591 = vmul.f32 %v1573, %v1589
  %1593 = vrot.lane.b32.xlu0 %v1591, 64
  %v1594 = vpop.permute.xlu0 %1593
  %v1595 = vsel %vm159, %v1594, 0
  %1597 = vmatprep.subr.mxu0 0.0
  %1598 = vmatpush1.msra.mxu0 %v43
  %1599 = vmatprep.subr.mxu0 0.0
  %1600 = vmatpush1.msra.mxu0 %v44
  %1601 = vmatprep.subr.mxu0 0.0
  %1602 = vmatpush1.msra.mxu0 %v45
  %1603 = vmatprep.subr.mxu0 0.0
  %1604 = vmatpush1.msra.mxu0 %v46
  %1605 = vmatprep.subr.mxu0 0.0
  %1606 = vmatpush1.msra.mxu0 0.0
  %1607 = vmatprep.subr.mxu0 0.0
  %1608 = vmatpush1.msra.mxu0 0.0
  %1609 = vmatprep.subr.mxu0 0.0
  %1610 = vmatpush1.msra.mxu0 0.0
  %1611 = vmatprep.subr.mxu0 0.0
  %1612 = vmatpush1.msra.mxu0 0.0
  %1613 = vmatprep.subr.mxu0 0.0
  %1614 = vmatpush1.msra.mxu0 0.0
  %1615 = vmatprep.subr.mxu0 0.0
  %1616 = vmatpush1.msra.mxu0 0.0
  %1617 = vmatprep.subr.mxu0 0.0
  %1618 = vmatpush1.msra.mxu0 0.0
  %1619 = vmatprep.subr.mxu0 0.0
  %1620 = vmatpush1.msra.mxu0 0.0
  %1621 = vmatprep.subr.mxu0 0.0
  %1622 = vmatpush1.msra.mxu0 0.0
  %1623 = vmatprep.subr.mxu0 0.0
  %1624 = vmatpush1.msra.mxu0 0.0
  %1625 = vmatprep.subr.mxu0 0.0
  %1626 = vmatpush1.msra.mxu0 0.0
  %1627 = vmatprep.subr.mxu0 0.0
  %1628 = vmatpush1.msra.mxu0 0.0
  %1629 = vmatprep.subr.mxu0 0.0
  %1630 = vmatpush1.msra.mxu0 0.0
  %1631 = vmatprep.subr.mxu0 0.0
  %1632 = vmatpush1.msra.mxu0 0.0
  %1633 = vmatprep.subr.mxu0 0.0
  %1634 = vmatpush1.msra.mxu0 0.0
  %1635 = vmatprep.subr.mxu0 0.0
  %1636 = vmatpush1.msra.mxu0 0.0
  %1637 = vmatprep.subr.mxu0 0.0
  %1638 = vmatpush1.msra.mxu0 0.0
  %1639 = vmatprep.subr.mxu0 0.0
  %1640 = vmatpush1.msra.mxu0 0.0
  %1641 = vmatprep.subr.mxu0 0.0
  %1642 = vmatpush1.msra.mxu0 0.0
  %1643 = vmatprep.subr.mxu0 0.0
  %1644 = vmatpush1.msra.mxu0 0.0
  %1645 = vmatprep.subr.mxu0 0.0
  %1646 = vmatpush1.msra.mxu0 0.0
  %1647 = vmatprep.subr.mxu0 0.0
  %1648 = vmatpush1.msra.mxu0 0.0
  %1649 = vmatprep.subr.mxu0 0.0
  %1650 = vmatpush1.msra.mxu0 0.0
  %1651 = vmatprep.subr.mxu0 0.0
  %1652 = vmatpush1.msra.mxu0 0.0
  %1653 = vmatprep.subr.mxu0 0.0
  %1654 = vmatpush1.msra.mxu0 0.0
  %1655 = vmatprep.subr.mxu0 0.0
  %1656 = vmatpush1.msra.mxu0 0.0
  %1657 = vmatprep.subr.mxu0 0.0
  %1658 = vmatpush1.msra.mxu0 0.0
  %1659 = vmatprep.subr.mxu0 0.0
  %1660 = vmatpush1.msra.mxu0 0.0
  %1661 = vmatprep.mubr.f32.mxu0 0.0
  %1662 = vmatmul.mubr.f32.gmra.mrb[0].mxu0 %v1595
  %v1663 = vpop.f32.mrb[0].mxu0
  %v1664 = vadd.f32 %v1565, %v1663
  %v1665 = vpop.f32.mrb[0].mxu0
  %1666 = vdwg.mxu0
  %v1667 = vadd.f32 %v1664, %v56
  %v1668 = vxor.u32 %v1667, 2147483648
  %v1669 = vmul.f32 %v1668, 1.442695
  %v1670 = vpow.pop %v1669
  %v1671 = vadd.f32 %v1670, 1.0
  %v1672 = vrcp.pop %v1671
  %v1673 = vmul.f32 1.0, %v1672
  %v1674 = vtanh.pop %v1667
  %v1675 = vmul.f32 %v1673, %v1480
  %1677 = vrot.lane.b32.xlu0 %v1674, 32
  %v1678 = vpop.permute.xlu0 %1677
  %v1680 = vmul.f32 %v1673, %v1678
  %1682 = vrot.lane.b32.xlu0 %v1680, 32
  %v1683 = vpop.permute.xlu0 %1682
  %v1685 = vadd.f32 %v1675, %v1683
  %v1686 = vtanh.pop %v1685
  %1688 = vrot.lane.b32.xlu0 %v1686, 32
  %v1689 = vpop.permute.xlu0 %1688
  %v1691 = vmul.f32 %v1673, %v1689
  %1694 = vrot.lane.b32.xlu0 %v1691, 96
  %v1695 = vpop.permute.xlu0 %1694
  %v1697 = vsel %vm159, %v1594, %v1695
  %v1699 = vsel %vm262, %v1697, 0
  %1701 = vmatprep.subr.mxu0 %v28
  %1702 = vmatpush1.msra.mxu0 %v27
  %1703 = vmatprep.subr.mxu0 %v30
  %1704 = vmatpush1.msra.mxu0 %v29
  %1705 = vmatprep.subr.mxu0 %v32
  %1706 = vmatpush1.msra.mxu0 %v31
  %1707 = vmatprep.subr.mxu0 %v34
  %1708 = vmatpush1.msra.mxu0 %v33
  %1709 = vmatprep.subr.mxu0 %v36
  %1710 = vmatpush1.msra.mxu0 %v35
  %1711 = vmatprep.subr.mxu0 %v38
  %1712 = vmatpush1.msra.mxu0 %v37
  %1713 = vmatprep.subr.mxu0 %v40
  %1714 = vmatpush1.msra.mxu0 %v39
  %1715 = vmatprep.subr.mxu0 %v42
  %1716 = vmatpush1.msra.mxu0 %v41
  %1717 = vmatprep.subr.mxu0 0.0
  %1718 = vmatpush1.msra.mxu0 0.0
  %1719 = vmatprep.subr.mxu0 0.0
  %1720 = vmatpush1.msra.mxu0 0.0
  %1721 = vmatprep.subr.mxu0 0.0
  %1722 = vmatpush1.msra.mxu0 0.0
  %1723 = vmatprep.subr.mxu0 0.0
  %1724 = vmatpush1.msra.mxu0 0.0
  %1725 = vmatprep.subr.mxu0 0.0
  %1726 = vmatpush1.msra.mxu0 0.0
  %1727 = vmatprep.subr.mxu0 0.0
  %1728 = vmatpush1.msra.mxu0 0.0
  %1729 = vmatprep.subr.mxu0 0.0
  %1730 = vmatpush1.msra.mxu0 0.0
  %1731 = vmatprep.subr.mxu0 0.0
  %1732 = vmatpush1.msra.mxu0 0.0
  %1733 = vmatprep.subr.mxu0 0.0
  %1734 = vmatpush1.msra.mxu0 0.0
  %1735 = vmatprep.subr.mxu0 0.0
  %1736 = vmatpush1.msra.mxu0 0.0
  %1737 = vmatprep.subr.mxu0 0.0
  %1738 = vmatpush1.msra.mxu0 0.0
  %1739 = vmatprep.subr.mxu0 0.0
  %1740 = vmatpush1.msra.mxu0 0.0
  %1741 = vmatprep.subr.mxu0 0.0
  %1742 = vmatpush1.msra.mxu0 0.0
  %1743 = vmatprep.subr.mxu0 0.0
  %1744 = vmatpush1.msra.mxu0 0.0
  %1745 = vmatprep.subr.mxu0 0.0
  %1746 = vmatpush1.msra.mxu0 0.0
  %1747 = vmatprep.subr.mxu0 0.0
  %1748 = vmatpush1.msra.mxu0 0.0
  %1749 = vmatprep.subr.mxu0 0.0
  %1750 = vmatpush1.msra.mxu0 0.0
  %1751 = vmatprep.subr.mxu0 0.0
  %1752 = vmatpush1.msra.mxu0 0.0
  %1753 = vmatprep.subr.mxu0 0.0
  %1754 = vmatpush1.msra.mxu0 0.0
  %1755 = vmatprep.subr.mxu0 0.0
  %1756 = vmatpush1.msra.mxu0 0.0
  %1757 = vmatprep.subr.mxu0 0.0
  %1758 = vmatpush1.msra.mxu0 0.0
  %1759 = vmatprep.subr.mxu0 0.0
  %1760 = vmatpush1.msra.mxu0 0.0
  %1761 = vmatprep.subr.mxu0 0.0
  %1762 = vmatpush1.msra.mxu0 0.0
  %1763 = vmatprep.subr.mxu0 0.0
  %1764 = vmatpush1.msra.mxu0 0.0
  %1765 = vmatprep.mubr.f32.mxu0 0.0
  %1766 = vmatmul.mubr.f32.gmra.mrb[0].mxu0 %v1699
  %v1767 = vpop.f32.mrb[0].mxu0
  %v1768 = vadd.f32 0.0, %v1767
  %v1769 = vpop.f32.mrb[0].mxu0
  %v1770 = vadd.f32 0.0, %v1769
  %1771 = vdwg.mxu0
  %v1772 = vadd.f32 %v1768, %v51
  %v1773 = vxor.u32 %v1772, 2147483648
  %v1774 = vmul.f32 %v1773, 1.442695
  %v1775 = vpow.pop %v1774
  %v1776 = vadd.f32 %v1775, 1.0
  %v1777 = vrcp.pop %v1776
  %v1778 = vmul.f32 1.0, %v1777
  %v1779 = vtanh.pop %v1772
  %v1780 = vmul.f32 %v1778, %v1585
  %1782 = vrot.lane.b32.xlu0 %v1779, 32
  %v1783 = vpop.permute.xlu0 %1782
  %v1785 = vmul.f32 %v1778, %v1783
  %1787 = vrot.lane.b32.xlu0 %v1785, 32
  %v1788 = vpop.permute.xlu0 %1787
  %v1790 = vadd.f32 %v1780, %v1788
  %v1791 = vtanh.pop %v1790
  %1793 = vrot.lane.b32.xlu0 %v1791, 32
  %v1794 = vpop.permute.xlu0 %1793
  %v1796 = vmul.f32 %v1778, %v1794
  %1798 = vrot.lane.b32.xlu0 %v1796, 64
  %v1799 = vpop.permute.xlu0 %1798
  %v1800 = vsel %vm159, %v1799, 0
  %1802 = vmatprep.subr.mxu0 0.0
  %1803 = vmatpush1.msra.mxu0 %v43
  %1804 = vmatprep.subr.mxu0 0.0
  %1805 = vmatpush1.msra.mxu0 %v44
  %1806 = vmatprep.subr.mxu0 0.0
  %1807 = vmatpush1.msra.mxu0 %v45
  %1808 = vmatprep.subr.mxu0 0.0
  %1809 = vmatpush1.msra.mxu0 %v46
  %1810 = vmatprep.subr.mxu0 0.0
  %1811 = vmatpush1.msra.mxu0 0.0
  %1812 = vmatprep.subr.mxu0 0.0
  %1813 = vmatpush1.msra.mxu0 0.0
  %1814 = vmatprep.subr.mxu0 0.0
  %1815 = vmatpush1.msra.mxu0 0.0
  %1816 = vmatprep.subr.mxu0 0.0
  %1817 = vmatpush1.msra.mxu0 0.0
  %1818 = vmatprep.subr.mxu0 0.0
  %1819 = vmatpush1.msra.mxu0 0.0
  %1820 = vmatprep.subr.mxu0 0.0
  %1821 = vmatpush1.msra.mxu0 0.0
  %1822 = vmatprep.subr.mxu0 0.0
  %1823 = vmatpush1.msra.mxu0 0.0
  %1824 = vmatprep.subr.mxu0 0.0
  %1825 = vmatpush1.msra.mxu0 0.0
  %1826 = vmatprep.subr.mxu0 0.0
  %1827 = vmatpush1.msra.mxu0 0.0
  %1828 = vmatprep.subr.mxu0 0.0
  %1829 = vmatpush1.msra.mxu0 0.0
  %1830 = vmatprep.subr.mxu0 0.0
  %1831 = vmatpush1.msra.mxu0 0.0
  %1832 = vmatprep.subr.mxu0 0.0
  %1833 = vmatpush1.msra.mxu0 0.0
  %1834 = vmatprep.subr.mxu0 0.0
  %1835 = vmatpush1.msra.mxu0 0.0
  %1836 = vmatprep.subr.mxu0 0.0
  %1837 = vmatpush1.msra.mxu0 0.0
  %1838 = vmatprep.subr.mxu0 0.0
  %1839 = vmatpush1.msra.mxu0 0.0
  %1840 = vmatprep.subr.mxu0 0.0
  %1841 = vmatpush1.msra.mxu0 0.0
  %1842 = vmatprep.subr.mxu0 0.0
  %1843 = vmatpush1.msra.mxu0 0.0
  %1844 = vmatprep.subr.mxu0 0.0
  %1845 = vmatpush1.msra.mxu0 0.0
  %1846 = vmatprep.subr.mxu0 0.0
  %1847 = vmatpush1.msra.mxu0 0.0
  %1848 = vmatprep.subr.mxu0 0.0
  %1849 = vmatpush1.msra.mxu0 0.0
  %1850 = vmatprep.subr.mxu0 0.0
  %1851 = vmatpush1.msra.mxu0 0.0
  %1852 = vmatprep.subr.mxu0 0.0
  %1853 = vmatpush1.msra.mxu0 0.0
  %1854 = vmatprep.subr.mxu0 0.0
  %1855 = vmatpush1.msra.mxu0 0.0
  %1856 = vmatprep.subr.mxu0 0.0
  %1857 = vmatpush1.msra.mxu0 0.0
  %1858 = vmatprep.subr.mxu0 0.0
  %1859 = vmatpush1.msra.mxu0 0.0
  %1860 = vmatprep.subr.mxu0 0.0
  %1861 = vmatpush1.msra.mxu0 0.0
  %1862 = vmatprep.subr.mxu0 0.0
  %1863 = vmatpush1.msra.mxu0 0.0
  %1864 = vmatprep.subr.mxu0 0.0
  %1865 = vmatpush1.msra.mxu0 0.0
  %1866 = vmatprep.mubr.f32.mxu0 0.0
  %1867 = vmatmul.mubr.f32.gmra.mrb[0].mxu0 %v1800
  %v1868 = vpop.f32.mrb[0].mxu0
  %v1869 = vadd.f32 %v1770, %v1868
  %v1870 = vpop.f32.mrb[0].mxu0
  %1871 = vdwg.mxu0
  %v1872 = vadd.f32 %v1869, %v56
  %v1873 = vxor.u32 %v1872, 2147483648
  %v1874 = vmul.f32 %v1873, 1.442695
  %v1875 = vpow.pop %v1874
  %v1876 = vadd.f32 %v1875, 1.0
  %v1877 = vrcp.pop %v1876
  %v1878 = vmul.f32 1.0, %v1877
  %v1879 = vtanh.pop %v1872
  %v1880 = vmul.f32 %v1878, %v1685
  %1882 = vrot.lane.b32.xlu0 %v1879, 32
  %v1883 = vpop.permute.xlu0 %1882
  %v1885 = vmul.f32 %v1878, %v1883
  %1887 = vrot.lane.b32.xlu0 %v1885, 32
  %v1888 = vpop.permute.xlu0 %1887
  %v1890 = vadd.f32 %v1880, %v1888
  %v1891 = vtanh.pop %v1890
  %1893 = vrot.lane.b32.xlu0 %v1891, 32
  %v1894 = vpop.permute.xlu0 %1893
  %v1896 = vmul.f32 %v1878, %v1894
  %1899 = vrot.lane.b32.xlu0 %v1896, 96
  %v1900 = vpop.permute.xlu0 %1899
  %v1902 = vsel %vm159, %v1799, %v1900
  %v1904 = vsel %vm262, %v1902, 0
  %1906 = vmatprep.subr.mxu0 %v28
  %1907 = vmatpush1.msra.mxu0 %v27
  %1908 = vmatprep.subr.mxu0 %v30
  %1909 = vmatpush1.msra.mxu0 %v29
  %1910 = vmatprep.subr.mxu0 %v32
  %1911 = vmatpush1.msra.mxu0 %v31
  %1912 = vmatprep.subr.mxu0 %v34
  %1913 = vmatpush1.msra.mxu0 %v33
  %1914 = vmatprep.subr.mxu0 %v36
  %1915 = vmatpush1.msra.mxu0 %v35
  %1916 = vmatprep.subr.mxu0 %v38
  %1917 = vmatpush1.msra.mxu0 %v37
  %1918 = vmatprep.subr.mxu0 %v40
  %1919 = vmatpush1.msra.mxu0 %v39
  %1920 = vmatprep.subr.mxu0 %v42
  %1921 = vmatpush1.msra.mxu0 %v41
  %1922 = vmatprep.subr.mxu0 0.0
  %1923 = vmatpush1.msra.mxu0 0.0
  %1924 = vmatprep.subr.mxu0 0.0
  %1925 = vmatpush1.msra.mxu0 0.0
  %1926 = vmatprep.subr.mxu0 0.0
  %1927 = vmatpush1.msra.mxu0 0.0
  %1928 = vmatprep.subr.mxu0 0.0
  %1929 = vmatpush1.msra.mxu0 0.0
  %1930 = vmatprep.subr.mxu0 0.0
  %1931 = vmatpush1.msra.mxu0 0.0
  %1932 = vmatprep.subr.mxu0 0.0
  %1933 = vmatpush1.msra.mxu0 0.0
  %1934 = vmatprep.subr.mxu0 0.0
  %1935 = vmatpush1.msra.mxu0 0.0
  %1936 = vmatprep.subr.mxu0 0.0
  %1937 = vmatpush1.msra.mxu0 0.0
  %1938 = vmatprep.subr.mxu0 0.0
  %1939 = vmatpush1.msra.mxu0 0.0
  %1940 = vmatprep.subr.mxu0 0.0
  %1941 = vmatpush1.msra.mxu0 0.0
  %1942 = vmatprep.subr.mxu0 0.0
  %1943 = vmatpush1.msra.mxu0 0.0
  %1944 = vmatprep.subr.mxu0 0.0
  %1945 = vmatpush1.msra.mxu0 0.0
  %1946 = vmatprep.subr.mxu0 0.0
  %1947 = vmatpush1.msra.mxu0 0.0
  %1948 = vmatprep.subr.mxu0 0.0
  %1949 = vmatpush1.msra.mxu0 0.0
  %1950 = vmatprep.subr.mxu0 0.0
  %1951 = vmatpush1.msra.mxu0 0.0
  %1952 = vmatprep.subr.mxu0 0.0
  %1953 = vmatpush1.msra.mxu0 0.0
  %1954 = vmatprep.subr.mxu0 0.0
  %1955 = vmatpush1.msra.mxu0 0.0
  %1956 = vmatprep.subr.mxu0 0.0
  %1957 = vmatpush1.msra.mxu0 0.0
  %1958 = vmatprep.subr.mxu0 0.0
  %1959 = vmatpush1.msra.mxu0 0.0
  %1960 = vmatprep.subr.mxu0 0.0
  %1961 = vmatpush1.msra.mxu0 0.0
  %1962 = vmatprep.subr.mxu0 0.0
  %1963 = vmatpush1.msra.mxu0 0.0
  %1964 = vmatprep.subr.mxu0 0.0
  %1965 = vmatpush1.msra.mxu0 0.0
  %1966 = vmatprep.subr.mxu0 0.0
  %1967 = vmatpush1.msra.mxu0 0.0
  %1968 = vmatprep.subr.mxu0 0.0
  %1969 = vmatpush1.msra.mxu0 0.0
  %1970 = vmatprep.mubr.f32.mxu0 0.0
  %1971 = vmatmul.mubr.f32.gmra.mrb[0].mxu0 %v1904
  %v1972 = vpop.f32.mrb[0].mxu0
  %v1973 = vadd.f32 0.0, %v1972
  %v1974 = vpop.f32.mrb[0].mxu0
  %v1975 = vadd.f32 0.0, %v1974
  %1976 = vdwg.mxu0
  %v1977 = vadd.f32 %v1973, %v51
  %v1978 = vxor.u32 %v1977, 2147483648
  %v1979 = vmul.f32 %v1978, 1.442695
  %v1980 = vpow.pop %v1979
  %v1981 = vadd.f32 %v1980, 1.0
  %v1982 = vrcp.pop %v1981
  %v1983 = vmul.f32 1.0, %v1982
  %v1984 = vtanh.pop %v1977
  %v1985 = vmul.f32 %v1983, %v1790
  %1987 = vrot.lane.b32.xlu0 %v1984, 32
  %v1988 = vpop.permute.xlu0 %1987
  %v1990 = vmul.f32 %v1983, %v1988
  %1992 = vrot.lane.b32.xlu0 %v1990, 32
  %v1993 = vpop.permute.xlu0 %1992
  %v1995 = vadd.f32 %v1985, %v1993
  %v1996 = vtanh.pop %v1995
  %1998 = vrot.lane.b32.xlu0 %v1996, 32
  %v1999 = vpop.permute.xlu0 %1998
  %v2001 = vmul.f32 %v1983, %v1999
  %2003 = vrot.lane.b32.xlu0 %v2001, 64
  %v2004 = vpop.permute.xlu0 %2003
  %v2005 = vsel %vm159, %v2004, 0
  %2007 = vmatprep.subr.mxu0 0.0
  %2008 = vmatpush1.msra.mxu0 %v43
  %2009 = vmatprep.subr.mxu0 0.0
  %2010 = vmatpush1.msra.mxu0 %v44
  %2011 = vmatprep.subr.mxu0 0.0
  %2012 = vmatpush1.msra.mxu0 %v45
  %2013 = vmatprep.subr.mxu0 0.0
  %2014 = vmatpush1.msra.mxu0 %v46
  %2015 = vmatprep.subr.mxu0 0.0
  %2016 = vmatpush1.msra.mxu0 0.0
  %2017 = vmatprep.subr.mxu0 0.0
  %2018 = vmatpush1.msra.mxu0 0.0
  %2019 = vmatprep.subr.mxu0 0.0
  %2020 = vmatpush1.msra.mxu0 0.0
  %2021 = vmatprep.subr.mxu0 0.0
  %2022 = vmatpush1.msra.mxu0 0.0
  %2023 = vmatprep.subr.mxu0 0.0
  %2024 = vmatpush1.msra.mxu0 0.0
  %2025 = vmatprep.subr.mxu0 0.0
  %2026 = vmatpush1.msra.mxu0 0.0
  %2027 = vmatprep.subr.mxu0 0.0
  %2028 = vmatpush1.msra.mxu0 0.0
  %2029 = vmatprep.subr.mxu0 0.0
  %2030 = vmatpush1.msra.mxu0 0.0
  %2031 = vmatprep.subr.mxu0 0.0
  %2032 = vmatpush1.msra.mxu0 0.0
  %2033 = vmatprep.subr.mxu0 0.0
  %2034 = vmatpush1.msra.mxu0 0.0
  %2035 = vmatprep.subr.mxu0 0.0
  %2036 = vmatpush1.msra.mxu0 0.0
  %2037 = vmatprep.subr.mxu0 0.0
  %2038 = vmatpush1.msra.mxu0 0.0
  %2039 = vmatprep.subr.mxu0 0.0
  %2040 = vmatpush1.msra.mxu0 0.0
  %2041 = vmatprep.subr.mxu0 0.0
  %2042 = vmatpush1.msra.mxu0 0.0
  %2043 = vmatprep.subr.mxu0 0.0
  %2044 = vmatpush1.msra.mxu0 0.0
  %2045 = vmatprep.subr.mxu0 0.0
  %2046 = vmatpush1.msra.mxu0 0.0
  %2047 = vmatprep.subr.mxu0 0.0
  %2048 = vmatpush1.msra.mxu0 0.0
  %2049 = vmatprep.subr.mxu0 0.0
  %2050 = vmatpush1.msra.mxu0 0.0
  %2051 = vmatprep.subr.mxu0 0.0
  %2052 = vmatpush1.msra.mxu0 0.0
  %2053 = vmatprep.subr.mxu0 0.0
  %2054 = vmatpush1.msra.mxu0 0.0
  %2055 = vmatprep.subr.mxu0 0.0
  %2056 = vmatpush1.msra.mxu0 0.0
  %2057 = vmatprep.subr.mxu0 0.0
  %2058 = vmatpush1.msra.mxu0 0.0
  %2059 = vmatprep.subr.mxu0 0.0
  %2060 = vmatpush1.msra.mxu0 0.0
  %2061 = vmatprep.subr.mxu0 0.0
  %2062 = vmatpush1.msra.mxu0 0.0
  %2063 = vmatprep.subr.mxu0 0.0
  %2064 = vmatpush1.msra.mxu0 0.0
  %2065 = vmatprep.subr.mxu0 0.0
  %2066 = vmatpush1.msra.mxu0 0.0
  %2067 = vmatprep.subr.mxu0 0.0
  %2068 = vmatpush1.msra.mxu0 0.0
  %2069 = vmatprep.subr.mxu0 0.0
  %2070 = vmatpush1.msra.mxu0 0.0
  %2071 = vmatprep.mubr.f32.mxu0 0.0
  %2072 = vmatmul.mubr.f32.gmra.mrb[0].mxu0 %v2005
  %v2073 = vpop.f32.mrb[0].mxu0
  %v2074 = vadd.f32 %v1975, %v2073
  %v2075 = vpop.f32.mrb[0].mxu0
  %2076 = vdwg.mxu0
  %v2077 = vadd.f32 %v2074, %v56
  %v2078 = vxor.u32 %v2077, 2147483648
  %v2079 = vmul.f32 %v2078, 1.442695
  %v2080 = vpow.pop %v2079
  %v2081 = vadd.f32 %v2080, 1.0
  %v2082 = vrcp.pop %v2081
  %v2083 = vmul.f32 1.0, %v2082
  %v2084 = vtanh.pop %v2077
  %v2085 = vmul.f32 %v2083, %v1890
  %2087 = vrot.lane.b32.xlu0 %v2084, 32
  %v2088 = vpop.permute.xlu0 %2087
  %v2090 = vmul.f32 %v2083, %v2088
  %2092 = vrot.lane.b32.xlu0 %v2090, 32
  %v2093 = vpop.permute.xlu0 %2092
  %v2095 = vadd.f32 %v2085, %v2093
  %v2096 = vtanh.pop %v2095
  %2098 = vrot.lane.b32.xlu0 %v2096, 32
  %v2099 = vpop.permute.xlu0 %2098
  %v2101 = vmul.f32 %v2083, %v2099
  %2104 = vrot.lane.b32.xlu0 %v2101, 96
  %v2105 = vpop.permute.xlu0 %2104
  %v2107 = vsel %vm159, %v2004, %v2105
  %v2109 = vsel %vm262, %v2107, 0
  %2111 = vmatprep.subr.mxu0 %v28
  %2112 = vmatpush1.msra.mxu0 %v27
  %2113 = vmatprep.subr.mxu0 %v30
  %2114 = vmatpush1.msra.mxu0 %v29
  %2115 = vmatprep.subr.mxu0 %v32
  %2116 = vmatpush1.msra.mxu0 %v31
  %2117 = vmatprep.subr.mxu0 %v34
  %2118 = vmatpush1.msra.mxu0 %v33
  %2119 = vmatprep.subr.mxu0 %v36
  %2120 = vmatpush1.msra.mxu0 %v35
  %2121 = vmatprep.subr.mxu0 %v38
  %2122 = vmatpush1.msra.mxu0 %v37
  %2123 = vmatprep.subr.mxu0 %v40
  %2124 = vmatpush1.msra.mxu0 %v39
  %2125 = vmatprep.subr.mxu0 %v42
  %2126 = vmatpush1.msra.mxu0 %v41
  %2127 = vmatprep.subr.mxu0 0.0
  %2128 = vmatpush1.msra.mxu0 0.0
  %2129 = vmatprep.subr.mxu0 0.0
  %2130 = vmatpush1.msra.mxu0 0.0
  %2131 = vmatprep.subr.mxu0 0.0
  %2132 = vmatpush1.msra.mxu0 0.0
  %2133 = vmatprep.subr.mxu0 0.0
  %2134 = vmatpush1.msra.mxu0 0.0
  %2135 = vmatprep.subr.mxu0 0.0
  %2136 = vmatpush1.msra.mxu0 0.0
  %2137 = vmatprep.subr.mxu0 0.0
  %2138 = vmatpush1.msra.mxu0 0.0
  %2139 = vmatprep.subr.mxu0 0.0
  %2140 = vmatpush1.msra.mxu0 0.0
  %2141 = vmatprep.subr.mxu0 0.0
  %2142 = vmatpush1.msra.mxu0 0.0
  %2143 = vmatprep.subr.mxu0 0.0
  %2144 = vmatpush1.msra.mxu0 0.0
  %2145 = vmatprep.subr.mxu0 0.0
  %2146 = vmatpush1.msra.mxu0 0.0
  %2147 = vmatprep.subr.mxu0 0.0
  %2148 = vmatpush1.msra.mxu0 0.0
  %2149 = vmatprep.subr.mxu0 0.0
  %2150 = vmatpush1.msra.mxu0 0.0
  %2151 = vmatprep.subr.mxu0 0.0
  %2152 = vmatpush1.msra.mxu0 0.0
  %2153 = vmatprep.subr.mxu0 0.0
  %2154 = vmatpush1.msra.mxu0 0.0
  %2155 = vmatprep.subr.mxu0 0.0
  %2156 = vmatpush1.msra.mxu0 0.0
  %2157 = vmatprep.subr.mxu0 0.0
  %2158 = vmatpush1.msra.mxu0 0.0
  %2159 = vmatprep.subr.mxu0 0.0
  %2160 = vmatpush1.msra.mxu0 0.0
  %2161 = vmatprep.subr.mxu0 0.0
  %2162 = vmatpush1.msra.mxu0 0.0
  %2163 = vmatprep.subr.mxu0 0.0
  %2164 = vmatpush1.msra.mxu0 0.0
  %2165 = vmatprep.subr.mxu0 0.0
  %2166 = vmatpush1.msra.mxu0 0.0
  %2167 = vmatprep.subr.mxu0 0.0
  %2168 = vmatpush1.msra.mxu0 0.0
  %2169 = vmatprep.subr.mxu0 0.0
  %2170 = vmatpush1.msra.mxu0 0.0
  %2171 = vmatprep.subr.mxu0 0.0
  %2172 = vmatpush1.msra.mxu0 0.0
  %2173 = vmatprep.subr.mxu0 0.0
  %2174 = vmatpush1.msra.mxu0 0.0
  %2175 = vmatprep.mubr.f32.mxu0 0.0
  %2176 = vmatmul.mubr.f32.gmra.mrb[0].mxu0 %v2109
  %v2177 = vpop.f32.mrb[0].mxu0
  %v2178 = vadd.f32 0.0, %v2177
  %v2179 = vpop.f32.mrb[0].mxu0
  %v2180 = vadd.f32 0.0, %v2179
  %2181 = vdwg.mxu0
  %v2182 = vadd.f32 %v2178, %v51
  %v2183 = vxor.u32 %v2182, 2147483648
  %v2184 = vmul.f32 %v2183, 1.442695
  %v2185 = vpow.pop %v2184
  %v2186 = vadd.f32 %v2185, 1.0
  %v2187 = vrcp.pop %v2186
  %v2188 = vmul.f32 1.0, %v2187
  %v2189 = vtanh.pop %v2182
  %v2190 = vmul.f32 %v2188, %v1995
  %2192 = vrot.lane.b32.xlu0 %v2189, 32
  %v2193 = vpop.permute.xlu0 %2192
  %v2195 = vmul.f32 %v2188, %v2193
  %2197 = vrot.lane.b32.xlu0 %v2195, 32
  %v2198 = vpop.permute.xlu0 %2197
  %v2200 = vadd.f32 %v2190, %v2198
  %v2201 = vtanh.pop %v2200
  %2203 = vrot.lane.b32.xlu0 %v2201, 32
  %v2204 = vpop.permute.xlu0 %2203
  %v2206 = vmul.f32 %v2188, %v2204
  %2208 = vrot.lane.b32.xlu0 %v2206, 64
  %v2209 = vpop.permute.xlu0 %2208
  %v2210 = vsel %vm159, %v2209, 0
  %2212 = vmatprep.subr.mxu0 0.0
  %2213 = vmatpush1.msra.mxu0 %v43
  %2214 = vmatprep.subr.mxu0 0.0
  %2215 = vmatpush1.msra.mxu0 %v44
  %2216 = vmatprep.subr.mxu0 0.0
  %2217 = vmatpush1.msra.mxu0 %v45
  %2218 = vmatprep.subr.mxu0 0.0
  %2219 = vmatpush1.msra.mxu0 %v46
  %2220 = vmatprep.subr.mxu0 0.0
  %2221 = vmatpush1.msra.mxu0 0.0
  %2222 = vmatprep.subr.mxu0 0.0
  %2223 = vmatpush1.msra.mxu0 0.0
  %2224 = vmatprep.subr.mxu0 0.0
  %2225 = vmatpush1.msra.mxu0 0.0
  %2226 = vmatprep.subr.mxu0 0.0
  %2227 = vmatpush1.msra.mxu0 0.0
  %2228 = vmatprep.subr.mxu0 0.0
  %2229 = vmatpush1.msra.mxu0 0.0
  %2230 = vmatprep.subr.mxu0 0.0
  %2231 = vmatpush1.msra.mxu0 0.0
  %2232 = vmatprep.subr.mxu0 0.0
  %2233 = vmatpush1.msra.mxu0 0.0
  %2234 = vmatprep.subr.mxu0 0.0
  %2235 = vmatpush1.msra.mxu0 0.0
  %2236 = vmatprep.subr.mxu0 0.0
  %2237 = vmatpush1.msra.mxu0 0.0
  %2238 = vmatprep.subr.mxu0 0.0
  %2239 = vmatpush1.msra.mxu0 0.0
  %2240 = vmatprep.subr.mxu0 0.0
  %2241 = vmatpush1.msra.mxu0 0.0
  %2242 = vmatprep.subr.mxu0 0.0
  %2243 = vmatpush1.msra.mxu0 0.0
  %2244 = vmatprep.subr.mxu0 0.0
  %2245 = vmatpush1.msra.mxu0 0.0
  %2246 = vmatprep.subr.mxu0 0.0
  %2247 = vmatpush1.msra.mxu0 0.0
  %2248 = vmatprep.subr.mxu0 0.0
  %2249 = vmatpush1.msra.mxu0 0.0
  %2250 = vmatprep.subr.mxu0 0.0
  %2251 = vmatpush1.msra.mxu0 0.0
  %2252 = vmatprep.subr.mxu0 0.0
  %2253 = vmatpush1.msra.mxu0 0.0
  %2254 = vmatprep.subr.mxu0 0.0
  %2255 = vmatpush1.msra.mxu0 0.0
  %2256 = vmatprep.subr.mxu0 0.0
  %2257 = vmatpush1.msra.mxu0 0.0
  %2258 = vmatprep.subr.mxu0 0.0
  %2259 = vmatpush1.msra.mxu0 0.0
  %2260 = vmatprep.subr.mxu0 0.0
  %2261 = vmatpush1.msra.mxu0 0.0
  %2262 = vmatprep.subr.mxu0 0.0
  %2263 = vmatpush1.msra.mxu0 0.0
  %2264 = vmatprep.subr.mxu0 0.0
  %2265 = vmatpush1.msra.mxu0 0.0
  %2266 = vmatprep.subr.mxu0 0.0
  %2267 = vmatpush1.msra.mxu0 0.0
  %2268 = vmatprep.subr.mxu0 0.0
  %2269 = vmatpush1.msra.mxu0 0.0
  %2270 = vmatprep.subr.mxu0 0.0
  %2271 = vmatpush1.msra.mxu0 0.0
  %2272 = vmatprep.subr.mxu0 0.0
  %2273 = vmatpush1.msra.mxu0 0.0
  %2274 = vmatprep.subr.mxu0 0.0
  %2275 = vmatpush1.msra.mxu0 0.0
  %2276 = vmatprep.mubr.f32.mxu0 0.0
  %2277 = vmatmul.mubr.f32.gmra.mrb[0].mxu0 %v2210
  %v2278 = vpop.f32.mrb[0].mxu0
  %v2279 = vadd.f32 %v2180, %v2278
  %v2280 = vpop.f32.mrb[0].mxu0
  %2281 = vdwg.mxu0
  %v2282 = vadd.f32 %v2279, %v56
  %v2283 = vxor.u32 %v2282, 2147483648
  %v2284 = vmul.f32 %v2283, 1.442695
  %v2285 = vpow.pop %v2284
  %v2286 = vadd.f32 %v2285, 1.0
  %v2287 = vrcp.pop %v2286
  %v2288 = vmul.f32 1.0, %v2287
  %v2289 = vtanh.pop %v2282
  %v2290 = vmul.f32 %v2288, %v2095
  %2292 = vrot.lane.b32.xlu0 %v2289, 32
  %v2293 = vpop.permute.xlu0 %2292
  %v2295 = vmul.f32 %v2288, %v2293
  %2297 = vrot.lane.b32.xlu0 %v2295, 32
  %v2298 = vpop.permute.xlu0 %2297
  %v2300 = vadd.f32 %v2290, %v2298
  %v2301 = vtanh.pop %v2300
  %2303 = vrot.lane.b32.xlu0 %v2301, 32
  %v2304 = vpop.permute.xlu0 %2303
  %v2306 = vmul.f32 %v2288, %v2304
  %2309 = vrot.lane.b32.xlu0 %v2306, 96
  %v2310 = vpop.permute.xlu0 %2309
  %v2312 = vsel %vm159, %v2209, %v2310
  %v2314 = vsel %vm262, %v2312, 0
  %2316 = vmatprep.subr.mxu0 %v28
  %2317 = vmatpush1.msra.mxu0 %v27
  %2318 = vmatprep.subr.mxu0 %v30
  %2319 = vmatpush1.msra.mxu0 %v29
  %2320 = vmatprep.subr.mxu0 %v32
  %2321 = vmatpush1.msra.mxu0 %v31
  %2322 = vmatprep.subr.mxu0 %v34
  %2323 = vmatpush1.msra.mxu0 %v33
  %2324 = vmatprep.subr.mxu0 %v36
  %2325 = vmatpush1.msra.mxu0 %v35
  %2326 = vmatprep.subr.mxu0 %v38
  %2327 = vmatpush1.msra.mxu0 %v37
  %2328 = vmatprep.subr.mxu0 %v40
  %2329 = vmatpush1.msra.mxu0 %v39
  %2330 = vmatprep.subr.mxu0 %v42
  %2331 = vmatpush1.msra.mxu0 %v41
  %2332 = vmatprep.subr.mxu0 0.0
  %2333 = vmatpush1.msra.mxu0 0.0
  %2334 = vmatprep.subr.mxu0 0.0
  %2335 = vmatpush1.msra.mxu0 0.0
  %2336 = vmatprep.subr.mxu0 0.0
  %2337 = vmatpush1.msra.mxu0 0.0
  %2338 = vmatprep.subr.mxu0 0.0
  %2339 = vmatpush1.msra.mxu0 0.0
  %2340 = vmatprep.subr.mxu0 0.0
  %2341 = vmatpush1.msra.mxu0 0.0
  %2342 = vmatprep.subr.mxu0 0.0
  %2343 = vmatpush1.msra.mxu0 0.0
  %2344 = vmatprep.subr.mxu0 0.0
  %2345 = vmatpush1.msra.mxu0 0.0
  %2346 = vmatprep.subr.mxu0 0.0
  %2347 = vmatpush1.msra.mxu0 0.0
  %2348 = vmatprep.subr.mxu0 0.0
  %2349 = vmatpush1.msra.mxu0 0.0
  %2350 = vmatprep.subr.mxu0 0.0
  %2351 = vmatpush1.msra.mxu0 0.0
  %2352 = vmatprep.subr.mxu0 0.0
  %2353 = vmatpush1.msra.mxu0 0.0
  %2354 = vmatprep.subr.mxu0 0.0
  %2355 = vmatpush1.msra.mxu0 0.0
  %2356 = vmatprep.subr.mxu0 0.0
  %2357 = vmatpush1.msra.mxu0 0.0
  %2358 = vmatprep.subr.mxu0 0.0
  %2359 = vmatpush1.msra.mxu0 0.0
  %2360 = vmatprep.subr.mxu0 0.0
  %2361 = vmatpush1.msra.mxu0 0.0
  %2362 = vmatprep.subr.mxu0 0.0
  %2363 = vmatpush1.msra.mxu0 0.0
  %2364 = vmatprep.subr.mxu0 0.0
  %2365 = vmatpush1.msra.mxu0 0.0
  %2366 = vmatprep.subr.mxu0 0.0
  %2367 = vmatpush1.msra.mxu0 0.0
  %2368 = vmatprep.subr.mxu0 0.0
  %2369 = vmatpush1.msra.mxu0 0.0
  %2370 = vmatprep.subr.mxu0 0.0
  %2371 = vmatpush1.msra.mxu0 0.0
  %2372 = vmatprep.subr.mxu0 0.0
  %2373 = vmatpush1.msra.mxu0 0.0
  %2374 = vmatprep.subr.mxu0 0.0
  %2375 = vmatpush1.msra.mxu0 0.0
  %2376 = vmatprep.subr.mxu0 0.0
  %2377 = vmatpush1.msra.mxu0 0.0
  %2378 = vmatprep.subr.mxu0 0.0
  %2379 = vmatpush1.msra.mxu0 0.0
  %2380 = vmatprep.mubr.f32.mxu0 0.0
  %2381 = vmatmul.mubr.f32.gmra.mrb[0].mxu0 %v2314
  %v2382 = vpop.f32.mrb[0].mxu0
  %v2383 = vadd.f32 0.0, %v2382
  %v2384 = vpop.f32.mrb[0].mxu0
  %v2385 = vadd.f32 0.0, %v2384
  %2386 = vdwg.mxu0
  %v2387 = vadd.f32 %v2383, %v51
  %v2388 = vxor.u32 %v2387, 2147483648
  %v2389 = vmul.f32 %v2388, 1.442695
  %v2390 = vpow.pop %v2389
  %v2391 = vadd.f32 %v2390, 1.0
  %v2392 = vrcp.pop %v2391
  %v2393 = vmul.f32 1.0, %v2392
  %v2394 = vtanh.pop %v2387
  %v2395 = vmul.f32 %v2393, %v2200
  %2397 = vrot.lane.b32.xlu0 %v2394, 32
  %v2398 = vpop.permute.xlu0 %2397
  %v2400 = vmul.f32 %v2393, %v2398
  %2402 = vrot.lane.b32.xlu0 %v2400, 32
  %v2403 = vpop.permute.xlu0 %2402
  %v2405 = vadd.f32 %v2395, %v2403
  %v2406 = vtanh.pop %v2405
  %2408 = vrot.lane.b32.xlu0 %v2406, 32
  %v2409 = vpop.permute.xlu0 %2408
  %v2411 = vmul.f32 %v2393, %v2409
  %2413 = vrot.lane.b32.xlu0 %v2411, 64
  %v2414 = vpop.permute.xlu0 %2413
  %v2415 = vsel %vm159, %v2414, 0
  %2417 = vmatprep.subr.mxu0 0.0
  %2418 = vmatpush1.msra.mxu0 %v43
  %2419 = vmatprep.subr.mxu0 0.0
  %2420 = vmatpush1.msra.mxu0 %v44
  %2421 = vmatprep.subr.mxu0 0.0
  %2422 = vmatpush1.msra.mxu0 %v45
  %2423 = vmatprep.subr.mxu0 0.0
  %2424 = vmatpush1.msra.mxu0 %v46
  %2425 = vmatprep.subr.mxu0 0.0
  %2426 = vmatpush1.msra.mxu0 0.0
  %2427 = vmatprep.subr.mxu0 0.0
  %2428 = vmatpush1.msra.mxu0 0.0
  %2429 = vmatprep.subr.mxu0 0.0
  %2430 = vmatpush1.msra.mxu0 0.0
  %2431 = vmatprep.subr.mxu0 0.0
  %2432 = vmatpush1.msra.mxu0 0.0
  %2433 = vmatprep.subr.mxu0 0.0
  %2434 = vmatpush1.msra.mxu0 0.0
  %2435 = vmatprep.subr.mxu0 0.0
  %2436 = vmatpush1.msra.mxu0 0.0
  %2437 = vmatprep.subr.mxu0 0.0
  %2438 = vmatpush1.msra.mxu0 0.0
  %2439 = vmatprep.subr.mxu0 0.0
  %2440 = vmatpush1.msra.mxu0 0.0
  %2441 = vmatprep.subr.mxu0 0.0
  %2442 = vmatpush1.msra.mxu0 0.0
  %2443 = vmatprep.subr.mxu0 0.0
  %2444 = vmatpush1.msra.mxu0 0.0
  %2445 = vmatprep.subr.mxu0 0.0
  %2446 = vmatpush1.msra.mxu0 0.0
  %2447 = vmatprep.subr.mxu0 0.0
  %2448 = vmatpush1.msra.mxu0 0.0
  %2449 = vmatprep.subr.mxu0 0.0
  %2450 = vmatpush1.msra.mxu0 0.0
  %2451 = vmatprep.subr.mxu0 0.0
  %2452 = vmatpush1.msra.mxu0 0.0
  %2453 = vmatprep.subr.mxu0 0.0
  %2454 = vmatpush1.msra.mxu0 0.0
  %2455 = vmatprep.subr.mxu0 0.0
  %2456 = vmatpush1.msra.mxu0 0.0
  %2457 = vmatprep.subr.mxu0 0.0
  %2458 = vmatpush1.msra.mxu0 0.0
  %2459 = vmatprep.subr.mxu0 0.0
  %2460 = vmatpush1.msra.mxu0 0.0
  %2461 = vmatprep.subr.mxu0 0.0
  %2462 = vmatpush1.msra.mxu0 0.0
  %2463 = vmatprep.subr.mxu0 0.0
  %2464 = vmatpush1.msra.mxu0 0.0
  %2465 = vmatprep.subr.mxu0 0.0
  %2466 = vmatpush1.msra.mxu0 0.0
  %2467 = vmatprep.subr.mxu0 0.0
  %2468 = vmatpush1.msra.mxu0 0.0
  %2469 = vmatprep.subr.mxu0 0.0
  %2470 = vmatpush1.msra.mxu0 0.0
  %2471 = vmatprep.subr.mxu0 0.0
  %2472 = vmatpush1.msra.mxu0 0.0
  %2473 = vmatprep.subr.mxu0 0.0
  %2474 = vmatpush1.msra.mxu0 0.0
  %2475 = vmatprep.subr.mxu0 0.0
  %2476 = vmatpush1.msra.mxu0 0.0
  %2477 = vmatprep.subr.mxu0 0.0
  %2478 = vmatpush1.msra.mxu0 0.0
  %2479 = vmatprep.subr.mxu0 0.0
  %2480 = vmatpush1.msra.mxu0 0.0
  %2481 = vmatprep.mubr.f32.mxu0 0.0
  %2482 = vmatmul.mubr.f32.gmra.mrb[0].mxu0 %v2415
  %v2483 = vpop.f32.mrb[0].mxu0
  %v2484 = vadd.f32 %v2385, %v2483
  %v2485 = vpop.f32.mrb[0].mxu0
  %2486 = vdwg.mxu0
  %v2487 = vadd.f32 %v2484, %v56
  %v2488 = vxor.u32 %v2487, 2147483648
  %v2489 = vmul.f32 %v2488, 1.442695
  %v2490 = vpow.pop %v2489
  %v2491 = vadd.f32 %v2490, 1.0
  %v2492 = vrcp.pop %v2491
  %v2493 = vmul.f32 1.0, %v2492
  %v2494 = vtanh.pop %v2487
  %v2495 = vmul.f32 %v2493, %v2300
  %2497 = vrot.lane.b32.xlu0 %v2494, 32
  %v2498 = vpop.permute.xlu0 %2497
  %v2500 = vmul.f32 %v2493, %v2498
  %2502 = vrot.lane.b32.xlu0 %v2500, 32
  %v2503 = vpop.permute.xlu0 %2502
  %v2505 = vadd.f32 %v2495, %v2503
  %v2506 = vtanh.pop %v2505
  %2508 = vrot.lane.b32.xlu0 %v2506, 32
  %v2509 = vpop.permute.xlu0 %2508
  %v2511 = vmul.f32 %v2493, %v2509
  %2514 = vrot.lane.b32.xlu0 %v2511, 96
  %v2515 = vpop.permute.xlu0 %2514
  %v2517 = vsel %vm159, %v2414, %v2515
  %v2519 = vsel %vm262, %v2517, 0
  %2521 = vmatprep.subr.mxu0 %v28
  %2522 = vmatpush1.msra.mxu0 %v27
  %2523 = vmatprep.subr.mxu0 %v30
  %2524 = vmatpush1.msra.mxu0 %v29
  %2525 = vmatprep.subr.mxu0 %v32
  %2526 = vmatpush1.msra.mxu0 %v31
  %2527 = vmatprep.subr.mxu0 %v34
  %2528 = vmatpush1.msra.mxu0 %v33
  %2529 = vmatprep.subr.mxu0 %v36
  %2530 = vmatpush1.msra.mxu0 %v35
  %2531 = vmatprep.subr.mxu0 %v38
  %2532 = vmatpush1.msra.mxu0 %v37
  %2533 = vmatprep.subr.mxu0 %v40
  %2534 = vmatpush1.msra.mxu0 %v39
  %2535 = vmatprep.subr.mxu0 %v42
  %2536 = vmatpush1.msra.mxu0 %v41
  %2537 = vmatprep.subr.mxu0 0.0
  %2538 = vmatpush1.msra.mxu0 0.0
  %2539 = vmatprep.subr.mxu0 0.0
  %2540 = vmatpush1.msra.mxu0 0.0
  %2541 = vmatprep.subr.mxu0 0.0
  %2542 = vmatpush1.msra.mxu0 0.0
  %2543 = vmatprep.subr.mxu0 0.0
  %2544 = vmatpush1.msra.mxu0 0.0
  %2545 = vmatprep.subr.mxu0 0.0
  %2546 = vmatpush1.msra.mxu0 0.0
  %2547 = vmatprep.subr.mxu0 0.0
  %2548 = vmatpush1.msra.mxu0 0.0
  %2549 = vmatprep.subr.mxu0 0.0
  %2550 = vmatpush1.msra.mxu0 0.0
  %2551 = vmatprep.subr.mxu0 0.0
  %2552 = vmatpush1.msra.mxu0 0.0
  %2553 = vmatprep.subr.mxu0 0.0
  %2554 = vmatpush1.msra.mxu0 0.0
  %2555 = vmatprep.subr.mxu0 0.0
  %2556 = vmatpush1.msra.mxu0 0.0
  %2557 = vmatprep.subr.mxu0 0.0
  %2558 = vmatpush1.msra.mxu0 0.0
  %2559 = vmatprep.subr.mxu0 0.0
  %2560 = vmatpush1.msra.mxu0 0.0
  %2561 = vmatprep.subr.mxu0 0.0
  %2562 = vmatpush1.msra.mxu0 0.0
  %2563 = vmatprep.subr.mxu0 0.0
  %2564 = vmatpush1.msra.mxu0 0.0
  %2565 = vmatprep.subr.mxu0 0.0
  %2566 = vmatpush1.msra.mxu0 0.0
  %2567 = vmatprep.subr.mxu0 0.0
  %2568 = vmatpush1.msra.mxu0 0.0
  %2569 = vmatprep.subr.mxu0 0.0
  %2570 = vmatpush1.msra.mxu0 0.0
  %2571 = vmatprep.subr.mxu0 0.0
  %2572 = vmatpush1.msra.mxu0 0.0
  %2573 = vmatprep.subr.mxu0 0.0
  %2574 = vmatpush1.msra.mxu0 0.0
  %2575 = vmatprep.subr.mxu0 0.0
  %2576 = vmatpush1.msra.mxu0 0.0
  %2577 = vmatprep.subr.mxu0 0.0
  %2578 = vmatpush1.msra.mxu0 0.0
  %2579 = vmatprep.subr.mxu0 0.0
  %2580 = vmatpush1.msra.mxu0 0.0
  %2581 = vmatprep.subr.mxu0 0.0
  %2582 = vmatpush1.msra.mxu0 0.0
  %2583 = vmatprep.subr.mxu0 0.0
  %2584 = vmatpush1.msra.mxu0 0.0
  %2585 = vmatprep.mubr.f32.mxu0 0.0
  %2586 = vmatmul.mubr.f32.gmra.mrb[0].mxu0 %v2519
  %v2587 = vpop.f32.mrb[0].mxu0
  %v2588 = vadd.f32 0.0, %v2587
  %v2589 = vpop.f32.mrb[0].mxu0
  %v2590 = vadd.f32 0.0, %v2589
  %2591 = vdwg.mxu0
  %v2592 = vadd.f32 %v2588, %v51
  %v2593 = vxor.u32 %v2592, 2147483648
  %v2594 = vmul.f32 %v2593, 1.442695
  %v2595 = vpow.pop %v2594
  %v2596 = vadd.f32 %v2595, 1.0
  %v2597 = vrcp.pop %v2596
  %v2598 = vmul.f32 1.0, %v2597
  %v2599 = vtanh.pop %v2592
  %v2600 = vmul.f32 %v2598, %v2405
  %2602 = vrot.lane.b32.xlu0 %v2599, 32
  %v2603 = vpop.permute.xlu0 %2602
  %v2605 = vmul.f32 %v2598, %v2603
  %2607 = vrot.lane.b32.xlu0 %v2605, 32
  %v2608 = vpop.permute.xlu0 %2607
  %v2610 = vadd.f32 %v2600, %v2608
  %v2611 = vtanh.pop %v2610
  %2613 = vrot.lane.b32.xlu0 %v2611, 32
  %v2614 = vpop.permute.xlu0 %2613
  %v2616 = vmul.f32 %v2598, %v2614
  %2618 = vrot.lane.b32.xlu0 %v2616, 64
  %v2619 = vpop.permute.xlu0 %2618
  %v2620 = vsel %vm159, %v2619, 0
  %2622 = vmatprep.subr.mxu0 0.0
  %2623 = vmatpush1.msra.mxu0 %v43
  %2624 = vmatprep.subr.mxu0 0.0
  %2625 = vmatpush1.msra.mxu0 %v44
  %2626 = vmatprep.subr.mxu0 0.0
  %2627 = vmatpush1.msra.mxu0 %v45
  %2628 = vmatprep.subr.mxu0 0.0
  %2629 = vmatpush1.msra.mxu0 %v46
  %2630 = vmatprep.subr.mxu0 0.0
  %2631 = vmatpush1.msra.mxu0 0.0
  %2632 = vmatprep.subr.mxu0 0.0
  %2633 = vmatpush1.msra.mxu0 0.0
  %2634 = vmatprep.subr.mxu0 0.0
  %2635 = vmatpush1.msra.mxu0 0.0
  %2636 = vmatprep.subr.mxu0 0.0
  %2637 = vmatpush1.msra.mxu0 0.0
  %2638 = vmatprep.subr.mxu0 0.0
  %2639 = vmatpush1.msra.mxu0 0.0
  %2640 = vmatprep.subr.mxu0 0.0
  %2641 = vmatpush1.msra.mxu0 0.0
  %2642 = vmatprep.subr.mxu0 0.0
  %2643 = vmatpush1.msra.mxu0 0.0
  %2644 = vmatprep.subr.mxu0 0.0
  %2645 = vmatpush1.msra.mxu0 0.0
  %2646 = vmatprep.subr.mxu0 0.0
  %2647 = vmatpush1.msra.mxu0 0.0
  %2648 = vmatprep.subr.mxu0 0.0
  %2649 = vmatpush1.msra.mxu0 0.0
  %2650 = vmatprep.subr.mxu0 0.0
  %2651 = vmatpush1.msra.mxu0 0.0
  %2652 = vmatprep.subr.mxu0 0.0
  %2653 = vmatpush1.msra.mxu0 0.0
  %2654 = vmatprep.subr.mxu0 0.0
  %2655 = vmatpush1.msra.mxu0 0.0
  %2656 = vmatprep.subr.mxu0 0.0
  %2657 = vmatpush1.msra.mxu0 0.0
  %2658 = vmatprep.subr.mxu0 0.0
  %2659 = vmatpush1.msra.mxu0 0.0
  %2660 = vmatprep.subr.mxu0 0.0
  %2661 = vmatpush1.msra.mxu0 0.0
  %2662 = vmatprep.subr.mxu0 0.0
  %2663 = vmatpush1.msra.mxu0 0.0
  %2664 = vmatprep.subr.mxu0 0.0
  %2665 = vmatpush1.msra.mxu0 0.0
  %2666 = vmatprep.subr.mxu0 0.0
  %2667 = vmatpush1.msra.mxu0 0.0
  %2668 = vmatprep.subr.mxu0 0.0
  %2669 = vmatpush1.msra.mxu0 0.0
  %2670 = vmatprep.subr.mxu0 0.0
  %2671 = vmatpush1.msra.mxu0 0.0
  %2672 = vmatprep.subr.mxu0 0.0
  %2673 = vmatpush1.msra.mxu0 0.0
  %2674 = vmatprep.subr.mxu0 0.0
  %2675 = vmatpush1.msra.mxu0 0.0
  %2676 = vmatprep.subr.mxu0 0.0
  %2677 = vmatpush1.msra.mxu0 0.0
  %2678 = vmatprep.subr.mxu0 0.0
  %2679 = vmatpush1.msra.mxu0 0.0
  %2680 = vmatprep.subr.mxu0 0.0
  %2681 = vmatpush1.msra.mxu0 0.0
  %2682 = vmatprep.subr.mxu0 0.0
  %2683 = vmatpush1.msra.mxu0 0.0
  %2684 = vmatprep.subr.mxu0 0.0
  %2685 = vmatpush1.msra.mxu0 0.0
  %2686 = vmatprep.mubr.f32.mxu0 0.0
  %2687 = vmatmul.mubr.f32.gmra.mrb[0].mxu0 %v2620
  %v2688 = vpop.f32.mrb[0].mxu0
  %v2689 = vadd.f32 %v2590, %v2688
  %v2690 = vpop.f32.mrb[0].mxu0
  %2691 = vdwg.mxu0
  %v2692 = vadd.f32 %v2689, %v56
  %v2693 = vxor.u32 %v2692, 2147483648
  %v2694 = vmul.f32 %v2693, 1.442695
  %v2695 = vpow.pop %v2694
  %v2696 = vadd.f32 %v2695, 1.0
  %v2697 = vrcp.pop %v2696
  %v2698 = vmul.f32 1.0, %v2697
  %v2699 = vtanh.pop %v2692
  %v2700 = vmul.f32 %v2698, %v2505
  %2702 = vrot.lane.b32.xlu0 %v2699, 32
  %v2703 = vpop.permute.xlu0 %2702
  %v2705 = vmul.f32 %v2698, %v2703
  %2707 = vrot.lane.b32.xlu0 %v2705, 32
  %v2708 = vpop.permute.xlu0 %2707
  %v2710 = vadd.f32 %v2700, %v2708
  %v2711 = vtanh.pop %v2710
  %2713 = vrot.lane.b32.xlu0 %v2711, 32
  %v2714 = vpop.permute.xlu0 %2713
  %v2716 = vmul.f32 %v2698, %v2714
  %2719 = vrot.lane.b32.xlu0 %v2716, 96
  %v2720 = vpop.permute.xlu0 %2719
  %v2722 = vsel %vm159, %v2619, %v2720
  %v2724 = vsel %vm262, %v2722, 0
  %2726 = vmatprep.subr.mxu0 %v28
  %2727 = vmatpush1.msra.mxu0 %v27
  %2728 = vmatprep.subr.mxu0 %v30
  %2729 = vmatpush1.msra.mxu0 %v29
  %2730 = vmatprep.subr.mxu0 %v32
  %2731 = vmatpush1.msra.mxu0 %v31
  %2732 = vmatprep.subr.mxu0 %v34
  %2733 = vmatpush1.msra.mxu0 %v33
  %2734 = vmatprep.subr.mxu0 %v36
  %2735 = vmatpush1.msra.mxu0 %v35
  %2736 = vmatprep.subr.mxu0 %v38
  %2737 = vmatpush1.msra.mxu0 %v37
  %2738 = vmatprep.subr.mxu0 %v40
  %2739 = vmatpush1.msra.mxu0 %v39
  %2740 = vmatprep.subr.mxu0 %v42
  %2741 = vmatpush1.msra.mxu0 %v41
  %2742 = vmatprep.subr.mxu0 0.0
  %2743 = vmatpush1.msra.mxu0 0.0
  %2744 = vmatprep.subr.mxu0 0.0
  %2745 = vmatpush1.msra.mxu0 0.0
  %2746 = vmatprep.subr.mxu0 0.0
  %2747 = vmatpush1.msra.mxu0 0.0
  %2748 = vmatprep.subr.mxu0 0.0
  %2749 = vmatpush1.msra.mxu0 0.0
  %2750 = vmatprep.subr.mxu0 0.0
  %2751 = vmatpush1.msra.mxu0 0.0
  %2752 = vmatprep.subr.mxu0 0.0
  %2753 = vmatpush1.msra.mxu0 0.0
  %2754 = vmatprep.subr.mxu0 0.0
  %2755 = vmatpush1.msra.mxu0 0.0
  %2756 = vmatprep.subr.mxu0 0.0
  %2757 = vmatpush1.msra.mxu0 0.0
  %2758 = vmatprep.subr.mxu0 0.0
  %2759 = vmatpush1.msra.mxu0 0.0
  %2760 = vmatprep.subr.mxu0 0.0
  %2761 = vmatpush1.msra.mxu0 0.0
  %2762 = vmatprep.subr.mxu0 0.0
  %2763 = vmatpush1.msra.mxu0 0.0
  %2764 = vmatprep.subr.mxu0 0.0
  %2765 = vmatpush1.msra.mxu0 0.0
  %2766 = vmatprep.subr.mxu0 0.0
  %2767 = vmatpush1.msra.mxu0 0.0
  %2768 = vmatprep.subr.mxu0 0.0
  %2769 = vmatpush1.msra.mxu0 0.0
  %2770 = vmatprep.subr.mxu0 0.0
  %2771 = vmatpush1.msra.mxu0 0.0
  %2772 = vmatprep.subr.mxu0 0.0
  %2773 = vmatpush1.msra.mxu0 0.0
  %2774 = vmatprep.subr.mxu0 0.0
  %2775 = vmatpush1.msra.mxu0 0.0
  %2776 = vmatprep.subr.mxu0 0.0
  %2777 = vmatpush1.msra.mxu0 0.0
  %2778 = vmatprep.subr.mxu0 0.0
  %2779 = vmatpush1.msra.mxu0 0.0
  %2780 = vmatprep.subr.mxu0 0.0
  %2781 = vmatpush1.msra.mxu0 0.0
  %2782 = vmatprep.subr.mxu0 0.0
  %2783 = vmatpush1.msra.mxu0 0.0
  %2784 = vmatprep.subr.mxu0 0.0
  %2785 = vmatpush1.msra.mxu0 0.0
  %2786 = vmatprep.subr.mxu0 0.0
  %2787 = vmatpush1.msra.mxu0 0.0
  %2788 = vmatprep.subr.mxu0 0.0
  %2789 = vmatpush1.msra.mxu0 0.0
  %2790 = vmatprep.mubr.f32.mxu0 0.0
  %2791 = vmatmul.mubr.f32.gmra.mrb[0].mxu0 %v2724
  %v2792 = vpop.f32.mrb[0].mxu0
  %v2793 = vadd.f32 0.0, %v2792
  %v2794 = vpop.f32.mrb[0].mxu0
  %v2795 = vadd.f32 0.0, %v2794
  %2796 = vdwg.mxu0
  %v2797 = vadd.f32 %v2793, %v51
  %v2798 = vxor.u32 %v2797, 2147483648
  %v2799 = vmul.f32 %v2798, 1.442695
  %v2800 = vpow.pop %v2799
  %v2801 = vadd.f32 %v2800, 1.0
  %v2802 = vrcp.pop %v2801
  %v2803 = vmul.f32 1.0, %v2802
  %v2804 = vtanh.pop %v2797
  %v2805 = vmul.f32 %v2803, %v2610
  %2807 = vrot.lane.b32.xlu0 %v2804, 32
  %v2808 = vpop.permute.xlu0 %2807
  %v2810 = vmul.f32 %v2803, %v2808
  %2812 = vrot.lane.b32.xlu0 %v2810, 32
  %v2813 = vpop.permute.xlu0 %2812
  %v2815 = vadd.f32 %v2805, %v2813
  %v2816 = vtanh.pop %v2815
  %2818 = vrot.lane.b32.xlu0 %v2816, 32
  %v2819 = vpop.permute.xlu0 %2818
  %v2821 = vmul.f32 %v2803, %v2819
  %2823 = vrot.lane.b32.xlu0 %v2821, 64
  %v2824 = vpop.permute.xlu0 %2823
  %v2825 = vsel %vm159, %v2824, 0
  %2827 = vmatprep.subr.mxu0 0.0
  %2828 = vmatpush1.msra.mxu0 %v43
  %2829 = vmatprep.subr.mxu0 0.0
  %2830 = vmatpush1.msra.mxu0 %v44
  %2831 = vmatprep.subr.mxu0 0.0
  %2832 = vmatpush1.msra.mxu0 %v45
  %2833 = vmatprep.subr.mxu0 0.0
  %2834 = vmatpush1.msra.mxu0 %v46
  %2835 = vmatprep.subr.mxu0 0.0
  %2836 = vmatpush1.msra.mxu0 0.0
  %2837 = vmatprep.subr.mxu0 0.0
  %2838 = vmatpush1.msra.mxu0 0.0
  %2839 = vmatprep.subr.mxu0 0.0
  %2840 = vmatpush1.msra.mxu0 0.0
  %2841 = vmatprep.subr.mxu0 0.0
  %2842 = vmatpush1.msra.mxu0 0.0
  %2843 = vmatprep.subr.mxu0 0.0
  %2844 = vmatpush1.msra.mxu0 0.0
  %2845 = vmatprep.subr.mxu0 0.0
  %2846 = vmatpush1.msra.mxu0 0.0
  %2847 = vmatprep.subr.mxu0 0.0
  %2848 = vmatpush1.msra.mxu0 0.0
  %2849 = vmatprep.subr.mxu0 0.0
  %2850 = vmatpush1.msra.mxu0 0.0
  %2851 = vmatprep.subr.mxu0 0.0
  %2852 = vmatpush1.msra.mxu0 0.0
  %2853 = vmatprep.subr.mxu0 0.0
  %2854 = vmatpush1.msra.mxu0 0.0
  %2855 = vmatprep.subr.mxu0 0.0
  %2856 = vmatpush1.msra.mxu0 0.0
  %2857 = vmatprep.subr.mxu0 0.0
  %2858 = vmatpush1.msra.mxu0 0.0
  %2859 = vmatprep.subr.mxu0 0.0
  %2860 = vmatpush1.msra.mxu0 0.0
  %2861 = vmatprep.subr.mxu0 0.0
  %2862 = vmatpush1.msra.mxu0 0.0
  %2863 = vmatprep.subr.mxu0 0.0
  %2864 = vmatpush1.msra.mxu0 0.0
  %2865 = vmatprep.subr.mxu0 0.0
  %2866 = vmatpush1.msra.mxu0 0.0
  %2867 = vmatprep.subr.mxu0 0.0
  %2868 = vmatpush1.msra.mxu0 0.0
  %2869 = vmatprep.subr.mxu0 0.0
  %2870 = vmatpush1.msra.mxu0 0.0
  %2871 = vmatprep.subr.mxu0 0.0
  %2872 = vmatpush1.msra.mxu0 0.0
  %2873 = vmatprep.subr.mxu0 0.0
  %2874 = vmatpush1.msra.mxu0 0.0
  %2875 = vmatprep.subr.mxu0 0.0
  %2876 = vmatpush1.msra.mxu0 0.0
  %2877 = vmatprep.subr.mxu0 0.0
  %2878 = vmatpush1.msra.mxu0 0.0
  %2879 = vmatprep.subr.mxu0 0.0
  %2880 = vmatpush1.msra.mxu0 0.0
  %2881 = vmatprep.subr.mxu0 0.0
  %2882 = vmatpush1.msra.mxu0 0.0
  %2883 = vmatprep.subr.mxu0 0.0
  %2884 = vmatpush1.msra.mxu0 0.0
  %2885 = vmatprep.subr.mxu0 0.0
  %2886 = vmatpush1.msra.mxu0 0.0
  %2887 = vmatprep.subr.mxu0 0.0
  %2888 = vmatpush1.msra.mxu0 0.0
  %2889 = vmatprep.subr.mxu0 0.0
  %2890 = vmatpush1.msra.mxu0 0.0
  %2891 = vmatprep.mubr.f32.mxu0 0.0
  %2892 = vmatmul.mubr.f32.gmra.mrb[0].mxu0 %v2825
  %v2893 = vpop.f32.mrb[0].mxu0
  %v2894 = vadd.f32 %v2795, %v2893
  %v2895 = vpop.f32.mrb[0].mxu0
  %2896 = vdwg.mxu0
  %v2897 = vadd.f32 %v2894, %v56
  %v2898 = vxor.u32 %v2897, 2147483648
  %v2899 = vmul.f32 %v2898, 1.442695
  %v2900 = vpow.pop %v2899
  %v2901 = vadd.f32 %v2900, 1.0
  %v2902 = vrcp.pop %v2901
  %v2903 = vmul.f32 1.0, %v2902
  %v2904 = vtanh.pop %v2897
  %v2905 = vmul.f32 %v2903, %v2710
  %2907 = vrot.lane.b32.xlu0 %v2904, 32
  %v2908 = vpop.permute.xlu0 %2907
  %v2910 = vmul.f32 %v2903, %v2908
  %2912 = vrot.lane.b32.xlu0 %v2910, 32
  %v2913 = vpop.permute.xlu0 %2912
  %v2915 = vadd.f32 %v2905, %v2913
  %v2916 = vtanh.pop %v2915
  %2918 = vrot.lane.b32.xlu0 %v2916, 32
  %v2919 = vpop.permute.xlu0 %2918
  %v2921 = vmul.f32 %v2903, %v2919
  %2924 = vrot.lane.b32.xlu0 %v2921, 96
  %v2925 = vpop.permute.xlu0 %2924
  %v2927 = vsel %vm159, %v2824, %v2925
  %v2929 = vsel %vm262, %v2927, 0
  %2931 = vmatprep.subr.mxu0 %v28
  %2932 = vmatpush1.msra.mxu0 %v27
  %2933 = vmatprep.subr.mxu0 %v30
  %2934 = vmatpush1.msra.mxu0 %v29
  %2935 = vmatprep.subr.mxu0 %v32
  %2936 = vmatpush1.msra.mxu0 %v31
  %2937 = vmatprep.subr.mxu0 %v34
  %2938 = vmatpush1.msra.mxu0 %v33
  %2939 = vmatprep.subr.mxu0 %v36
  %2940 = vmatpush1.msra.mxu0 %v35
  %2941 = vmatprep.subr.mxu0 %v38
  %2942 = vmatpush1.msra.mxu0 %v37
  %2943 = vmatprep.subr.mxu0 %v40
  %2944 = vmatpush1.msra.mxu0 %v39
  %2945 = vmatprep.subr.mxu0 %v42
  %2946 = vmatpush1.msra.mxu0 %v41
  %2947 = vmatprep.subr.mxu0 0.0
  %2948 = vmatpush1.msra.mxu0 0.0
  %2949 = vmatprep.subr.mxu0 0.0
  %2950 = vmatpush1.msra.mxu0 0.0
  %2951 = vmatprep.subr.mxu0 0.0
  %2952 = vmatpush1.msra.mxu0 0.0
  %2953 = vmatprep.subr.mxu0 0.0
  %2954 = vmatpush1.msra.mxu0 0.0
  %2955 = vmatprep.subr.mxu0 0.0
  %2956 = vmatpush1.msra.mxu0 0.0
  %2957 = vmatprep.subr.mxu0 0.0
  %2958 = vmatpush1.msra.mxu0 0.0
  %2959 = vmatprep.subr.mxu0 0.0
  %2960 = vmatpush1.msra.mxu0 0.0
  %2961 = vmatprep.subr.mxu0 0.0
  %2962 = vmatpush1.msra.mxu0 0.0
  %2963 = vmatprep.subr.mxu0 0.0
  %2964 = vmatpush1.msra.mxu0 0.0
  %2965 = vmatprep.subr.mxu0 0.0
  %2966 = vmatpush1.msra.mxu0 0.0
  %2967 = vmatprep.subr.mxu0 0.0
  %2968 = vmatpush1.msra.mxu0 0.0
  %2969 = vmatprep.subr.mxu0 0.0
  %2970 = vmatpush1.msra.mxu0 0.0
  %2971 = vmatprep.subr.mxu0 0.0
  %2972 = vmatpush1.msra.mxu0 0.0
  %2973 = vmatprep.subr.mxu0 0.0
  %2974 = vmatpush1.msra.mxu0 0.0
  %2975 = vmatprep.subr.mxu0 0.0
  %2976 = vmatpush1.msra.mxu0 0.0
  %2977 = vmatprep.subr.mxu0 0.0
  %2978 = vmatpush1.msra.mxu0 0.0
  %2979 = vmatprep.subr.mxu0 0.0
  %2980 = vmatpush1.msra.mxu0 0.0
  %2981 = vmatprep.subr.mxu0 0.0
  %2982 = vmatpush1.msra.mxu0 0.0
  %2983 = vmatprep.subr.mxu0 0.0
  %2984 = vmatpush1.msra.mxu0 0.0
  %2985 = vmatprep.subr.mxu0 0.0
  %2986 = vmatpush1.msra.mxu0 0.0
  %2987 = vmatprep.subr.mxu0 0.0
  %2988 = vmatpush1.msra.mxu0 0.0
  %2989 = vmatprep.subr.mxu0 0.0
  %2990 = vmatpush1.msra.mxu0 0.0
  %2991 = vmatprep.subr.mxu0 0.0
  %2992 = vmatpush1.msra.mxu0 0.0
  %2993 = vmatprep.subr.mxu0 0.0
  %2994 = vmatpush1.msra.mxu0 0.0
  %2995 = vmatprep.mubr.f32.mxu0 0.0
  %2996 = vmatmul.mubr.f32.gmra.mrb[0].mxu0 %v2929
  %v2997 = vpop.f32.mrb[0].mxu0
  %v2998 = vadd.f32 0.0, %v2997
  %v2999 = vpop.f32.mrb[0].mxu0
  %v3000 = vadd.f32 0.0, %v2999
  %3001 = vdwg.mxu0
  %v3002 = vadd.f32 %v2998, %v51
  %v3003 = vxor.u32 %v3002, 2147483648
  %v3004 = vmul.f32 %v3003, 1.442695
  %v3005 = vpow.pop %v3004
  %v3006 = vadd.f32 %v3005, 1.0
  %v3007 = vrcp.pop %v3006
  %v3008 = vmul.f32 1.0, %v3007
  %v3009 = vtanh.pop %v3002
  %v3010 = vmul.f32 %v3008, %v2815
  %3012 = vrot.lane.b32.xlu0 %v3009, 32
  %v3013 = vpop.permute.xlu0 %3012
  %v3015 = vmul.f32 %v3008, %v3013
  %3017 = vrot.lane.b32.xlu0 %v3015, 32
  %v3018 = vpop.permute.xlu0 %3017
  %v3020 = vadd.f32 %v3010, %v3018
  %v3021 = vtanh.pop %v3020
  %3023 = vrot.lane.b32.xlu0 %v3021, 32
  %v3024 = vpop.permute.xlu0 %3023
  %v3026 = vmul.f32 %v3008, %v3024
  %3028 = vrot.lane.b32.xlu0 %v3026, 64
  %v3029 = vpop.permute.xlu0 %3028
  %v3030 = vsel %vm159, %v3029, 0
  %3032 = vmatprep.subr.mxu0 0.0
  %3033 = vmatpush1.msra.mxu0 %v43
  %3034 = vmatprep.subr.mxu0 0.0
  %3035 = vmatpush1.msra.mxu0 %v44
  %3036 = vmatprep.subr.mxu0 0.0
  %3037 = vmatpush1.msra.mxu0 %v45
  %3038 = vmatprep.subr.mxu0 0.0
  %3039 = vmatpush1.msra.mxu0 %v46
  %3040 = vmatprep.subr.mxu0 0.0
  %3041 = vmatpush1.msra.mxu0 0.0
  %3042 = vmatprep.subr.mxu0 0.0
  %3043 = vmatpush1.msra.mxu0 0.0
  %3044 = vmatprep.subr.mxu0 0.0
  %3045 = vmatpush1.msra.mxu0 0.0
  %3046 = vmatprep.subr.mxu0 0.0
  %3047 = vmatpush1.msra.mxu0 0.0
  %3048 = vmatprep.subr.mxu0 0.0
  %3049 = vmatpush1.msra.mxu0 0.0
  %3050 = vmatprep.subr.mxu0 0.0
  %3051 = vmatpush1.msra.mxu0 0.0
  %3052 = vmatprep.subr.mxu0 0.0
  %3053 = vmatpush1.msra.mxu0 0.0
  %3054 = vmatprep.subr.mxu0 0.0
  %3055 = vmatpush1.msra.mxu0 0.0
  %3056 = vmatprep.subr.mxu0 0.0
  %3057 = vmatpush1.msra.mxu0 0.0
  %3058 = vmatprep.subr.mxu0 0.0
  %3059 = vmatpush1.msra.mxu0 0.0
  %3060 = vmatprep.subr.mxu0 0.0
  %3061 = vmatpush1.msra.mxu0 0.0
  %3062 = vmatprep.subr.mxu0 0.0
  %3063 = vmatpush1.msra.mxu0 0.0
  %3064 = vmatprep.subr.mxu0 0.0
  %3065 = vmatpush1.msra.mxu0 0.0
  %3066 = vmatprep.subr.mxu0 0.0
  %3067 = vmatpush1.msra.mxu0 0.0
  %3068 = vmatprep.subr.mxu0 0.0
  %3069 = vmatpush1.msra.mxu0 0.0
  %3070 = vmatprep.subr.mxu0 0.0
  %3071 = vmatpush1.msra.mxu0 0.0
  %3072 = vmatprep.subr.mxu0 0.0
  %3073 = vmatpush1.msra.mxu0 0.0
  %3074 = vmatprep.subr.mxu0 0.0
  %3075 = vmatpush1.msra.mxu0 0.0
  %3076 = vmatprep.subr.mxu0 0.0
  %3077 = vmatpush1.msra.mxu0 0.0
  %3078 = vmatprep.subr.mxu0 0.0
  %3079 = vmatpush1.msra.mxu0 0.0
  %3080 = vmatprep.subr.mxu0 0.0
  %3081 = vmatpush1.msra.mxu0 0.0
  %3082 = vmatprep.subr.mxu0 0.0
  %3083 = vmatpush1.msra.mxu0 0.0
  %3084 = vmatprep.subr.mxu0 0.0
  %3085 = vmatpush1.msra.mxu0 0.0
  %3086 = vmatprep.subr.mxu0 0.0
  %3087 = vmatpush1.msra.mxu0 0.0
  %3088 = vmatprep.subr.mxu0 0.0
  %3089 = vmatpush1.msra.mxu0 0.0
  %3090 = vmatprep.subr.mxu0 0.0
  %3091 = vmatpush1.msra.mxu0 0.0
  %3092 = vmatprep.subr.mxu0 0.0
  %3093 = vmatpush1.msra.mxu0 0.0
  %3094 = vmatprep.subr.mxu0 0.0
  %3095 = vmatpush1.msra.mxu0 0.0
  %3096 = vmatprep.mubr.f32.mxu0 0.0
  %3097 = vmatmul.mubr.f32.gmra.mrb[0].mxu0 %v3030
  %v3098 = vpop.f32.mrb[0].mxu0
  %v3099 = vadd.f32 %v3000, %v3098
  %v3100 = vpop.f32.mrb[0].mxu0
  %3101 = vdwg.mxu0
  %v3102 = vadd.f32 %v3099, %v56
  %v3103 = vxor.u32 %v3102, 2147483648
  %v3104 = vmul.f32 %v3103, 1.442695
  %v3105 = vpow.pop %v3104
  %v3106 = vadd.f32 %v3105, 1.0
  %v3107 = vrcp.pop %v3106
  %v3108 = vmul.f32 1.0, %v3107
  %v3109 = vtanh.pop %v3102
  %v3110 = vmul.f32 %v3108, %v2915
  %3112 = vrot.lane.b32.xlu0 %v3109, 32
  %v3113 = vpop.permute.xlu0 %3112
  %v3115 = vmul.f32 %v3108, %v3113
  %3117 = vrot.lane.b32.xlu0 %v3115, 32
  %v3118 = vpop.permute.xlu0 %3117
  %v3120 = vadd.f32 %v3110, %v3118
  %v3121 = vtanh.pop %v3120
  %3123 = vrot.lane.b32.xlu0 %v3121, 32
  %v3124 = vpop.permute.xlu0 %3123
  %v3126 = vmul.f32 %v3108, %v3124
  %3129 = vrot.lane.b32.xlu0 %v3126, 96
  %v3130 = vpop.permute.xlu0 %3129
  %v3132 = vsel %vm159, %v3029, %v3130
  %v3134 = vsel %vm262, %v3132, 0
  %3136 = vmatprep.subr.mxu0 %v28
  %3137 = vmatpush1.msra.mxu0 %v27
  %3138 = vmatprep.subr.mxu0 %v30
  %3139 = vmatpush1.msra.mxu0 %v29
  %3140 = vmatprep.subr.mxu0 %v32
  %3141 = vmatpush1.msra.mxu0 %v31
  %3142 = vmatprep.subr.mxu0 %v34
  %3143 = vmatpush1.msra.mxu0 %v33
  %3144 = vmatprep.subr.mxu0 %v36
  %3145 = vmatpush1.msra.mxu0 %v35
  %3146 = vmatprep.subr.mxu0 %v38
  %3147 = vmatpush1.msra.mxu0 %v37
  %3148 = vmatprep.subr.mxu0 %v40
  %3149 = vmatpush1.msra.mxu0 %v39
  %3150 = vmatprep.subr.mxu0 %v42
  %3151 = vmatpush1.msra.mxu0 %v41
  %3152 = vmatprep.subr.mxu0 0.0
  %3153 = vmatpush1.msra.mxu0 0.0
  %3154 = vmatprep.subr.mxu0 0.0
  %3155 = vmatpush1.msra.mxu0 0.0
  %3156 = vmatprep.subr.mxu0 0.0
  %3157 = vmatpush1.msra.mxu0 0.0
  %3158 = vmatprep.subr.mxu0 0.0
  %3159 = vmatpush1.msra.mxu0 0.0
  %3160 = vmatprep.subr.mxu0 0.0
  %3161 = vmatpush1.msra.mxu0 0.0
  %3162 = vmatprep.subr.mxu0 0.0
  %3163 = vmatpush1.msra.mxu0 0.0
  %3164 = vmatprep.subr.mxu0 0.0
  %3165 = vmatpush1.msra.mxu0 0.0
  %3166 = vmatprep.subr.mxu0 0.0
  %3167 = vmatpush1.msra.mxu0 0.0
  %3168 = vmatprep.subr.mxu0 0.0
  %3169 = vmatpush1.msra.mxu0 0.0
  %3170 = vmatprep.subr.mxu0 0.0
  %3171 = vmatpush1.msra.mxu0 0.0
  %3172 = vmatprep.subr.mxu0 0.0
  %3173 = vmatpush1.msra.mxu0 0.0
  %3174 = vmatprep.subr.mxu0 0.0
  %3175 = vmatpush1.msra.mxu0 0.0
  %3176 = vmatprep.subr.mxu0 0.0
  %3177 = vmatpush1.msra.mxu0 0.0
  %3178 = vmatprep.subr.mxu0 0.0
  %3179 = vmatpush1.msra.mxu0 0.0
  %3180 = vmatprep.subr.mxu0 0.0
  %3181 = vmatpush1.msra.mxu0 0.0
  %3182 = vmatprep.subr.mxu0 0.0
  %3183 = vmatpush1.msra.mxu0 0.0
  %3184 = vmatprep.subr.mxu0 0.0
  %3185 = vmatpush1.msra.mxu0 0.0
  %3186 = vmatprep.subr.mxu0 0.0
  %3187 = vmatpush1.msra.mxu0 0.0
  %3188 = vmatprep.subr.mxu0 0.0
  %3189 = vmatpush1.msra.mxu0 0.0
  %3190 = vmatprep.subr.mxu0 0.0
  %3191 = vmatpush1.msra.mxu0 0.0
  %3192 = vmatprep.subr.mxu0 0.0
  %3193 = vmatpush1.msra.mxu0 0.0
  %3194 = vmatprep.subr.mxu0 0.0
  %3195 = vmatpush1.msra.mxu0 0.0
  %3196 = vmatprep.subr.mxu0 0.0
  %3197 = vmatpush1.msra.mxu0 0.0
  %3198 = vmatprep.subr.mxu0 0.0
  %3199 = vmatpush1.msra.mxu0 0.0
  %3200 = vmatprep.mubr.f32.mxu0 0.0
  %3201 = vmatmul.mubr.f32.gmra.mrb[0].mxu0 %v3134
  %v3202 = vpop.f32.mrb[0].mxu0
  %v3203 = vadd.f32 0.0, %v3202
  %v3204 = vpop.f32.mrb[0].mxu0
  %v3205 = vadd.f32 0.0, %v3204
  %3206 = vdwg.mxu0
  %v3207 = vadd.f32 %v3203, %v51
  %v3208 = vxor.u32 %v3207, 2147483648
  %v3209 = vmul.f32 %v3208, 1.442695
  %v3210 = vpow.pop %v3209
  %v3211 = vadd.f32 %v3210, 1.0
  %v3212 = vrcp.pop %v3211
  %v3213 = vmul.f32 1.0, %v3212
  %v3214 = vtanh.pop %v3207
  %v3215 = vmul.f32 %v3213, %v3020
  %3217 = vrot.lane.b32.xlu0 %v3214, 32
  %v3218 = vpop.permute.xlu0 %3217
  %v3220 = vmul.f32 %v3213, %v3218
  %3222 = vrot.lane.b32.xlu0 %v3220, 32
  %v3223 = vpop.permute.xlu0 %3222
  %v3225 = vadd.f32 %v3215, %v3223
  %v3226 = vtanh.pop %v3225
  %3228 = vrot.lane.b32.xlu0 %v3226, 32
  %v3229 = vpop.permute.xlu0 %3228
  %v3231 = vmul.f32 %v3213, %v3229
  %3233 = vrot.lane.b32.xlu0 %v3231, 64
  %v3234 = vpop.permute.xlu0 %3233
  %v3235 = vsel %vm159, %v3234, 0
  %3237 = vmatprep.subr.mxu0 0.0
  %3238 = vmatpush1.msra.mxu0 %v43
  %3239 = vmatprep.subr.mxu0 0.0
  %3240 = vmatpush1.msra.mxu0 %v44
  %3241 = vmatprep.subr.mxu0 0.0
  %3242 = vmatpush1.msra.mxu0 %v45
  %3243 = vmatprep.subr.mxu0 0.0
  %3244 = vmatpush1.msra.mxu0 %v46
  %3245 = vmatprep.subr.mxu0 0.0
  %3246 = vmatpush1.msra.mxu0 0.0
  %3247 = vmatprep.subr.mxu0 0.0
  %3248 = vmatpush1.msra.mxu0 0.0
  %3249 = vmatprep.subr.mxu0 0.0
  %3250 = vmatpush1.msra.mxu0 0.0
  %3251 = vmatprep.subr.mxu0 0.0
  %3252 = vmatpush1.msra.mxu0 0.0
  %3253 = vmatprep.subr.mxu0 0.0
  %3254 = vmatpush1.msra.mxu0 0.0
  %3255 = vmatprep.subr.mxu0 0.0
  %3256 = vmatpush1.msra.mxu0 0.0
  %3257 = vmatprep.subr.mxu0 0.0
  %3258 = vmatpush1.msra.mxu0 0.0
  %3259 = vmatprep.subr.mxu0 0.0
  %3260 = vmatpush1.msra.mxu0 0.0
  %3261 = vmatprep.subr.mxu0 0.0
  %3262 = vmatpush1.msra.mxu0 0.0
  %3263 = vmatprep.subr.mxu0 0.0
  %3264 = vmatpush1.msra.mxu0 0.0
  %3265 = vmatprep.subr.mxu0 0.0
  %3266 = vmatpush1.msra.mxu0 0.0
  %3267 = vmatprep.subr.mxu0 0.0
  %3268 = vmatpush1.msra.mxu0 0.0
  %3269 = vmatprep.subr.mxu0 0.0
  %3270 = vmatpush1.msra.mxu0 0.0
  %3271 = vmatprep.subr.mxu0 0.0
  %3272 = vmatpush1.msra.mxu0 0.0
  %3273 = vmatprep.subr.mxu0 0.0
  %3274 = vmatpush1.msra.mxu0 0.0
  %3275 = vmatprep.subr.mxu0 0.0
  %3276 = vmatpush1.msra.mxu0 0.0
  %3277 = vmatprep.subr.mxu0 0.0
  %3278 = vmatpush1.msra.mxu0 0.0
  %3279 = vmatprep.subr.mxu0 0.0
  %3280 = vmatpush1.msra.mxu0 0.0
  %3281 = vmatprep.subr.mxu0 0.0
  %3282 = vmatpush1.msra.mxu0 0.0
  %3283 = vmatprep.subr.mxu0 0.0
  %3284 = vmatpush1.msra.mxu0 0.0
  %3285 = vmatprep.subr.mxu0 0.0
  %3286 = vmatpush1.msra.mxu0 0.0
  %3287 = vmatprep.subr.mxu0 0.0
  %3288 = vmatpush1.msra.mxu0 0.0
  %3289 = vmatprep.subr.mxu0 0.0
  %3290 = vmatpush1.msra.mxu0 0.0
  %3291 = vmatprep.subr.mxu0 0.0
  %3292 = vmatpush1.msra.mxu0 0.0
  %3293 = vmatprep.subr.mxu0 0.0
  %3294 = vmatpush1.msra.mxu0 0.0
  %3295 = vmatprep.subr.mxu0 0.0
  %3296 = vmatpush1.msra.mxu0 0.0
  %3297 = vmatprep.subr.mxu0 0.0
  %3298 = vmatpush1.msra.mxu0 0.0
  %3299 = vmatprep.subr.mxu0 0.0
  %3300 = vmatpush1.msra.mxu0 0.0
  %3301 = vmatprep.mubr.f32.mxu0 0.0
  %3302 = vmatmul.mubr.f32.gmra.mrb[0].mxu0 %v3235
  %v3303 = vpop.f32.mrb[0].mxu0
  %v3304 = vadd.f32 %v3205, %v3303
  %v3305 = vpop.f32.mrb[0].mxu0
  %3306 = vdwg.mxu0
  %v3307 = vadd.f32 %v3304, %v56
  %v3308 = vxor.u32 %v3307, 2147483648
  %v3309 = vmul.f32 %v3308, 1.442695
  %v3310 = vpow.pop %v3309
  %v3311 = vadd.f32 %v3310, 1.0
  %v3312 = vrcp.pop %v3311
  %v3313 = vmul.f32 1.0, %v3312
  %v3314 = vtanh.pop %v3307
  %v3315 = vmul.f32 %v3313, %v3120
  %3317 = vrot.lane.b32.xlu0 %v3314, 32
  %v3318 = vpop.permute.xlu0 %3317
  %v3320 = vmul.f32 %v3313, %v3318
  %3322 = vrot.lane.b32.xlu0 %v3320, 32
  %v3323 = vpop.permute.xlu0 %3322
  %v3325 = vadd.f32 %v3315, %v3323
  %v3326 = vtanh.pop %v3325
  %3328 = vrot.lane.b32.xlu0 %v3326, 32
  %v3329 = vpop.permute.xlu0 %3328
  %v3331 = vmul.f32 %v3313, %v3329
  %3332 = vrot.lane.b32.xlu0 %v255, 64
  %v3333 = vpop.permute.xlu0 %3332
  %3335 = vrot.lane.b32.xlu0 %v871, 32
  %v3336 = vpop.permute.xlu0 %3335
  %3338 = vrot.lane.b32.xlu0 %v1076, 64
  %v3339 = vpop.permute.xlu0 %3338
  %3341 = vrot.lane.b32.xlu0 %v1691, 32
  %v3342 = vpop.permute.xlu0 %3341
  %3344 = vrot.lane.b32.xlu0 %v1896, 64
  %v3345 = vpop.permute.xlu0 %3344
  %3347 = vrot.lane.b32.xlu0 %v2511, 32
  %v3348 = vpop.permute.xlu0 %3347
  %3350 = vrot.lane.b32.xlu0 %v2716, 64
  %v3351 = vpop.permute.xlu0 %3350
  %3354 = vrot.lane.b32.xlu0 %v3331, 32
  %v3355 = vpop.permute.xlu0 %3354
  %v3357 = vsel %vm159, %v3333, %v465
  %v3358 = vsel %vm262, %v3357, %v666
  %vm3359 = vcmask 785408
  %v3360 = vsel %vm3359, %v3358, %v3336
  %v3361 = vsel %vm159, %v3339, %v1285
  %v3362 = vsel %vm262, %v3361, %v1486
  %v3363 = vsel %vm3359, %v3362, %v3342
  %v3364 = vsel %vm159, %v3345, %v2105
  %v3365 = vsel %vm262, %v3364, %v2306
  %v3366 = vsel %vm3359, %v3365, %v3348
  %v3367 = vsel %vm159, %v3351, %v2925
  %v3368 = vsel %vm262, %v3367, %v3126
  %v3369 = vsel %vm3359, %v3368, %v3355
  %v3370 = vpack.c.bf16 %v3360, %v3360
  %v3371 = vpack.c.bf16 %v3363, %v3363
  %v3372 = vpack.c.bf16 %v3366, %v3366
  %v3373 = vpack.c.bf16 %v3369, %v3369
  %v3374 = vld [vmem:[%s4] sm:$0xff]
  %v3375 = vld [vmem:[%s4 + $0x8] sm:$0xff]
  %v3376 = vld [vmem:[%s4 + $0x10] sm:$0xff]
  %v3377 = vld [vmem:[%s4 + $0x18] sm:$0xff]
  %v3378 = vld [vmem:[%s4 + $0x20] sm:$0xff]
  %v3379 = vld [vmem:[%s4 + $0x28] sm:$0xff]
  %v3380 = vld [vmem:[%s4 + $0x30] sm:$0xff]
  %v3381 = vld [vmem:[%s4 + $0x38] sm:$0xff]
  %v3382 = vld [vmem:[%s4 + $0x40] sm:$0xff]
  %v3383 = vld [vmem:[%s4 + $0x48] sm:$0xff]
  %v3384 = vld [vmem:[%s4 + $0x50] sm:$0xff]
  %v3385 = vld [vmem:[%s4 + $0x58] sm:$0xff]
  %v3386 = vld [vmem:[%s4 + $0x60] sm:$0xff]
  %v3387 = vld [vmem:[%s4 + $0x68] sm:$0xff]
  %v3388 = vld [vmem:[%s4 + $0x70] sm:$0xff]
  %v3389 = vld [vmem:[%s4 + $0x78] sm:$0xff]
  %v3390 = vld [vmem:[%s4 + $0x80] sm:$0xff]
  %v3391 = vld [vmem:[%s4 + $0x88] sm:$0xff]
  %v3392 = vld [vmem:[%s4 + $0x90] sm:$0xff]
  %v3393 = vld [vmem:[%s4 + $0x98] sm:$0xff]
  %v3394 = vld [vmem:[%s4 + $0xa0] sm:$0xff]
  %v3395 = vld [vmem:[%s4 + $0xa8] sm:$0xff]
  %v3396 = vld [vmem:[%s4 + $0xb0] sm:$0xff]
  %v3397 = vld [vmem:[%s4 + $0xb8] sm:$0xff]
  %v3398 = vld [vmem:[%s4 + $0xc0] sm:$0xff]
  %v3399 = vld [vmem:[%s4 + $0xc8] sm:$0xff]
  %v3400 = vld [vmem:[%s4 + $0xd0] sm:$0xff]
  %v3401 = vld [vmem:[%s4 + $0xd8] sm:$0xff]
  %v3402 = vld [vmem:[%s4 + $0xe0] sm:$0xff]
  %v3403 = vld [vmem:[%s4 + $0xe8] sm:$0xff]
  %v3404 = vld [vmem:[%s4 + $0xf0] sm:$0xff]
  %v3405 = vld [vmem:[%s4 + $0xf8] sm:$0xff]
  %v3406 = vld [vmem:[%s4 + $0x100] sm:$0xff]
  %v3407 = vld [vmem:[%s4 + $0x108] sm:$0xff]
  %v3408 = vld [vmem:[%s4 + $0x110] sm:$0xff]
  %v3409 = vld [vmem:[%s4 + $0x118] sm:$0xff]
  %v3410 = vld [vmem:[%s4 + $0x120] sm:$0xff]
  %v3411 = vld [vmem:[%s4 + $0x128] sm:$0xff]
  %v3412 = vld [vmem:[%s4 + $0x130] sm:$0xff]
  %v3413 = vld [vmem:[%s4 + $0x138] sm:$0xff]
  %v3414 = vld [vmem:[%s4 + $0x140] sm:$0xff]
  %v3415 = vld [vmem:[%s4 + $0x148] sm:$0xff]
  %v3416 = vld [vmem:[%s4 + $0x150] sm:$0xff]
  %v3417 = vld [vmem:[%s4 + $0x158] sm:$0xff]
  %v3418 = vld [vmem:[%s4 + $0x160] sm:$0xff]
  %v3419 = vld [vmem:[%s4 + $0x168] sm:$0xff]
  %v3420 = vld [vmem:[%s4 + $0x170] sm:$0xff]
  %v3421 = vld [vmem:[%s4 + $0x178] sm:$0xff]
  %v3422 = vld [vmem:[%s4 + $0x180] sm:$0xff]
  %v3423 = vld [vmem:[%s4 + $0x188] sm:$0xff]
  %v3424 = vld [vmem:[%s4 + $0x190] sm:$0xff]
  %v3425 = vld [vmem:[%s4 + $0x198] sm:$0xff]
  %v3426 = vld [vmem:[%s4 + $0x1a0] sm:$0xff]
  %v3427 = vld [vmem:[%s4 + $0x1a8] sm:$0xff]
  %v3428 = vld [vmem:[%s4 + $0x1b0] sm:$0xff]
  %v3429 = vld [vmem:[%s4 + $0x1b8] sm:$0xff]
  %v3430 = vld [vmem:[%s4 + $0x1c0] sm:$0xff]
  %v3431 = vld [vmem:[%s4 + $0x1c8] sm:$0xff]
  %v3432 = vld [vmem:[%s4 + $0x1d0] sm:$0xff]
  %v3433 = vld [vmem:[%s4 + $0x1d8] sm:$0xff]
  %v3434 = vld [vmem:[%s4 + $0x1e0] sm:$0xff]
  %v3435 = vld [vmem:[%s4 + $0x1e8] sm:$0xff]
  %v3436 = vld [vmem:[%s4 + $0x1f0] sm:$0xff]
  %v3437 = vld [vmem:[%s4 + $0x1f8] sm:$0xff]
  %v3502 = vunpack.c.l.b16 %v3374
  %v3503 = vunpack.c.h.b16 %v3374
  %v3504 = vunpack.c.l.b16 %v3375
  %v3505 = vunpack.c.h.b16 %v3375
  %v3506 = vunpack.c.l.b16 %v3376
  %v3507 = vunpack.c.h.b16 %v3376
  %v3508 = vunpack.c.l.b16 %v3377
  %v3509 = vunpack.c.h.b16 %v3377
  %v3510 = vunpack.c.l.b16 %v3378
  %v3511 = vunpack.c.h.b16 %v3378
  %v3512 = vunpack.c.l.b16 %v3379
  %v3513 = vunpack.c.h.b16 %v3379
  %v3514 = vunpack.c.l.b16 %v3380
  %v3515 = vunpack.c.h.b16 %v3380
  %v3516 = vunpack.c.l.b16 %v3381
  %v3517 = vunpack.c.h.b16 %v3381
  %v3518 = vunpack.c.l.b16 %v3382
  %v3519 = vunpack.c.h.b16 %v3382
  %v3520 = vunpack.c.l.b16 %v3383
  %v3521 = vunpack.c.h.b16 %v3383
  %v3522 = vunpack.c.l.b16 %v3384
  %v3523 = vunpack.c.h.b16 %v3384
  %v3524 = vunpack.c.l.b16 %v3385
  %v3525 = vunpack.c.h.b16 %v3385
  %v3526 = vunpack.c.l.b16 %v3386
  %v3527 = vunpack.c.h.b16 %v3386
  %v3528 = vunpack.c.l.b16 %v3387
  %v3529 = vunpack.c.h.b16 %v3387
  %v3530 = vunpack.c.l.b16 %v3388
  %v3531 = vunpack.c.h.b16 %v3388
  %v3532 = vunpack.c.l.b16 %v3389
  %v3533 = vunpack.c.h.b16 %v3389
  %v3534 = vunpack.c.l.b16 %v3390
  %v3535 = vunpack.c.h.b16 %v3390
  %v3536 = vunpack.c.l.b16 %v3391
  %v3537 = vunpack.c.h.b16 %v3391
  %v3538 = vunpack.c.l.b16 %v3392
  %v3539 = vunpack.c.h.b16 %v3392
  %v3540 = vunpack.c.l.b16 %v3393
  %v3541 = vunpack.c.h.b16 %v3393
  %v3542 = vunpack.c.l.b16 %v3394
  %v3543 = vunpack.c.h.b16 %v3394
  %v3544 = vunpack.c.l.b16 %v3395
  %v3545 = vunpack.c.h.b16 %v3395
  %v3546 = vunpack.c.l.b16 %v3396
  %v3547 = vunpack.c.h.b16 %v3396
  %v3548 = vunpack.c.l.b16 %v3397
  %v3549 = vunpack.c.h.b16 %v3397
  %v3550 = vunpack.c.l.b16 %v3398
  %v3551 = vunpack.c.h.b16 %v3398
  %v3552 = vunpack.c.l.b16 %v3399
  %v3553 = vunpack.c.h.b16 %v3399
  %v3554 = vunpack.c.l.b16 %v3400
  %v3555 = vunpack.c.h.b16 %v3400
  %v3556 = vunpack.c.l.b16 %v3401
  %v3557 = vunpack.c.h.b16 %v3401
  %v3558 = vunpack.c.l.b16 %v3402
  %v3559 = vunpack.c.h.b16 %v3402
  %v3560 = vunpack.c.l.b16 %v3403
  %v3561 = vunpack.c.h.b16 %v3403
  %v3562 = vunpack.c.l.b16 %v3404
  %v3563 = vunpack.c.h.b16 %v3404
  %v3564 = vunpack.c.l.b16 %v3405
  %v3565 = vunpack.c.h.b16 %v3405
  %v3566 = vunpack.c.l.b16 %v3406
  %v3567 = vunpack.c.h.b16 %v3406
  %v3568 = vunpack.c.l.b16 %v3407
  %v3569 = vunpack.c.h.b16 %v3407
  %v3570 = vunpack.c.l.b16 %v3408
  %v3571 = vunpack.c.h.b16 %v3408
  %v3572 = vunpack.c.l.b16 %v3409
  %v3573 = vunpack.c.h.b16 %v3409
  %v3574 = vunpack.c.l.b16 %v3410
  %v3575 = vunpack.c.h.b16 %v3410
  %v3576 = vunpack.c.l.b16 %v3411
  %v3577 = vunpack.c.h.b16 %v3411
  %v3578 = vunpack.c.l.b16 %v3412
  %v3579 = vunpack.c.h.b16 %v3412
  %v3580 = vunpack.c.l.b16 %v3413
  %v3581 = vunpack.c.h.b16 %v3413
  %v3582 = vunpack.c.l.b16 %v3414
  %v3583 = vunpack.c.h.b16 %v3414
  %v3584 = vunpack.c.l.b16 %v3415
  %v3585 = vunpack.c.h.b16 %v3415
  %v3586 = vunpack.c.l.b16 %v3416
  %v3587 = vunpack.c.h.b16 %v3416
  %v3588 = vunpack.c.l.b16 %v3417
  %v3589 = vunpack.c.h.b16 %v3417
  %v3590 = vunpack.c.l.b16 %v3418
  %v3591 = vunpack.c.h.b16 %v3418
  %v3592 = vunpack.c.l.b16 %v3419
  %v3593 = vunpack.c.h.b16 %v3419
  %v3594 = vunpack.c.l.b16 %v3420
  %v3595 = vunpack.c.h.b16 %v3420
  %v3596 = vunpack.c.l.b16 %v3421
  %v3597 = vunpack.c.h.b16 %v3421
  %v3598 = vunpack.c.l.b16 %v3422
  %v3599 = vunpack.c.h.b16 %v3422
  %v3600 = vunpack.c.l.b16 %v3423
  %v3601 = vunpack.c.h.b16 %v3423
  %v3602 = vunpack.c.l.b16 %v3424
  %v3603 = vunpack.c.h.b16 %v3424
  %v3604 = vunpack.c.l.b16 %v3425
  %v3605 = vunpack.c.h.b16 %v3425
  %v3606 = vunpack.c.l.b16 %v3426
  %v3607 = vunpack.c.h.b16 %v3426
  %v3608 = vunpack.c.l.b16 %v3427
  %v3609 = vunpack.c.h.b16 %v3427
  %v3610 = vunpack.c.l.b16 %v3428
  %v3611 = vunpack.c.h.b16 %v3428
  %v3612 = vunpack.c.l.b16 %v3429
  %v3613 = vunpack.c.h.b16 %v3429
  %v3614 = vunpack.c.l.b16 %v3430
  %v3615 = vunpack.c.h.b16 %v3430
  %v3616 = vunpack.c.l.b16 %v3431
  %v3617 = vunpack.c.h.b16 %v3431
  %v3618 = vunpack.c.l.b16 %v3432
  %v3619 = vunpack.c.h.b16 %v3432
  %v3620 = vunpack.c.l.b16 %v3433
  %v3621 = vunpack.c.h.b16 %v3433
  %v3622 = vunpack.c.l.b16 %v3434
  %v3623 = vunpack.c.h.b16 %v3434
  %v3624 = vunpack.c.l.b16 %v3435
  %v3625 = vunpack.c.h.b16 %v3435
  %v3626 = vunpack.c.l.b16 %v3436
  %v3627 = vunpack.c.h.b16 %v3436
  %v3628 = vunpack.c.l.b16 %v3437
  %v3629 = vunpack.c.h.b16 %v3437
  %v3630 = vpack.c.b16 %v3504, %v3502
  %v3631 = vpack.c.b16 %v3505, %v3503
  %v3632 = vpack.c.b16 %v3508, %v3506
  %v3633 = vpack.c.b16 %v3509, %v3507
  %v3634 = vpack.c.b16 %v3512, %v3510
  %v3635 = vpack.c.b16 %v3513, %v3511
  %v3636 = vpack.c.b16 %v3516, %v3514
  %v3637 = vpack.c.b16 %v3517, %v3515
  %v3638 = vpack.c.b16 %v3520, %v3518
  %v3639 = vpack.c.b16 %v3521, %v3519
  %v3640 = vpack.c.b16 %v3524, %v3522
  %v3641 = vpack.c.b16 %v3525, %v3523
  %v3642 = vpack.c.b16 %v3528, %v3526
  %v3643 = vpack.c.b16 %v3529, %v3527
  %v3644 = vpack.c.b16 %v3532, %v3530
  %v3645 = vpack.c.b16 %v3533, %v3531
  %v3646 = vpack.c.b16 %v3536, %v3534
  %v3647 = vpack.c.b16 %v3537, %v3535
  %v3648 = vpack.c.b16 %v3540, %v3538
  %v3649 = vpack.c.b16 %v3541, %v3539
  %v3650 = vpack.c.b16 %v3544, %v3542
  %v3651 = vpack.c.b16 %v3545, %v3543
  %v3652 = vpack.c.b16 %v3548, %v3546
  %v3653 = vpack.c.b16 %v3549, %v3547
  %v3654 = vpack.c.b16 %v3552, %v3550
  %v3655 = vpack.c.b16 %v3553, %v3551
  %v3656 = vpack.c.b16 %v3556, %v3554
  %v3657 = vpack.c.b16 %v3557, %v3555
  %v3658 = vpack.c.b16 %v3560, %v3558
  %v3659 = vpack.c.b16 %v3561, %v3559
  %v3660 = vpack.c.b16 %v3564, %v3562
  %v3661 = vpack.c.b16 %v3565, %v3563
  %v3662 = vpack.c.b16 %v3568, %v3566
  %v3663 = vpack.c.b16 %v3569, %v3567
  %v3664 = vpack.c.b16 %v3572, %v3570
  %v3665 = vpack.c.b16 %v3573, %v3571
  %v3666 = vpack.c.b16 %v3576, %v3574
  %v3667 = vpack.c.b16 %v3577, %v3575
  %v3668 = vpack.c.b16 %v3580, %v3578
  %v3669 = vpack.c.b16 %v3581, %v3579
  %v3670 = vpack.c.b16 %v3584, %v3582
  %v3671 = vpack.c.b16 %v3585, %v3583
  %v3672 = vpack.c.b16 %v3588, %v3586
  %v3673 = vpack.c.b16 %v3589, %v3587
  %v3674 = vpack.c.b16 %v3592, %v3590
  %v3675 = vpack.c.b16 %v3593, %v3591
  %v3676 = vpack.c.b16 %v3596, %v3594
  %v3677 = vpack.c.b16 %v3597, %v3595
  %v3678 = vpack.c.b16 %v3600, %v3598
  %v3679 = vpack.c.b16 %v3601, %v3599
  %v3680 = vpack.c.b16 %v3604, %v3602
  %v3681 = vpack.c.b16 %v3605, %v3603
  %v3682 = vpack.c.b16 %v3608, %v3606
  %v3683 = vpack.c.b16 %v3609, %v3607
  %v3684 = vpack.c.b16 %v3612, %v3610
  %v3685 = vpack.c.b16 %v3613, %v3611
  %v3686 = vpack.c.b16 %v3616, %v3614
  %v3687 = vpack.c.b16 %v3617, %v3615
  %v3688 = vpack.c.b16 %v3620, %v3618
  %v3689 = vpack.c.b16 %v3621, %v3619
  %v3690 = vpack.c.b16 %v3624, %v3622
  %v3691 = vpack.c.b16 %v3625, %v3623
  %v3692 = vpack.c.b16 %v3628, %v3626
  %v3693 = vpack.c.b16 %v3629, %v3627
  %3758 = vmatprep.subr.bf16.mxu0 %v3631
  %3759 = vmatpush1.bf16.msra.mxu0 %v3630
  %3760 = vmatprep.subr.bf16.mxu0 %v3633
  %3761 = vmatpush1.bf16.msra.mxu0 %v3632
  %3762 = vmatprep.subr.bf16.mxu0 %v3635
  %3763 = vmatpush1.bf16.msra.mxu0 %v3634
  %3764 = vmatprep.subr.bf16.mxu0 %v3637
  %3765 = vmatpush1.bf16.msra.mxu0 %v3636
  %3766 = vmatprep.subr.bf16.mxu0 %v3639
  %3767 = vmatpush1.bf16.msra.mxu0 %v3638
  %3768 = vmatprep.subr.bf16.mxu0 %v3641
  %3769 = vmatpush1.bf16.msra.mxu0 %v3640
  %3770 = vmatprep.subr.bf16.mxu0 %v3643
  %3771 = vmatpush1.bf16.msra.mxu0 %v3642
  %3772 = vmatprep.subr.bf16.mxu0 %v3645
  %3773 = vmatpush1.bf16.msra.mxu0 %v3644
  %3774 = vmatprep.subr.bf16.mxu0 %v3647
  %3775 = vmatpush1.bf16.msra.mxu0 %v3646
  %3776 = vmatprep.subr.bf16.mxu0 %v3649
  %3777 = vmatpush1.bf16.msra.mxu0 %v3648
  %3778 = vmatprep.subr.bf16.mxu0 %v3651
  %3779 = vmatpush1.bf16.msra.mxu0 %v3650
  %3780 = vmatprep.subr.bf16.mxu0 %v3653
  %3781 = vmatpush1.bf16.msra.mxu0 %v3652
  %3782 = vmatprep.subr.bf16.mxu0 %v3655
  %3783 = vmatpush1.bf16.msra.mxu0 %v3654
  %3784 = vmatprep.subr.bf16.mxu0 %v3657
  %3785 = vmatpush1.bf16.msra.mxu0 %v3656
  %3786 = vmatprep.subr.bf16.mxu0 %v3659
  %3787 = vmatpush1.bf16.msra.mxu0 %v3658
  %3788 = vmatprep.subr.bf16.mxu0 %v3661
  %3789 = vmatpush1.bf16.msra.mxu0 %v3660
  %3790 = vmatprep.mubr.bf16.mxu0 %v3371
  %3791 = vmatmul.mubr.bf16.gmra.mrb[0].mxu0 %v3370
  %v3792 = vpop.f32.mrb[0].mxu0
  %v3793 = vadd.f32 0.0, %v3792
  %v3794 = vpop.f32.mrb[0].mxu0
  %v3795 = vadd.f32 0.0, %v3794
  %v3796 = vpop.f32.mrb[0].mxu0
  %v3797 = vpop.f32.mrb[0].mxu0
  %3798 = vdwg.mxu0
  %3799 = vmatprep.subr.bf16.mxu0 %v3663
  %3800 = vmatpush1.bf16.msra.mxu0 %v3662
  %3801 = vmatprep.subr.bf16.mxu0 %v3665
  %3802 = vmatpush1.bf16.msra.mxu0 %v3664
  %3803 = vmatprep.subr.bf16.mxu0 %v3667
  %3804 = vmatpush1.bf16.msra.mxu0 %v3666
  %3805 = vmatprep.subr.bf16.mxu0 %v3669
  %3806 = vmatpush1.bf16.msra.mxu0 %v3668
  %3807 = vmatprep.subr.bf16.mxu0 %v3671
  %3808 = vmatpush1.bf16.msra.mxu0 %v3670
  %3809 = vmatprep.subr.bf16.mxu0 %v3673
  %3810 = vmatpush1.bf16.msra.mxu0 %v3672
  %3811 = vmatprep.subr.bf16.mxu0 %v3675
  %3812 = vmatpush1.bf16.msra.mxu0 %v3674
  %3813 = vmatprep.subr.bf16.mxu0 %v3677
  %3814 = vmatpush1.bf16.msra.mxu0 %v3676
  %3815 = vmatprep.subr.bf16.mxu0 %v3679
  %3816 = vmatpush1.bf16.msra.mxu0 %v3678
  %3817 = vmatprep.subr.bf16.mxu0 %v3681
  %3818 = vmatpush1.bf16.msra.mxu0 %v3680
  %3819 = vmatprep.subr.bf16.mxu0 %v3683
  %3820 = vmatpush1.bf16.msra.mxu0 %v3682
  %3821 = vmatprep.subr.bf16.mxu0 %v3685
  %3822 = vmatpush1.bf16.msra.mxu0 %v3684
  %3823 = vmatprep.subr.bf16.mxu0 %v3687
  %3824 = vmatpush1.bf16.msra.mxu0 %v3686
  %3825 = vmatprep.subr.bf16.mxu0 %v3689
  %3826 = vmatpush1.bf16.msra.mxu0 %v3688
  %3827 = vmatprep.subr.bf16.mxu0 %v3691
  %3828 = vmatpush1.bf16.msra.mxu0 %v3690
  %3829 = vmatprep.subr.bf16.mxu0 %v3693
  %3830 = vmatpush1.bf16.msra.mxu0 %v3692
  %3831 = vmatprep.mubr.bf16.mxu0 %v3373
  %3832 = vmatmul.mubr.bf16.gmra.mrb[0].mxu0 %v3372
  %v3833 = vpop.f32.mrb[0].mxu0
  %v3834 = vadd.f32 %v3793, %v3833
  %v3835 = vpop.f32.mrb[0].mxu0
  %v3836 = vadd.f32 %v3795, %v3835
  %v3837 = vpop.f32.mrb[0].mxu0
  %v3838 = vpop.f32.mrb[0].mxu0
  %3839 = vdwg.mxu0
  %v3840 = vmul.f32 %v3834, 1.442695
  %v3841 = vpow.pop %v3840
  %v3842 = vmul.f32 %v3836, 1.442695
  %v3843 = vpow.pop %v3842
  %v3844 = vld [vmem:[%s5] sm:$0xff]
  %v3845 = vld [vmem:[%s5 + $0x8] sm:$0xff]
  %v3846 = vld [vmem:[%s5 + $0x10] sm:$0xff]
  %v3847 = vld [vmem:[%s5 + $0x18] sm:$0xff]
  %v3848 = vld [vmem:[%s5 + $0x20] sm:$0xff]
  %v3849 = vld [vmem:[%s5 + $0x28] sm:$0xff]
  %v3850 = vld [vmem:[%s5 + $0x30] sm:$0xff]
  %v3851 = vld [vmem:[%s5 + $0x38] sm:$0xff]
  %v3852 = vld [vmem:[%s5 + $0x40] sm:$0xff]
  %v3853 = vld [vmem:[%s5 + $0x48] sm:$0xff]
  %v3854 = vld [vmem:[%s5 + $0x50] sm:$0xff]
  %v3855 = vld [vmem:[%s5 + $0x58] sm:$0xff]
  %v3856 = vld [vmem:[%s5 + $0x60] sm:$0xff]
  %v3857 = vld [vmem:[%s5 + $0x68] sm:$0xff]
  %v3858 = vld [vmem:[%s5 + $0x70] sm:$0xff]
  %v3859 = vld [vmem:[%s5 + $0x78] sm:$0xff]
  %v3860 = vld [vmem:[%s5 + $0x80] sm:$0xff]
  %v3861 = vld [vmem:[%s5 + $0x88] sm:$0xff]
  %v3862 = vld [vmem:[%s5 + $0x90] sm:$0xff]
  %v3863 = vld [vmem:[%s5 + $0x98] sm:$0xff]
  %v3864 = vld [vmem:[%s5 + $0xa0] sm:$0xff]
  %v3865 = vld [vmem:[%s5 + $0xa8] sm:$0xff]
  %v3866 = vld [vmem:[%s5 + $0xb0] sm:$0xff]
  %v3867 = vld [vmem:[%s5 + $0xb8] sm:$0xff]
  %v3868 = vld [vmem:[%s5 + $0xc0] sm:$0xff]
  %v3869 = vld [vmem:[%s5 + $0xc8] sm:$0xff]
  %v3870 = vld [vmem:[%s5 + $0xd0] sm:$0xff]
  %v3871 = vld [vmem:[%s5 + $0xd8] sm:$0xff]
  %v3872 = vld [vmem:[%s5 + $0xe0] sm:$0xff]
  %v3873 = vld [vmem:[%s5 + $0xe8] sm:$0xff]
  %v3874 = vld [vmem:[%s5 + $0xf0] sm:$0xff]
  %v3875 = vld [vmem:[%s5 + $0xf8] sm:$0xff]
  %v3876 = vld [vmem:[%s5 + $0x100] sm:$0xff]
  %v3877 = vld [vmem:[%s5 + $0x108] sm:$0xff]
  %v3878 = vld [vmem:[%s5 + $0x110] sm:$0xff]
  %v3879 = vld [vmem:[%s5 + $0x118] sm:$0xff]
  %v3880 = vld [vmem:[%s5 + $0x120] sm:$0xff]
  %v3881 = vld [vmem:[%s5 + $0x128] sm:$0xff]
  %v3882 = vld [vmem:[%s5 + $0x130] sm:$0xff]
  %v3883 = vld [vmem:[%s5 + $0x138] sm:$0xff]
  %v3884 = vld [vmem:[%s5 + $0x140] sm:$0xff]
  %v3885 = vld [vmem:[%s5 + $0x148] sm:$0xff]
  %v3886 = vld [vmem:[%s5 + $0x150] sm:$0xff]
  %v3887 = vld [vmem:[%s5 + $0x158] sm:$0xff]
  %v3888 = vld [vmem:[%s5 + $0x160] sm:$0xff]
  %v3889 = vld [vmem:[%s5 + $0x168] sm:$0xff]
  %v3890 = vld [vmem:[%s5 + $0x170] sm:$0xff]
  %v3891 = vld [vmem:[%s5 + $0x178] sm:$0xff]
  %v3892 = vld [vmem:[%s5 + $0x180] sm:$0xff]
  %v3893 = vld [vmem:[%s5 + $0x188] sm:$0xff]
  %v3894 = vld [vmem:[%s5 + $0x190] sm:$0xff]
  %v3895 = vld [vmem:[%s5 + $0x198] sm:$0xff]
  %v3896 = vld [vmem:[%s5 + $0x1a0] sm:$0xff]
  %v3897 = vld [vmem:[%s5 + $0x1a8] sm:$0xff]
  %v3898 = vld [vmem:[%s5 + $0x1b0] sm:$0xff]
  %v3899 = vld [vmem:[%s5 + $0x1b8] sm:$0xff]
  %v3900 = vld [vmem:[%s5 + $0x1c0] sm:$0xff]
  %v3901 = vld [vmem:[%s5 + $0x1c8] sm:$0xff]
  %v3902 = vld [vmem:[%s5 + $0x1d0] sm:$0xff]
  %v3903 = vld [vmem:[%s5 + $0x1d8] sm:$0xff]
  %v3904 = vld [vmem:[%s5 + $0x1e0] sm:$0xff]
  %v3905 = vld [vmem:[%s5 + $0x1e8] sm:$0xff]
  %v3906 = vld [vmem:[%s5 + $0x1f0] sm:$0xff]
  %v3907 = vld [vmem:[%s5 + $0x1f8] sm:$0xff]
  %3908 = vmatprep.subr.mxu0 %v3845
  %3909 = vmatpush1.msra.mxu0 %v3844
  %3910 = vmatprep.subr.mxu0 %v3847
  %3911 = vmatpush1.msra.mxu0 %v3846
  %3912 = vmatprep.subr.mxu0 %v3849
  %3913 = vmatpush1.msra.mxu0 %v3848
  %3914 = vmatprep.subr.mxu0 %v3851
  %3915 = vmatpush1.msra.mxu0 %v3850
  %3916 = vmatprep.subr.mxu0 %v3853
  %3917 = vmatpush1.msra.mxu0 %v3852
  %3918 = vmatprep.subr.mxu0 %v3855
  %3919 = vmatpush1.msra.mxu0 %v3854
  %3920 = vmatprep.subr.mxu0 %v3857
  %3921 = vmatpush1.msra.mxu0 %v3856
  %3922 = vmatprep.subr.mxu0 %v3859
  %3923 = vmatpush1.msra.mxu0 %v3858
  %3924 = vmatprep.subr.mxu0 %v3861
  %3925 = vmatpush1.msra.mxu0 %v3860
  %3926 = vmatprep.subr.mxu0 %v3863
  %3927 = vmatpush1.msra.mxu0 %v3862
  %3928 = vmatprep.subr.mxu0 %v3865
  %3929 = vmatpush1.msra.mxu0 %v3864
  %3930 = vmatprep.subr.mxu0 %v3867
  %3931 = vmatpush1.msra.mxu0 %v3866
  %3932 = vmatprep.subr.mxu0 %v3869
  %3933 = vmatpush1.msra.mxu0 %v3868
  %3934 = vmatprep.subr.mxu0 %v3871
  %3935 = vmatpush1.msra.mxu0 %v3870
  %3936 = vmatprep.subr.mxu0 %v3873
  %3937 = vmatpush1.msra.mxu0 %v3872
  %3938 = vmatprep.subr.mxu0 %v3875
  %3939 = vmatpush1.msra.mxu0 %v3874
  %3940 = vmatprep.subr.mxu0 %v3877
  %3941 = vmatpush1.msra.mxu0 %v3876
  %3942 = vmatprep.subr.mxu0 %v3879
  %3943 = vmatpush1.msra.mxu0 %v3878
  %3944 = vmatprep.subr.mxu0 %v3881
  %3945 = vmatpush1.msra.mxu0 %v3880
  %3946 = vmatprep.subr.mxu0 %v3883
  %3947 = vmatpush1.msra.mxu0 %v3882
  %3948 = vmatprep.subr.mxu0 %v3885
  %3949 = vmatpush1.msra.mxu0 %v3884
  %3950 = vmatprep.subr.mxu0 %v3887
  %3951 = vmatpush1.msra.mxu0 %v3886
  %3952 = vmatprep.subr.mxu0 %v3889
  %3953 = vmatpush1.msra.mxu0 %v3888
  %3954 = vmatprep.subr.mxu0 %v3891
  %3955 = vmatpush1.msra.mxu0 %v3890
  %3956 = vmatprep.subr.mxu0 %v3893
  %3957 = vmatpush1.msra.mxu0 %v3892
  %3958 = vmatprep.subr.mxu0 %v3895
  %3959 = vmatpush1.msra.mxu0 %v3894
  %3960 = vmatprep.subr.mxu0 %v3897
  %3961 = vmatpush1.msra.mxu0 %v3896
  %3962 = vmatprep.subr.mxu0 %v3899
  %3963 = vmatpush1.msra.mxu0 %v3898
  %3964 = vmatprep.subr.mxu0 %v3901
  %3965 = vmatpush1.msra.mxu0 %v3900
  %3966 = vmatprep.subr.mxu0 %v3903
  %3967 = vmatpush1.msra.mxu0 %v3902
  %3968 = vmatprep.subr.mxu0 %v3905
  %3969 = vmatpush1.msra.mxu0 %v3904
  %3970 = vmatprep.subr.mxu0 %v3907
  %3971 = vmatpush1.msra.mxu0 %v3906
  %3972 = vmatprep.mubr.f32.mxu0 %v3843
  %3973 = vmatmul.mubr.f32.gmra.mrb[0].mxu0 %v3841
  %v3974 = vpop.f32.mrb[0].mxu0
  %v3975 = vadd.f32 0.0, %v3974
  %v3976 = vpop.f32.mrb[0].mxu0
  %v3977 = vadd.f32 0.0, %v3976
  %3978 = vdwg.mxu0
  %v3979 = vrcp.pop %v3975
  %v3980 = vrcp.pop %v3977
  %v3981 = vmul.f32 %v3841, %v3979
  %v3982 = vmul.f32 %v3843, %v3980
  %3983 = vst [vmem:[%s7] sm:$0xff] %v3981
  %3984 = vst [vmem:[%s7 + $0x8] sm:$0xff] %v3982
  // Predicated region
  $region30: #{music_decoder_forward.1} parent=0 // pred_check
    _
  $region31: #{music_decoder_forward.1} parent=0 // pred_check_branch
    %3986 = sbr.rel (0) target = $region33
  $region32: #{music_decoder_forward.1} parent=0 // pred_region
    _
  $region33: #{music_decoder_forward.1} parent=0 // pred_fallthru
    _
  // Predicated region
  $region34: #{music_decoder_forward.1} parent=0 // pred_check
    _
  $region35: #{music_decoder_forward.1} parent=0 // pred_check_branch
    %3988 = sbr.rel (0) target = $region37
  $region36: #{music_decoder_forward.1} parent=0 // pred_region
    _
  $region37: #{music_decoder_forward.1} parent=0 // pred_fallthru
    _

</llo_original>
